<compile_context>
chip_gen: v5e
topology: v5e:2x2
jax: 0.10.0
libtpu: 0.0.40
codegen_flags: <defaults>
</compile_context>

<pallas_src>
import jax
import jax.numpy as jnp
from jax.experimental import pallas as pl
from jax.experimental.pallas import tpu as pltpu

HIDDEN = 512
N_MID = 4  # fc3..fc6


def critic_kernel(x_ref, a_ref, ws1_ref, bs1_ref, w2s_ref, w2a_ref, b2_ref,
                  wmid_ref, bmid_ref, w7_ref, b7_ref, out_ref):
    """Whole Critic forward in one invocation; all weights resident in VMEM."""
    # fcs1: relu(state @ Ws1 + b1); keep the activation in bf16 for the MXU.
    xs = jnp.dot(x_ref[...].astype(jnp.bfloat16), ws1_ref[...],
                 preferred_element_type=jnp.float32) + bs1_ref[...]
    xs = jnp.maximum(xs, 0.0).astype(jnp.bfloat16)

    # fc2 on concat([xs, action]):  xs @ W2[:512] + action @ W2[512:]
    h = jnp.dot(xs, w2s_ref[...], preferred_element_type=jnp.float32)
    h = h + jnp.dot(a_ref[...].astype(jnp.bfloat16), w2a_ref[...],
                    preferred_element_type=jnp.float32)
    h = jnp.maximum(h + b2_ref[...], 0.0).astype(jnp.bfloat16)

    # fc3..fc6: static fully-unrolled loop over the resident weight slab.
    for i in range(N_MID):
        hi = jnp.dot(h, wmid_ref[i], preferred_element_type=jnp.float32)
        h = jnp.maximum(hi + bmid_ref[i], 0.0).astype(jnp.bfloat16)

    # fc7 head: w7 stored (1, 512) in f32 -> VPU multiply + lane reduce
    # (avoids a 512x1 MXU pass that wastes a full systolic pass on 1 column).
    out = jnp.sum(h.astype(jnp.float32) * w7_ref[...], axis=-1, keepdims=True)
    out_ref[...] = out + b7_ref[...]


@jax.jit
def critic_forward(state, action, ws1, bs1, w2s, w2a, b2, wmid, bmid, w7, b7):
    batch = state.shape[0]
    # No grid: every operand is a single full-array VMEM block (total weight
    # footprint ~2.6 MiB bf16 -- fits comfortably on v5e/v6e/v7x).
    return pl.pallas_call(
        critic_kernel,
        out_shape=jax.ShapeDtypeStruct((batch, 1), jnp.float32),
        compiler_params=pltpu.CompilerParams(
            vmem_limit_bytes=32 * 1024 * 1024),
    )(state, action, ws1, bs1, w2s, w2a, b2, wmid, bmid, w7, b7)


def init_params(key, state_size, action_size):
    """Mimics the PyTorch Critic's reset_parameters().

    hidden_init() uses weight.size()[0] == out_features (512) as 'fan_in',
    so hidden weights are U(-1/sqrt(512), 1/sqrt(512)); fc7 weight is
    U(-3e-3, 3e-3).  Biases keep PyTorch's default Linear init
    U(-1/sqrt(in_features), 1/sqrt(in_features)).  Weights stored (in, out)
    in bf16; biases and the fc7 weight kept f32 (fc7 runs on the VPU).
    """
    keys = jax.random.split(key, 8)
    lim_h = 1.0 / jnp.sqrt(512.0)

    def bias(k, in_features, n):
        lim = 1.0 / jnp.sqrt(float(in_features))
        return jax.random.uniform(k, (1, n), jnp.float32, -lim, lim)

    # fcs1: state_size -> 512
    ws1 = jax.random.uniform(keys[0], (state_size, HIDDEN), jnp.float32,
                             -lim_h, lim_h)
    bs1 = bias(keys[1], state_size, HIDDEN)

    # fc2: (512 + action_size) -> 512, split into state-part and action-part
    w2 = jax.random.uniform(keys[2], (HIDDEN + action_size, HIDDEN),
                            jnp.float32, -lim_h, lim_h)
    w2s, w2a = w2[:HIDDEN], w2[HIDDEN:]
    b2 = bias(keys[3], HIDDEN + action_size, HIDDEN)

    # fc3..fc6: 512 -> 512, stacked
    wmid = jax.random.uniform(keys[4], (N_MID, HIDDEN, HIDDEN), jnp.float32,
                              -lim_h, lim_h)
    bmid = jax.random.uniform(keys[5], (N_MID, 1, HIDDEN), jnp.float32,
                              -lim_h, lim_h)

    # fc7: 512 -> 1, stored as (1, 512) for the VPU-mul + lane-reduce head
    w7 = jax.random.uniform(keys[6], (1, HIDDEN), jnp.float32, -3e-3, 3e-3)
    b7 = bias(keys[7], HIDDEN, 1)

    bf = jnp.bfloat16
    return (ws1.astype(bf), bs1, w2s.astype(bf), w2a.astype(bf), b2,
            wmid.astype(bf), bmid, w7, b7)


def reference_forward(state, action, ws1, bs1, w2s, w2a, b2, wmid, bmid,
                      w7, b7):
    """Pure-JAX reference (same bf16-weight / f32-accumulate arithmetic)."""
    mm = lambda h, w: jnp.dot(h.astype(jnp.bfloat16), w,
                              preferred_element_type=jnp.float32)
    xs = jnp.maximum(mm(state, ws1) + bs1, 0.0)
    h = jnp.maximum(mm(xs, w2s) + mm(action, w2a) + b2, 0.0)
    for i in range(N_MID):
        h = jnp.maximum(mm(h, wmid[i]) + bmid[i], 0.0)
    h = h.astype(jnp.bfloat16).astype(jnp.float32)
    return jnp.sum(h * w7, axis=-1, keepdims=True) + b7


if __name__ == "__main__":
    batch, state_size, action_size = 8, 24, 4

    key = jax.random.PRNGKey(0)
    kp, ks, ka = jax.random.split(key, 3)
    params = init_params(kp, state_size, action_size)
    state = jax.random.normal(ks, (batch, state_size), jnp.float32)
    action = jax.random.uniform(ka, (batch, action_size), jnp.float32,
                                -1.0, 1.0)

    out = critic_forward(state, action, *params)
    out = jax.block_until_ready(out)

    ref = reference_forward(state, action, *params)
    assert out.shape == (batch, 1)
    assert jnp.allclose(out, ref, atol=2e-3, rtol=2e-3)

    print("KERNEL_OK")
</pallas_src>

<mosaic_0001>
module attributes {stable_mosaic.version = 11 : i64} {
  func.func @critic_kernel(%arg0: memref<8x24xf32, #tpu.memory_space<vmem>>, %arg1: memref<8x4xf32, #tpu.memory_space<vmem>>, %arg2: memref<24x512xbf16, #tpu.memory_space<vmem>>, %arg3: memref<1x512xf32, #tpu.memory_space<vmem>>, %arg4: memref<512x512xbf16, #tpu.memory_space<vmem>>, %arg5: memref<4x512xbf16, #tpu.memory_space<vmem>>, %arg6: memref<1x512xf32, #tpu.memory_space<vmem>>, %arg7: memref<4x512x512xbf16, #tpu.memory_space<vmem>>, %arg8: memref<4x1x512xf32, #tpu.memory_space<vmem>>, %arg9: memref<1x512xf32, #tpu.memory_space<vmem>>, %arg10: memref<1x1xf32, #tpu.memory_space<vmem>>, %arg11: memref<8x1xf32, #tpu.memory_space<vmem>>) attributes {dimension_semantics = [], scalar_prefetch = 0 : i64, scratch_operands = 0 : i64, tpu.core_type = #tpu.core_type<tc>} {
    %c0 = arith.constant 0 : index
    %c0_0 = arith.constant 0 : index
    %0 = vector.load %arg0[%c0, %c0_0] : memref<8x24xf32, #tpu.memory_space<vmem>>, vector<8x24xf32>
    %1 = arith.truncf %0 : vector<8x24xf32> to vector<8x24xbf16>
    %c0_1 = arith.constant 0 : index
    %c0_2 = arith.constant 0 : index
    %2 = vector.load %arg2[%c0_1, %c0_2] : memref<24x512xbf16, #tpu.memory_space<vmem>>, vector<24x512xbf16>
    %cst = arith.constant dense<0.000000e+00> : vector<8x512xf32>
    %3 = tpu.matmul %1, %2, %cst {dimension_numbers = #tpu.dot_dimension_numbers<[1], [0], [0], [1], [0, 0, 1, 1], [], []>} : vector<8x24xbf16>, vector<24x512xbf16>, vector<8x512xf32> -> vector<8x512xf32>
    %c0_3 = arith.constant 0 : index
    %c0_4 = arith.constant 0 : index
    %4 = vector.load %arg3[%c0_3, %c0_4] : memref<1x512xf32, #tpu.memory_space<vmem>>, vector<1x512xf32>
    %5 = vector.broadcast %4 : vector<1x512xf32> to vector<8x512xf32>
    %6 = arith.addf %3, %5 : vector<8x512xf32>
    %cst_5 = arith.constant 0.000000e+00 : f32
    %7 = vector.broadcast %cst_5 : f32 to vector<8x512xf32>
    %8 = arith.maximumf %6, %7 : vector<8x512xf32>
    %9 = arith.truncf %8 : vector<8x512xf32> to vector<8x512xbf16>
    %c0_6 = arith.constant 0 : index
    %c0_7 = arith.constant 0 : index
    %10 = vector.load %arg4[%c0_6, %c0_7] : memref<512x512xbf16, #tpu.memory_space<vmem>>, vector<512x512xbf16>
    %cst_8 = arith.constant dense<0.000000e+00> : vector<8x512xf32>
    %11 = tpu.matmul %9, %10, %cst_8 {dimension_numbers = #tpu.dot_dimension_numbers<[1], [0], [0], [1], [0, 0, 1, 1], [], []>} : vector<8x512xbf16>, vector<512x512xbf16>, vector<8x512xf32> -> vector<8x512xf32>
    %c0_9 = arith.constant 0 : index
    %c0_10 = arith.constant 0 : index
    %12 = vector.load %arg1[%c0_9, %c0_10] : memref<8x4xf32, #tpu.memory_space<vmem>>, vector<8x4xf32>
    %13 = arith.truncf %12 : vector<8x4xf32> to vector<8x4xbf16>
    %c0_11 = arith.constant 0 : index
    %c0_12 = arith.constant 0 : index
    %14 = vector.load %arg5[%c0_11, %c0_12] : memref<4x512xbf16, #tpu.memory_space<vmem>>, vector<4x512xbf16>
    %cst_13 = arith.constant dense<0.000000e+00> : vector<8x512xf32>
    %15 = tpu.matmul %13, %14, %cst_13 {dimension_numbers = #tpu.dot_dimension_numbers<[1], [0], [0], [1], [0, 0, 1, 1], [], []>} : vector<8x4xbf16>, vector<4x512xbf16>, vector<8x512xf32> -> vector<8x512xf32>
    %16 = arith.addf %11, %15 : vector<8x512xf32>
    %c0_14 = arith.constant 0 : index
    %c0_15 = arith.constant 0 : index
    %17 = vector.load %arg6[%c0_14, %c0_15] : memref<1x512xf32, #tpu.memory_space<vmem>>, vector<1x512xf32>
    %18 = vector.broadcast %17 : vector<1x512xf32> to vector<8x512xf32>
    %19 = arith.addf %16, %18 : vector<8x512xf32>
    %cst_16 = arith.constant 0.000000e+00 : f32
    %20 = vector.broadcast %cst_16 : f32 to vector<8x512xf32>
    %21 = arith.maximumf %19, %20 : vector<8x512xf32>
    %22 = arith.truncf %21 : vector<8x512xf32> to vector<8x512xbf16>
    %c0_17 = arith.constant 0 : index
    %c0_18 = arith.constant 0 : index
    %c0_19 = arith.constant 0 : index
    %23 = vector.load %arg7[%c0_17, %c0_18, %c0_19] : memref<4x512x512xbf16, #tpu.memory_space<vmem>>, vector<1x512x512xbf16>
    %24 = vector.shape_cast %23 : vector<1x512x512xbf16> to vector<512x512xbf16>
    %cst_20 = arith.constant dense<0.000000e+00> : vector<8x512xf32>
    %25 = tpu.matmul %22, %24, %cst_20 {dimension_numbers = #tpu.dot_dimension_numbers<[1], [0], [0], [1], [0, 0, 1, 1], [], []>} : vector<8x512xbf16>, vector<512x512xbf16>, vector<8x512xf32> -> vector<8x512xf32>
    %c0_21 = arith.constant 0 : index
    %c0_22 = arith.constant 0 : index
    %c0_23 = arith.constant 0 : index
    %26 = vector.load %arg8[%c0_21, %c0_22, %c0_23] : memref<4x1x512xf32, #tpu.memory_space<vmem>>, vector<1x1x512xf32>
    %27 = vector.shape_cast %26 : vector<1x1x512xf32> to vector<1x512xf32>
    %28 = vector.broadcast %27 : vector<1x512xf32> to vector<8x512xf32>
    %29 = arith.addf %25, %28 : vector<8x512xf32>
    %cst_24 = arith.constant 0.000000e+00 : f32
    %30 = vector.broadcast %cst_24 : f32 to vector<8x512xf32>
    %31 = arith.maximumf %29, %30 : vector<8x512xf32>
    %32 = arith.truncf %31 : vector<8x512xf32> to vector<8x512xbf16>
    %c1 = arith.constant 1 : index
    %c0_25 = arith.constant 0 : index
    %c0_26 = arith.constant 0 : index
    %33 = vector.load %arg7[%c1, %c0_25, %c0_26] : memref<4x512x512xbf16, #tpu.memory_space<vmem>>, vector<1x512x512xbf16>
    %34 = vector.shape_cast %33 : vector<1x512x512xbf16> to vector<512x512xbf16>
    %cst_27 = arith.constant dense<0.000000e+00> : vector<8x512xf32>
    %35 = tpu.matmul %32, %34, %cst_27 {dimension_numbers = #tpu.dot_dimension_numbers<[1], [0], [0], [1], [0, 0, 1, 1], [], []>} : vector<8x512xbf16>, vector<512x512xbf16>, vector<8x512xf32> -> vector<8x512xf32>
    %c1_28 = arith.constant 1 : index
    %c0_29 = arith.constant 0 : index
    %c0_30 = arith.constant 0 : index
    %36 = vector.load %arg8[%c1_28, %c0_29, %c0_30] : memref<4x1x512xf32, #tpu.memory_space<vmem>>, vector<1x1x512xf32>
    %37 = vector.shape_cast %36 : vector<1x1x512xf32> to vector<1x512xf32>
    %38 = vector.broadcast %37 : vector<1x512xf32> to vector<8x512xf32>
    %39 = arith.addf %35, %38 : vector<8x512xf32>
    %cst_31 = arith.constant 0.000000e+00 : f32
    %40 = vector.broadcast %cst_31 : f32 to vector<8x512xf32>
    %41 = arith.maximumf %39, %40 : vector<8x512xf32>
    %42 = arith.truncf %41 : vector<8x512xf32> to vector<8x512xbf16>
    %c2 = arith.constant 2 : index
    %c0_32 = arith.constant 0 : index
    %c0_33 = arith.constant 0 : index
    %43 = vector.load %arg7[%c2, %c0_32, %c0_33] : memref<4x512x512xbf16, #tpu.memory_space<vmem>>, vector<1x512x512xbf16>
    %44 = vector.shape_cast %43 : vector<1x512x512xbf16> to vector<512x512xbf16>
    %cst_34 = arith.constant dense<0.000000e+00> : vector<8x512xf32>
    %45 = tpu.matmul %42, %44, %cst_34 {dimension_numbers = #tpu.dot_dimension_numbers<[1], [0], [0], [1], [0, 0, 1, 1], [], []>} : vector<8x512xbf16>, vector<512x512xbf16>, vector<8x512xf32> -> vector<8x512xf32>
    %c2_35 = arith.constant 2 : index
    %c0_36 = arith.constant 0 : index
    %c0_37 = arith.constant 0 : index
    %46 = vector.load %arg8[%c2_35, %c0_36, %c0_37] : memref<4x1x512xf32, #tpu.memory_space<vmem>>, vector<1x1x512xf32>
    %47 = vector.shape_cast %46 : vector<1x1x512xf32> to vector<1x512xf32>
    %48 = vector.broadcast %47 : vector<1x512xf32> to vector<8x512xf32>
    %49 = arith.addf %45, %48 : vector<8x512xf32>
    %cst_38 = arith.constant 0.000000e+00 : f32
    %50 = vector.broadcast %cst_38 : f32 to vector<8x512xf32>
    %51 = arith.maximumf %49, %50 : vector<8x512xf32>
    %52 = arith.truncf %51 : vector<8x512xf32> to vector<8x512xbf16>
    %c3 = arith.constant 3 : index
    %c0_39 = arith.constant 0 : index
    %c0_40 = arith.constant 0 : index
    %53 = vector.load %arg7[%c3, %c0_39, %c0_40] : memref<4x512x512xbf16, #tpu.memory_space<vmem>>, vector<1x512x512xbf16>
    %54 = vector.shape_cast %53 : vector<1x512x512xbf16> to vector<512x512xbf16>
    %cst_41 = arith.constant dense<0.000000e+00> : vector<8x512xf32>
    %55 = tpu.matmul %52, %54, %cst_41 {dimension_numbers = #tpu.dot_dimension_numbers<[1], [0], [0], [1], [0, 0, 1, 1], [], []>} : vector<8x512xbf16>, vector<512x512xbf16>, vector<8x512xf32> -> vector<8x512xf32>
    %c3_42 = arith.constant 3 : index
    %c0_43 = arith.constant 0 : index
    %c0_44 = arith.constant 0 : index
    %56 = vector.load %arg8[%c3_42, %c0_43, %c0_44] : memref<4x1x512xf32, #tpu.memory_space<vmem>>, vector<1x1x512xf32>
    %57 = vector.shape_cast %56 : vector<1x1x512xf32> to vector<1x512xf32>
    %58 = vector.broadcast %57 : vector<1x512xf32> to vector<8x512xf32>
    %59 = arith.addf %55, %58 : vector<8x512xf32>
    %cst_45 = arith.constant 0.000000e+00 : f32
    %60 = vector.broadcast %cst_45 : f32 to vector<8x512xf32>
    %61 = arith.maximumf %59, %60 : vector<8x512xf32>
    %62 = arith.truncf %61 : vector<8x512xf32> to vector<8x512xbf16>
    %63 = arith.extf %62 : vector<8x512xbf16> to vector<8x512xf32>
    %c0_46 = arith.constant 0 : index
    %c0_47 = arith.constant 0 : index
    %64 = vector.load %arg9[%c0_46, %c0_47] : memref<1x512xf32, #tpu.memory_space<vmem>>, vector<1x512xf32>
    %65 = vector.broadcast %64 : vector<1x512xf32> to vector<8x512xf32>
    %66 = arith.mulf %63, %65 : vector<8x512xf32>
    %cst_48 = arith.constant dense<0.000000e+00> : vector<8xf32>
    %67 = vector.multi_reduction <add>, %66, %cst_48 [1] : vector<8x512xf32> to vector<8xf32>
    %68 = vector.shape_cast %67 : vector<8xf32> to vector<8x1xf32>
    %c0_49 = arith.constant 0 : index
    %c0_50 = arith.constant 0 : index
    %69 = vector.load %arg10[%c0_49, %c0_50] : memref<1x1xf32, #tpu.memory_space<vmem>>, vector<1x1xf32>
    %70 = vector.broadcast %69 : vector<1x1xf32> to vector<8x1xf32>
    %71 = arith.addf %68, %70 : vector<8x1xf32>
    %c0_51 = arith.constant 0 : index
    %c0_52 = arith.constant 0 : index
    %72 = vector.load %arg11[%c0_51, %c0_52] : memref<8x1xf32, #tpu.memory_space<vmem>>, vector<8x1xf32>
    tpu.vector_store %arg11[%c0_51, %c0_52], %71 {strides = array<i32>} : memref<8x1xf32, #tpu.memory_space<vmem>>, vector<8x1xf32>,
    return
  }
}

</mosaic_0001>

<llo_original>
// kernel: critic_forward.1
$region0: #{critic_forward.1}
  #allocation0 [shape = 'u32[]', space=smem, size = 0x4, offset = 0x4, fixed_abs, tag = 'smem constant byte address 0x4 - core index']
  #allocation1 [shape = 'u32[72,128]{1,0:T(1,128)}', space=vmem, size = 0x9000, scoped, tag = 'internal scratch']
  #allocation2 [shape = 'f32[1,1]{1,0:T(1,128)S(1)}', space=vmem, size = 0x200, scoped, tag = 'scoped memory for critic_forward.1']
  %s0 = inlined_call_operand.hbm [shape: f32[8,24], index: 0, kind: input, shape index: {}]
  %s1 = inlined_call_operand.vmem [shape: f32[8,4], index: 1, kind: input, shape index: {}]
  %s2 = inlined_call_operand.hbm [shape: bf16[24,512], index: 2, kind: input, shape index: {}]
  %s3 = inlined_call_operand.hbm [shape: f32[1,512], index: 3, kind: input, shape index: {}]
  %s4 = inlined_call_operand.hbm [shape: bf16[512,512], index: 4, kind: input, shape index: {}]
  %s5 = inlined_call_operand.hbm [shape: bf16[4,512], index: 5, kind: input, shape index: {}]
  %s6 = inlined_call_operand.hbm [shape: f32[1,512], index: 6, kind: input, shape index: {}]
  %s7 = inlined_call_operand.hbm [shape: bf16[4,512,512], index: 7, kind: input, shape index: {}]
  %s8 = inlined_call_operand.hbm [shape: f32[4,1,512], index: 8, kind: input, shape index: {}]
  %s9 = inlined_call_operand.hbm [shape: f32[1,512], index: 9, kind: input, shape index: {}]
  %s10 = inlined_call_operand.<no memory space> [shape: f32[1,1], index: 10, kind: input, shape index: {}]
  %s11 = inlined_call_operand.vmem [shape: f32[8,1], index: 11, kind: output, shape index: {}]
  %s12 = sld [smem:[#allocation0]]
  $region90: #{critic_forward.1} parent=0
    _
  %s14 = ssub.s32 1, %s12
  %s15 = scalar_select 0, %s14, %s12
  %v16 = vstv %s10
  %17 = vst [vmem:[#allocation2] sm:$0x1] %v16
  $region1: #{critic_forward.1} parent=0
    #allocation3 [shape = 'u8[4096]{0}', space=vmem, size = 0x1000, scoped, tag = 'input window, operand 0, single buffered']
    #allocation4 [shape = 's32[1]{0}', space=sflag, size = 0x4, scoped, tag = 'scoped memory for critic_forward.1']
    #allocation5 [shape = 'u8[24576]{0}', space=vmem, size = 0x6000, scoped, tag = 'input window, operand 2, single buffered']
    #allocation6 [shape = 's32[1]{0}', space=sflag, size = 0x4, scoped, tag = 'scoped memory for critic_forward.1']
    #allocation7 [shape = 'u8[2048]{0}', space=vmem, size = 0x800, scoped, tag = 'input window, operand 3, single buffered']
    #allocation8 [shape = 'u8[524288]{0}', space=vmem, size = 0x80000, scoped, tag = 'input window, operand 4, single buffered']
    #allocation9 [shape = 's32[1]{0}', space=sflag, size = 0x4, scoped, tag = 'scoped memory for critic_forward.1']
    #allocation10 [shape = 'u8[4096]{0}', space=vmem, size = 0x1000, scoped, tag = 'input window, operand 5, single buffered']
    #allocation11 [shape = 'u8[2048]{0}', space=vmem, size = 0x800, scoped, tag = 'input window, operand 6, single buffered']
    #allocation12 [shape = 's32[1]{0}', space=sflag, size = 0x4, scoped, tag = 'scoped memory for critic_forward.1']
    #allocation13 [shape = 'u8[2097152]{0}', space=vmem, size = 0x200000, scoped, tag = 'input window, operand 7, single buffered']
    #allocation14 [shape = 'u8[8192]{0}', space=vmem, size = 0x2000, scoped, tag = 'input window, operand 8, single buffered']
    #allocation15 [shape = 's32[1]{0}', space=sflag, size = 0x4, scoped, tag = 'scoped memory for critic_forward.1']
    #allocation16 [shape = 'u8[2048]{0}', space=vmem, size = 0x800, scoped, tag = 'input window, operand 9, single buffered']
    %18 = vsyncpa [#allocation4], 0
    %19 = vsyncpa [#allocation6], 0
    %20 = vsyncpa [#allocation9], 0
    %21 = vsyncpa [#allocation12], 0
    %22 = vsyncpa [#allocation15], 0
    // Predicated region
    $region2: #{critic_forward.1} parent=1 // pred_check
      _
    $region3: #{critic_forward.1} parent=1 // pred_check_branch
      %24 = sbr.rel (0) target = $region5
    $region4: #{critic_forward.1} parent=1 // pred_region
      %26 = vsyncadd [#allocation4], 0
      %s28 = sshll.u32 %s0, 4
      %s29 = int_to_ptr.hbm [resolvable:$true] %s28
      %s30 = sshll.u32 [#allocation3], 4
      %s31 = int_to_ptr.vmem [resolvable:$true] %s30
      %33 = dma.hbm_to_vmem [thread:$0]  %s29, 128, %s31, [#allocation4]
    $region5: #{critic_forward.1} parent=1 // pred_fallthru
      _
    // Predicated region
    $region6: #{critic_forward.1} parent=1 // pred_check
      _
    $region7: #{critic_forward.1} parent=1 // pred_check_branch
      %35 = sbr.rel (0) target = $region9
    $region8: #{critic_forward.1} parent=1 // pred_region
      _
    $region9: #{critic_forward.1} parent=1 // pred_fallthru
      _
    // Predicated region
    $region10: #{critic_forward.1} parent=1 // pred_check
      _
    $region11: #{critic_forward.1} parent=1 // pred_check_branch
      %37 = sbr.rel (0) target = $region13
    $region12: #{critic_forward.1} parent=1 // pred_region
      %39 = vsyncadd [#allocation6], 0
      %s40 = sshll.u32 %s2, 4
      %s41 = int_to_ptr.hbm [resolvable:$true] %s40
      %s42 = sshll.u32 [#allocation5], 4
      %s43 = int_to_ptr.vmem [resolvable:$true] %s42
      %48 = dma.hbm_to_vmem [thread:$0]  %s41, 768, %s43, [#allocation6], 256, 256, 16
    $region13: #{critic_forward.1} parent=1 // pred_fallthru
      _
    // Predicated region
    $region14: #{critic_forward.1} parent=1 // pred_check
      _
    $region15: #{critic_forward.1} parent=1 // pred_check_branch
      %50 = sbr.rel (0) target = $region17
    $region16: #{critic_forward.1} parent=1 // pred_region
      %52 = vsyncadd [#allocation6], 0
      %s54 = sshll.u32 %s3, 4
      %s55 = int_to_ptr.hbm [resolvable:$true] %s54
      %s56 = sshll.u32 [#allocation7], 4
      %s57 = int_to_ptr.vmem [resolvable:$true] %s56
      %59 = dma.hbm_to_vmem [thread:$0]  %s55, 64, %s57, [#allocation6]
    $region17: #{critic_forward.1} parent=1 // pred_fallthru
      _
    // Predicated region
    $region18: #{critic_forward.1} parent=1 // pred_check
      _
    $region19: #{critic_forward.1} parent=1 // pred_check_branch
      %61 = sbr.rel (0) target = $region21
    $region20: #{critic_forward.1} parent=1 // pred_region
      %63 = vsyncadd [#allocation9], 0
      %s64 = sshll.u32 %s4, 4
      %s65 = int_to_ptr.hbm [resolvable:$true] %s64
      %s66 = sshll.u32 [#allocation8], 4
      %s67 = int_to_ptr.vmem [resolvable:$true] %s66
      %72 = dma.hbm_to_vmem [thread:$0]  %s65, 16384, %s67, [#allocation9], 256, 256, 16
    $region21: #{critic_forward.1} parent=1 // pred_fallthru
      _
    // Predicated region
    $region22: #{critic_forward.1} parent=1 // pred_check
      _
    $region23: #{critic_forward.1} parent=1 // pred_check_branch
      %74 = sbr.rel (0) target = $region25
    $region24: #{critic_forward.1} parent=1 // pred_region
      %76 = vsyncadd [#allocation9], 0
      %s78 = sshll.u32 %s5, 4
      %s79 = int_to_ptr.hbm [resolvable:$true] %s78
      %s80 = sshll.u32 [#allocation10], 4
      %s81 = int_to_ptr.vmem [resolvable:$true] %s80
      %83 = dma.hbm_to_vmem [thread:$0]  %s79, 128, %s81, [#allocation9]
    $region25: #{critic_forward.1} parent=1 // pred_fallthru
      _
    // Predicated region
    $region26: #{critic_forward.1} parent=1 // pred_check
      _
    $region27: #{critic_forward.1} parent=1 // pred_check_branch
      %85 = sbr.rel (0) target = $region29
    $region28: #{critic_forward.1} parent=1 // pred_region
      %87 = vsyncadd [#allocation12], 0
      %s89 = sshll.u32 %s6, 4
      %s90 = int_to_ptr.hbm [resolvable:$true] %s89
      %s91 = sshll.u32 [#allocation11], 4
      %s92 = int_to_ptr.vmem [resolvable:$true] %s91
      %94 = dma.hbm_to_vmem [thread:$0]  %s90, 64, %s92, [#allocation12]
    $region29: #{critic_forward.1} parent=1 // pred_fallthru
      _
    // Predicated region
    $region30: #{critic_forward.1} parent=1 // pred_check
      _
    $region31: #{critic_forward.1} parent=1 // pred_check_branch
      %96 = sbr.rel (0) target = $region33
    $region32: #{critic_forward.1} parent=1 // pred_region
      %98 = vsyncadd [#allocation12], 0
      %s99 = sshll.u32 %s7, 4
      %s100 = int_to_ptr.hbm [resolvable:$true] %s99
      %s101 = sshll.u32 [#allocation13], 4
      %s102 = int_to_ptr.vmem [resolvable:$true] %s101
      %107 = dma.hbm_to_vmem [thread:$0]  %s100, 65536, %s102, [#allocation12], 256, 256, 16
    $region33: #{critic_forward.1} parent=1 // pred_fallthru
      _
    // Predicated region
    $region34: #{critic_forward.1} parent=1 // pred_check
      _
    $region35: #{critic_forward.1} parent=1 // pred_check_branch
      %109 = sbr.rel (0) target = $region37
    $region36: #{critic_forward.1} parent=1 // pred_region
      %111 = vsyncadd [#allocation15], 0
      %s112 = sshll.u32 %s8, 4
      %s113 = int_to_ptr.hbm [resolvable:$true] %s112
      %s114 = sshll.u32 [#allocation14], 4
      %s115 = int_to_ptr.vmem [resolvable:$true] %s114
      %120 = dma.hbm_to_vmem [thread:$0]  %s113, 256, %s115, [#allocation15], 64, 64, 4
    $region37: #{critic_forward.1} parent=1 // pred_fallthru
      _
    // Predicated region
    $region38: #{critic_forward.1} parent=1 // pred_check
      _
    $region39: #{critic_forward.1} parent=1 // pred_check_branch
      %122 = sbr.rel (0) target = $region41
    $region40: #{critic_forward.1} parent=1 // pred_region
      %124 = vsyncadd [#allocation15], 0
      %s126 = sshll.u32 %s9, 4
      %s127 = int_to_ptr.hbm [resolvable:$true] %s126
      %s128 = sshll.u32 [#allocation16], 4
      %s129 = int_to_ptr.vmem [resolvable:$true] %s128
      %131 = dma.hbm_to_vmem [thread:$0]  %s127, 64, %s129, [#allocation15]
    $region41: #{critic_forward.1} parent=1 // pred_fallthru
      _
    // Predicated region
    $region42: #{critic_forward.1} parent=1 // pred_check
      _
    $region43: #{critic_forward.1} parent=1 // pred_check_branch
      %133 = sbr.rel (0) target = $region45
    $region44: #{critic_forward.1} parent=1 // pred_region
      _
    $region45: #{critic_forward.1} parent=1 // pred_fallthru
      _
    // Predicated region
    $region46: #{critic_forward.1} parent=1 // pred_check
      _
    $region47: #{critic_forward.1} parent=1 // pred_check_branch
      %135 = sbr.rel (0) target = $region49
    $region48: #{critic_forward.1} parent=1 // pred_region
      %137 = dma.done [#allocation4], 128
    $region49: #{critic_forward.1} parent=1 // pred_fallthru
      _
    // Predicated region
    $region50: #{critic_forward.1} parent=1 // pred_check
      _
    $region51: #{critic_forward.1} parent=1 // pred_check_branch
      %139 = sbr.rel (0) target = $region53
    $region52: #{critic_forward.1} parent=1 // pred_region
      %141 = dma.done [#allocation6], 768
    $region53: #{critic_forward.1} parent=1 // pred_fallthru
      _
    // Predicated region
    $region54: #{critic_forward.1} parent=1 // pred_check
      _
    $region55: #{critic_forward.1} parent=1 // pred_check_branch
      %143 = sbr.rel (0) target = $region57
    $region56: #{critic_forward.1} parent=1 // pred_region
      %145 = dma.done [#allocation6], 64
    $region57: #{critic_forward.1} parent=1 // pred_fallthru
      _
    // Predicated region
    $region58: #{critic_forward.1} parent=1 // pred_check
      _
    $region59: #{critic_forward.1} parent=1 // pred_check_branch
      %147 = sbr.rel (0) target = $region61
    $region60: #{critic_forward.1} parent=1 // pred_region
      %149 = dma.done [#allocation9], 16384
    $region61: #{critic_forward.1} parent=1 // pred_fallthru
      _
    // Predicated region
    $region62: #{critic_forward.1} parent=1 // pred_check
      _
    $region63: #{critic_forward.1} parent=1 // pred_check_branch
      %151 = sbr.rel (0) target = $region65
    $region64: #{critic_forward.1} parent=1 // pred_region
      %153 = dma.done [#allocation9], 128
    $region65: #{critic_forward.1} parent=1 // pred_fallthru
      _
    // Predicated region
    $region66: #{critic_forward.1} parent=1 // pred_check
      _
    $region67: #{critic_forward.1} parent=1 // pred_check_branch
      %155 = sbr.rel (0) target = $region69
    $region68: #{critic_forward.1} parent=1 // pred_region
      %157 = dma.done [#allocation12], 64
    $region69: #{critic_forward.1} parent=1 // pred_fallthru
      _
    // Predicated region
    $region70: #{critic_forward.1} parent=1 // pred_check
      _
    $region71: #{critic_forward.1} parent=1 // pred_check_branch
      %159 = sbr.rel (0) target = $region73
    $region72: #{critic_forward.1} parent=1 // pred_region
      %161 = dma.done [#allocation12], 65536
    $region73: #{critic_forward.1} parent=1 // pred_fallthru
      _
    // Predicated region
    $region74: #{critic_forward.1} parent=1 // pred_check
      _
    $region75: #{critic_forward.1} parent=1 // pred_check_branch
      %163 = sbr.rel (0) target = $region77
    $region76: #{critic_forward.1} parent=1 // pred_region
      %165 = dma.done [#allocation15], 256
    $region77: #{critic_forward.1} parent=1 // pred_fallthru
      _
    // Predicated region
    $region78: #{critic_forward.1} parent=1 // pred_check
      _
    $region79: #{critic_forward.1} parent=1 // pred_check_branch
      %167 = sbr.rel (0) target = $region81
    $region80: #{critic_forward.1} parent=1 // pred_region
      %169 = dma.done [#allocation15], 64
    $region81: #{critic_forward.1} parent=1 // pred_fallthru
      _
    %v171 = vld [vmem:[#allocation3] sm:$0xff]
    %v172 = vpack.c.bf16 %v171, %v171
    %v173 = vld [vmem:[#allocation5] sm:$0xff]
    %v174 = vld [vmem:[#allocation5 + $0x8] sm:$0xff]
    %v175 = vld [vmem:[#allocation5 + $0x10] sm:$0xff]
    %v176 = vld [vmem:[#allocation5 + $0x18] sm:$0xff]
    %v177 = vld [vmem:[#allocation5 + $0x20] sm:$0xff]
    %v178 = vld [vmem:[#allocation5 + $0x28] sm:$0xff]
    %v179 = vld [vmem:[#allocation7] sm:$0xf]
    %v181 = vperm.slane %v179, 0
    %v182 = vperm.slane %v179, 1
    %v183 = vperm.slane %v179, 2
    %v184 = vperm.slane %v179, 3
    %v195 = vunpack.c.l.b16 %v173
    %v196 = vunpack.c.h.b16 %v173
    %v197 = vunpack.c.l.b16 %v174
    %v198 = vunpack.c.h.b16 %v174
    %v199 = vunpack.c.l.b16 %v175
    %v200 = vunpack.c.h.b16 %v175
    %v201 = vunpack.c.l.b16 %v176
    %v202 = vunpack.c.h.b16 %v176
    %v203 = vunpack.c.l.b16 %v177
    %v204 = vunpack.c.h.b16 %v177
    %v205 = vunpack.c.l.b16 %v178
    %v206 = vunpack.c.h.b16 %v178
    %v207 = vpack.c.b16 %v199, %v195
    %v208 = vpack.c.b16 %v200, %v196
    %v209 = vpack.c.b16 %v201, %v197
    %v210 = vpack.c.b16 %v202, %v198
    %v211 = vpack.c.b16 %v203, %v203
    %v212 = vpack.c.b16 %v204, %v204
    %v213 = vpack.c.b16 %v205, %v205
    %v214 = vpack.c.b16 %v206, %v206
    %vm219 = vcmask 195584
    %v221 = vsel %vm219, %v172, 0
    %vm223 = vcmask 1043456
    %v225 = vsel %vm223, %v211, 0
    %v228 = vsel %vm223, %v212, 0
    %v231 = vsel %vm223, %v213, 0
    %v234 = vsel %vm223, %v214, 0
    %236 = vmatpush.bf16.msra.mxu0 0
    %237 = vmatpush.bf16.msra.mxu0 0
    %238 = vmatpush.bf16.msra.mxu0 0
    %239 = vmatpush.bf16.msra.mxu0 0
    %240 = vmatpush.bf16.msra.mxu0 0
    %241 = vmatpush.bf16.msra.mxu0 0
    %242 = vmatpush.bf16.msra.mxu0 %v225
    %243 = vmatpush.bf16.msra.mxu0 %v207
    %244 = vmatmul.bf16.gmra.mxu0 %v221
    %v245 = vpop.f32.mrf.mxu0
    %v246 = vadd.f32 %v181, %v245
    %v247 = vpop.f32.mrf.mxu0
    %248 = vdwg.mxu0
    %249 = vmatpush.bf16.msra.mxu0 0
    %250 = vmatpush.bf16.msra.mxu0 0
    %251 = vmatpush.bf16.msra.mxu0 0
    %252 = vmatpush.bf16.msra.mxu0 0
    %253 = vmatpush.bf16.msra.mxu0 0
    %254 = vmatpush.bf16.msra.mxu0 0
    %255 = vmatpush.bf16.msra.mxu0 %v228
    %256 = vmatpush.bf16.msra.mxu0 %v208
    %257 = vmatmul.bf16.gmra.mxu0 %v221
    %v258 = vpop.f32.mrf.mxu0
    %v259 = vadd.f32 %v182, %v258
    %v260 = vpop.f32.mrf.mxu0
    %261 = vdwg.mxu0
    %262 = vmatpush.bf16.msra.mxu0 0
    %263 = vmatpush.bf16.msra.mxu0 0
    %264 = vmatpush.bf16.msra.mxu0 0
    %265 = vmatpush.bf16.msra.mxu0 0
    %266 = vmatpush.bf16.msra.mxu0 0
    %267 = vmatpush.bf16.msra.mxu0 0
    %268 = vmatpush.bf16.msra.mxu0 %v231
    %269 = vmatpush.bf16.msra.mxu0 %v209
    %270 = vmatmul.bf16.gmra.mxu0 %v221
    %v271 = vpop.f32.mrf.mxu0
    %v272 = vadd.f32 %v183, %v271
    %v273 = vpop.f32.mrf.mxu0
    %274 = vdwg.mxu0
    %275 = vmatpush.bf16.msra.mxu0 0
    %276 = vmatpush.bf16.msra.mxu0 0
    %277 = vmatpush.bf16.msra.mxu0 0
    %278 = vmatpush.bf16.msra.mxu0 0
    %279 = vmatpush.bf16.msra.mxu0 0
    %280 = vmatpush.bf16.msra.mxu0 0
    %281 = vmatpush.bf16.msra.mxu0 %v234
    %282 = vmatpush.bf16.msra.mxu0 %v210
    %283 = vmatmul.bf16.gmra.mxu0 %v221
    %v284 = vpop.f32.mrf.mxu0
    %v285 = vadd.f32 %v184, %v284
    %v286 = vpop.f32.mrf.mxu0
    %287 = vdwg.mxu0
    %v288 = vmax.f32 %v246, 0.0
    %v289 = vmax.f32 %v259, 0.0
    %v290 = vmax.f32 %v272, 0.0
    %v291 = vmax.f32 %v285, 0.0
    %v292 = vpack.c.bf16 %v288, %v288
    %v293 = vpack.c.bf16 %v289, %v289
    %v294 = vpack.c.bf16 %v290, %v290
    %v295 = vpack.c.bf16 %v291, %v291
    %v296 = vld [vmem:[#allocation8] sm:$0xff]
    %v297 = vld [vmem:[#allocation8 + $0x8] sm:$0xff]
    %v298 = vld [vmem:[#allocation8 + $0x10] sm:$0xff]
    %v299 = vld [vmem:[#allocation8 + $0x18] sm:$0xff]
    %v300 = vld [vmem:[#allocation8 + $0x20] sm:$0xff]
    %v301 = vld [vmem:[#allocation8 + $0x28] sm:$0xff]
    %v302 = vld [vmem:[#allocation8 + $0x30] sm:$0xff]
    %v303 = vld [vmem:[#allocation8 + $0x38] sm:$0xff]
    %v304 = vld [vmem:[#allocation8 + $0x40] sm:$0xff]
    %v305 = vld [vmem:[#allocation8 + $0x48] sm:$0xff]
    %v306 = vld [vmem:[#allocation8 + $0x50] sm:$0xff]
    %v307 = vld [vmem:[#allocation8 + $0x58] sm:$0xff]
    %v308 = vld [vmem:[#allocation8 + $0x60] sm:$0xff]
    %v309 = vld [vmem:[#allocation8 + $0x68] sm:$0xff]
    %v310 = vld [vmem:[#allocation8 + $0x70] sm:$0xff]
    %v311 = vld [vmem:[#allocation8 + $0x78] sm:$0xff]
    %v312 = vld [vmem:[#allocation8 + $0x80] sm:$0xff]
    %v313 = vld [vmem:[#allocation8 + $0x88] sm:$0xff]
    %v314 = vld [vmem:[#allocation8 + $0x90] sm:$0xff]
    %v315 = vld [vmem:[#allocation8 + $0x98] sm:$0xff]
    %v316 = vld [vmem:[#allocation8 + $0xa0] sm:$0xff]
    %v317 = vld [vmem:[#allocation8 + $0xa8] sm:$0xff]
    %v318 = vld [vmem:[#allocation8 + $0xb0] sm:$0xff]
    %v319 = vld [vmem:[#allocation8 + $0xb8] sm:$0xff]
    %v320 = vld [vmem:[#allocation8 + $0xc0] sm:$0xff]
    %v321 = vld [vmem:[#allocation8 + $0xc8] sm:$0xff]
    %v322 = vld [vmem:[#allocation8 + $0xd0] sm:$0xff]
    %v323 = vld [vmem:[#allocation8 + $0xd8] sm:$0xff]
    %v324 = vld [vmem:[#allocation8 + $0xe0] sm:$0xff]
    %v325 = vld [vmem:[#allocation8 + $0xe8] sm:$0xff]
    %v326 = vld [vmem:[#allocation8 + $0xf0] sm:$0xff]
    %v327 = vld [vmem:[#allocation8 + $0xf8] sm:$0xff]
    %v328 = vld [vmem:[#allocation8 + $0x100] sm:$0xff]
    %v329 = vld [vmem:[#allocation8 + $0x108] sm:$0xff]
    %v330 = vld [vmem:[#allocation8 + $0x110] sm:$0xff]
    %v331 = vld [vmem:[#allocation8 + $0x118] sm:$0xff]
    %v332 = vld [vmem:[#allocation8 + $0x120] sm:$0xff]
    %v333 = vld [vmem:[#allocation8 + $0x128] sm:$0xff]
    %v334 = vld [vmem:[#allocation8 + $0x130] sm:$0xff]
    %v335 = vld [vmem:[#allocation8 + $0x138] sm:$0xff]
    %v336 = vld [vmem:[#allocation8 + $0x140] sm:$0xff]
    %v337 = vld [vmem:[#allocation8 + $0x148] sm:$0xff]
    %v338 = vld [vmem:[#allocation8 + $0x150] sm:$0xff]
    %v339 = vld [vmem:[#allocation8 + $0x158] sm:$0xff]
    %v340 = vld [vmem:[#allocation8 + $0x160] sm:$0xff]
    %v341 = vld [vmem:[#allocation8 + $0x168] sm:$0xff]
    %v342 = vld [vmem:[#allocation8 + $0x170] sm:$0xff]
    %v343 = vld [vmem:[#allocation8 + $0x178] sm:$0xff]
    %v344 = vld [vmem:[#allocation8 + $0x180] sm:$0xff]
    %v345 = vld [vmem:[#allocation8 + $0x188] sm:$0xff]
    %v346 = vld [vmem:[#allocation8 + $0x190] sm:$0xff]
    %v347 = vld [vmem:[#allocation8 + $0x198] sm:$0xff]
    %v348 = vld [vmem:[#allocation8 + $0x1a0] sm:$0xff]
    %v349 = vld [vmem:[#allocation8 + $0x1a8] sm:$0xff]
    %v350 = vld [vmem:[#allocation8 + $0x1b0] sm:$0xff]
    %v351 = vld [vmem:[#allocation8 + $0x1b8] sm:$0xff]
    %v352 = vld [vmem:[#allocation8 + $0x1c0] sm:$0xff]
    %v353 = vld [vmem:[#allocation8 + $0x1c8] sm:$0xff]
    %v354 = vld [vmem:[#allocation8 + $0x1d0] sm:$0xff]
    %v355 = vld [vmem:[#allocation8 + $0x1d8] sm:$0xff]
    %v356 = vld [vmem:[#allocation8 + $0x1e0] sm:$0xff]
    %v357 = vld [vmem:[#allocation8 + $0x1e8] sm:$0xff]
    %v358 = vld [vmem:[#allocation8 + $0x1f0] sm:$0xff]
    %v359 = vld [vmem:[#allocation8 + $0x1f8] sm:$0xff]
    %v360 = vld [vmem:[#allocation8 + $0x200] sm:$0xff]
    %v361 = vld [vmem:[#allocation8 + $0x208] sm:$0xff]
    %v362 = vld [vmem:[#allocation8 + $0x210] sm:$0xff]
    %v363 = vld [vmem:[#allocation8 + $0x218] sm:$0xff]
    %v364 = vld [vmem:[#allocation8 + $0x220] sm:$0xff]
    %v365 = vld [vmem:[#allocation8 + $0x228] sm:$0xff]
    %v366 = vld [vmem:[#allocation8 + $0x230] sm:$0xff]
    %v367 = vld [vmem:[#allocation8 + $0x238] sm:$0xff]
    %v368 = vld [vmem:[#allocation8 + $0x240] sm:$0xff]
    %v369 = vld [vmem:[#allocation8 + $0x248] sm:$0xff]
    %v370 = vld [vmem:[#allocation8 + $0x250] sm:$0xff]
    %v371 = vld [vmem:[#allocation8 + $0x258] sm:$0xff]
    %v372 = vld [vmem:[#allocation8 + $0x260] sm:$0xff]
    %v373 = vld [vmem:[#allocation8 + $0x268] sm:$0xff]
    %v374 = vld [vmem:[#allocation8 + $0x270] sm:$0xff]
    %v375 = vld [vmem:[#allocation8 + $0x278] sm:$0xff]
    %v376 = vld [vmem:[#allocation8 + $0x280] sm:$0xff]
    %v377 = vld [vmem:[#allocation8 + $0x288] sm:$0xff]
    %v378 = vld [vmem:[#allocation8 + $0x290] sm:$0xff]
    %v379 = vld [vmem:[#allocation8 + $0x298] sm:$0xff]
    %v380 = vld [vmem:[#allocation8 + $0x2a0] sm:$0xff]
    %v381 = vld [vmem:[#allocation8 + $0x2a8] sm:$0xff]
    %v382 = vld [vmem:[#allocation8 + $0x2b0] sm:$0xff]
    %v383 = vld [vmem:[#allocation8 + $0x2b8] sm:$0xff]
    %v384 = vld [vmem:[#allocation8 + $0x2c0] sm:$0xff]
    %v385 = vld [vmem:[#allocation8 + $0x2c8] sm:$0xff]
    %v386 = vld [vmem:[#allocation8 + $0x2d0] sm:$0xff]
    %v387 = vld [vmem:[#allocation8 + $0x2d8] sm:$0xff]
    %v388 = vld [vmem:[#allocation8 + $0x2e0] sm:$0xff]
    %v389 = vld [vmem:[#allocation8 + $0x2e8] sm:$0xff]
    %v390 = vld [vmem:[#allocation8 + $0x2f0] sm:$0xff]
    %v391 = vld [vmem:[#allocation8 + $0x2f8] sm:$0xff]
    %v392 = vld [vmem:[#allocation8 + $0x300] sm:$0xff]
    %v393 = vld [vmem:[#allocation8 + $0x308] sm:$0xff]
    %v394 = vld [vmem:[#allocation8 + $0x310] sm:$0xff]
    %v395 = vld [vmem:[#allocation8 + $0x318] sm:$0xff]
    %v396 = vld [vmem:[#allocation8 + $0x320] sm:$0xff]
    %v397 = vld [vmem:[#allocation8 + $0x328] sm:$0xff]
    %v398 = vld [vmem:[#allocation8 + $0x330] sm:$0xff]
    %v399 = vld [vmem:[#allocation8 + $0x338] sm:$0xff]
    %v400 = vld [vmem:[#allocation8 + $0x340] sm:$0xff]
    %v401 = vld [vmem:[#allocation8 + $0x348] sm:$0xff]
    %v402 = vld [vmem:[#allocation8 + $0x350] sm:$0xff]
    %v403 = vld [vmem:[#allocation8 + $0x358] sm:$0xff]
    %v404 = vld [vmem:[#allocation8 + $0x360] sm:$0xff]
    %v405 = vld [vmem:[#allocation8 + $0x368] sm:$0xff]
    %v406 = vld [vmem:[#allocation8 + $0x370] sm:$0xff]
    %v407 = vld [vmem:[#allocation8 + $0x378] sm:$0xff]
    %v408 = vld [vmem:[#allocation8 + $0x380] sm:$0xff]
    %v409 = vld [vmem:[#allocation8 + $0x388] sm:$0xff]
    %v410 = vld [vmem:[#allocation8 + $0x390] sm:$0xff]
    %v411 = vld [vmem:[#allocation8 + $0x398] sm:$0xff]
    %v412 = vld [vmem:[#allocation8 + $0x3a0] sm:$0xff]
    %v413 = vld [vmem:[#allocation8 + $0x3a8] sm:$0xff]
    %v414 = vld [vmem:[#allocation8 + $0x3b0] sm:$0xff]
    %v415 = vld [vmem:[#allocation8 + $0x3b8] sm:$0xff]
    %v416 = vld [vmem:[#allocation8 + $0x3c0] sm:$0xff]
    %v417 = vld [vmem:[#allocation8 + $0x3c8] sm:$0xff]
    %v418 = vld [vmem:[#allocation8 + $0x3d0] sm:$0xff]
    %v419 = vld [vmem:[#allocation8 + $0x3d8] sm:$0xff]
    %v420 = vld [vmem:[#allocation8 + $0x3e0] sm:$0xff]
    %v421 = vld [vmem:[#allocation8 + $0x3e8] sm:$0xff]
    %v422 = vld [vmem:[#allocation8 + $0x3f0] sm:$0xff]
    %v423 = vld [vmem:[#allocation8 + $0x3f8] sm:$0xff]
    %v424 = vld [vmem:[%s1] sm:$0xff]
    %v425 = vpack.c.bf16 %v424, %v424
    %v426 = vld [vmem:[#allocation10] sm:$0xff]
    %428 = vst [vmem:[#allocation1] ss:$4 sm:$0xff] %v426
    %v429 = vld.sshfl [vmem:[#allocation1] sm:$0xff pattern:$0x73625140]
    %v430 = vld.sshfl [vmem:[#allocation1 + $0x8] sm:$0xff pattern:$0x73625140]
    %v431 = vld.sshfl [vmem:[#allocation1 + $0x10] sm:$0xff pattern:$0x73625140]
    %v432 = vld.sshfl [vmem:[#allocation1 + $0x18] sm:$0xff pattern:$0x73625140]
    %vm433 = vcmask 31744
    %v435 = vsel %vm433, %v425, 0
    %vm437 = vcmask 1041408
    %v438 = vsel %vm437, %v429, 0
    %v440 = vsel %vm437, %v430, 0
    %v442 = vsel %vm437, %v431, 0
    %v444 = vsel %vm437, %v432, 0
    %446 = vmatpush.bf16.msra.mxu0 0
    %447 = vmatpush.bf16.msra.mxu0 0
    %448 = vmatpush.bf16.msra.mxu0 0
    %449 = vmatpush.bf16.msra.mxu0 0
    %450 = vmatpush.bf16.msra.mxu0 0
    %451 = vmatpush.bf16.msra.mxu0 0
    %452 = vmatpush.bf16.msra.mxu0 0
    %453 = vmatpush.bf16.msra.mxu0 %v438
    %454 = vmatmul.bf16.gmra.mxu0 %v435
    %v455 = vpop.f32.mrf.mxu0
    %v456 = vadd.f32 0.0, %v455
    %v457 = vpop.f32.mrf.mxu0
    %458 = vdwg.mxu0
    %459 = vmatpush.bf16.msra.mxu0 0
    %460 = vmatpush.bf16.msra.mxu0 0
    %461 = vmatpush.bf16.msra.mxu0 0
    %462 = vmatpush.bf16.msra.mxu0 0
    %463 = vmatpush.bf16.msra.mxu0 0
    %464 = vmatpush.bf16.msra.mxu0 0
    %465 = vmatpush.bf16.msra.mxu0 0
    %466 = vmatpush.bf16.msra.mxu0 %v440
    %467 = vmatmul.bf16.gmra.mxu0 %v435
    %v468 = vpop.f32.mrf.mxu0
    %v469 = vadd.f32 0.0, %v468
    %v470 = vpop.f32.mrf.mxu0
    %471 = vdwg.mxu0
    %472 = vmatpush.bf16.msra.mxu0 0
    %473 = vmatpush.bf16.msra.mxu0 0
    %474 = vmatpush.bf16.msra.mxu0 0
    %475 = vmatpush.bf16.msra.mxu0 0
    %476 = vmatpush.bf16.msra.mxu0 0
    %477 = vmatpush.bf16.msra.mxu0 0
    %478 = vmatpush.bf16.msra.mxu0 0
    %479 = vmatpush.bf16.msra.mxu0 %v442
    %480 = vmatmul.bf16.gmra.mxu0 %v435
    %v481 = vpop.f32.mrf.mxu0
    %v482 = vadd.f32 0.0, %v481
    %v483 = vpop.f32.mrf.mxu0
    %484 = vdwg.mxu0
    %485 = vmatpush.bf16.msra.mxu0 0
    %486 = vmatpush.bf16.msra.mxu0 0
    %487 = vmatpush.bf16.msra.mxu0 0
    %488 = vmatpush.bf16.msra.mxu0 0
    %489 = vmatpush.bf16.msra.mxu0 0
    %490 = vmatpush.bf16.msra.mxu0 0
    %491 = vmatpush.bf16.msra.mxu0 0
    %492 = vmatpush.bf16.msra.mxu0 %v444
    %493 = vmatmul.bf16.gmra.mxu0 %v435
    %v494 = vpop.f32.mrf.mxu0
    %v495 = vadd.f32 0.0, %v494
    %v496 = vpop.f32.mrf.mxu0
    %497 = vdwg.mxu0
    %v626 = vunpack.c.l.b16 %v296
    %v627 = vunpack.c.h.b16 %v296
    %v628 = vunpack.c.l.b16 %v297
    %v629 = vunpack.c.h.b16 %v297
    %v630 = vunpack.c.l.b16 %v298
    %v631 = vunpack.c.h.b16 %v298
    %v632 = vunpack.c.l.b16 %v299
    %v633 = vunpack.c.h.b16 %v299
    %v634 = vunpack.c.l.b16 %v300
    %v635 = vunpack.c.h.b16 %v300
    %v636 = vunpack.c.l.b16 %v301
    %v637 = vunpack.c.h.b16 %v301
    %v638 = vunpack.c.l.b16 %v302
    %v639 = vunpack.c.h.b16 %v302
    %v640 = vunpack.c.l.b16 %v303
    %v641 = vunpack.c.h.b16 %v303
    %v642 = vunpack.c.l.b16 %v304
    %v643 = vunpack.c.h.b16 %v304
    %v644 = vunpack.c.l.b16 %v305
    %v645 = vunpack.c.h.b16 %v305
    %v646 = vunpack.c.l.b16 %v306
    %v647 = vunpack.c.h.b16 %v306
    %v648 = vunpack.c.l.b16 %v307
    %v649 = vunpack.c.h.b16 %v307
    %v650 = vunpack.c.l.b16 %v308
    %v651 = vunpack.c.h.b16 %v308
    %v652 = vunpack.c.l.b16 %v309
    %v653 = vunpack.c.h.b16 %v309
    %v654 = vunpack.c.l.b16 %v310
    %v655 = vunpack.c.h.b16 %v310
    %v656 = vunpack.c.l.b16 %v311
    %v657 = vunpack.c.h.b16 %v311
    %v658 = vunpack.c.l.b16 %v312
    %v659 = vunpack.c.h.b16 %v312
    %v660 = vunpack.c.l.b16 %v313
    %v661 = vunpack.c.h.b16 %v313
    %v662 = vunpack.c.l.b16 %v314
    %v663 = vunpack.c.h.b16 %v314
    %v664 = vunpack.c.l.b16 %v315
    %v665 = vunpack.c.h.b16 %v315
    %v666 = vunpack.c.l.b16 %v316
    %v667 = vunpack.c.h.b16 %v316
    %v668 = vunpack.c.l.b16 %v317
    %v669 = vunpack.c.h.b16 %v317
    %v670 = vunpack.c.l.b16 %v318
    %v671 = vunpack.c.h.b16 %v318
    %v672 = vunpack.c.l.b16 %v319
    %v673 = vunpack.c.h.b16 %v319
    %v674 = vunpack.c.l.b16 %v320
    %v675 = vunpack.c.h.b16 %v320
    %v676 = vunpack.c.l.b16 %v321
    %v677 = vunpack.c.h.b16 %v321
    %v678 = vunpack.c.l.b16 %v322
    %v679 = vunpack.c.h.b16 %v322
    %v680 = vunpack.c.l.b16 %v323
    %v681 = vunpack.c.h.b16 %v323
    %v682 = vunpack.c.l.b16 %v324
    %v683 = vunpack.c.h.b16 %v324
    %v684 = vunpack.c.l.b16 %v325
    %v685 = vunpack.c.h.b16 %v325
    %v686 = vunpack.c.l.b16 %v326
    %v687 = vunpack.c.h.b16 %v326
    %v688 = vunpack.c.l.b16 %v327
    %v689 = vunpack.c.h.b16 %v327
    %v690 = vunpack.c.l.b16 %v328
    %v691 = vunpack.c.h.b16 %v328
    %v692 = vunpack.c.l.b16 %v329
    %v693 = vunpack.c.h.b16 %v329
    %v694 = vunpack.c.l.b16 %v330
    %v695 = vunpack.c.h.b16 %v330
    %v696 = vunpack.c.l.b16 %v331
    %v697 = vunpack.c.h.b16 %v331
    %v698 = vunpack.c.l.b16 %v332
    %v699 = vunpack.c.h.b16 %v332
    %v700 = vunpack.c.l.b16 %v333
    %v701 = vunpack.c.h.b16 %v333
    %v702 = vunpack.c.l.b16 %v334
    %v703 = vunpack.c.h.b16 %v334
    %v704 = vunpack.c.l.b16 %v335
    %v705 = vunpack.c.h.b16 %v335
    %v706 = vunpack.c.l.b16 %v336
    %v707 = vunpack.c.h.b16 %v336
    %v708 = vunpack.c.l.b16 %v337
    %v709 = vunpack.c.h.b16 %v337
    %v710 = vunpack.c.l.b16 %v338
    %v711 = vunpack.c.h.b16 %v338
    %v712 = vunpack.c.l.b16 %v339
    %v713 = vunpack.c.h.b16 %v339
    %v714 = vunpack.c.l.b16 %v340
    %v715 = vunpack.c.h.b16 %v340
    %v716 = vunpack.c.l.b16 %v341
    %v717 = vunpack.c.h.b16 %v341
    %v718 = vunpack.c.l.b16 %v342
    %v719 = vunpack.c.h.b16 %v342
    %v720 = vunpack.c.l.b16 %v343
    %v721 = vunpack.c.h.b16 %v343
    %v722 = vunpack.c.l.b16 %v344
    %v723 = vunpack.c.h.b16 %v344
    %v724 = vunpack.c.l.b16 %v345
    %v725 = vunpack.c.h.b16 %v345
    %v726 = vunpack.c.l.b16 %v346
    %v727 = vunpack.c.h.b16 %v346
    %v728 = vunpack.c.l.b16 %v347
    %v729 = vunpack.c.h.b16 %v347
    %v730 = vunpack.c.l.b16 %v348
    %v731 = vunpack.c.h.b16 %v348
    %v732 = vunpack.c.l.b16 %v349
    %v733 = vunpack.c.h.b16 %v349
    %v734 = vunpack.c.l.b16 %v350
    %v735 = vunpack.c.h.b16 %v350
    %v736 = vunpack.c.l.b16 %v351
    %v737 = vunpack.c.h.b16 %v351
    %v738 = vunpack.c.l.b16 %v352
    %v739 = vunpack.c.h.b16 %v352
    %v740 = vunpack.c.l.b16 %v353
    %v741 = vunpack.c.h.b16 %v353
    %v742 = vunpack.c.l.b16 %v354
    %v743 = vunpack.c.h.b16 %v354
    %v744 = vunpack.c.l.b16 %v355
    %v745 = vunpack.c.h.b16 %v355
    %v746 = vunpack.c.l.b16 %v356
    %v747 = vunpack.c.h.b16 %v356
    %v748 = vunpack.c.l.b16 %v357
    %v749 = vunpack.c.h.b16 %v357
    %v750 = vunpack.c.l.b16 %v358
    %v751 = vunpack.c.h.b16 %v358
    %v752 = vunpack.c.l.b16 %v359
    %v753 = vunpack.c.h.b16 %v359
    %v754 = vunpack.c.l.b16 %v360
    %v755 = vunpack.c.h.b16 %v360
    %v756 = vunpack.c.l.b16 %v361
    %v757 = vunpack.c.h.b16 %v361
    %v758 = vunpack.c.l.b16 %v362
    %v759 = vunpack.c.h.b16 %v362
    %v760 = vunpack.c.l.b16 %v363
    %v761 = vunpack.c.h.b16 %v363
    %v762 = vunpack.c.l.b16 %v364
    %v763 = vunpack.c.h.b16 %v364
    %v764 = vunpack.c.l.b16 %v365
    %v765 = vunpack.c.h.b16 %v365
    %v766 = vunpack.c.l.b16 %v366
    %v767 = vunpack.c.h.b16 %v366
    %v768 = vunpack.c.l.b16 %v367
    %v769 = vunpack.c.h.b16 %v367
    %v770 = vunpack.c.l.b16 %v368
    %v771 = vunpack.c.h.b16 %v368
    %v772 = vunpack.c.l.b16 %v369
    %v773 = vunpack.c.h.b16 %v369
    %v774 = vunpack.c.l.b16 %v370
    %v775 = vunpack.c.h.b16 %v370
    %v776 = vunpack.c.l.b16 %v371
    %v777 = vunpack.c.h.b16 %v371
    %v778 = vunpack.c.l.b16 %v372
    %v779 = vunpack.c.h.b16 %v372
    %v780 = vunpack.c.l.b16 %v373
    %v781 = vunpack.c.h.b16 %v373
    %v782 = vunpack.c.l.b16 %v374
    %v783 = vunpack.c.h.b16 %v374
    %v784 = vunpack.c.l.b16 %v375
    %v785 = vunpack.c.h.b16 %v375
    %v786 = vunpack.c.l.b16 %v376
    %v787 = vunpack.c.h.b16 %v376
    %v788 = vunpack.c.l.b16 %v377
    %v789 = vunpack.c.h.b16 %v377
    %v790 = vunpack.c.l.b16 %v378
    %v791 = vunpack.c.h.b16 %v378
    %v792 = vunpack.c.l.b16 %v379
    %v793 = vunpack.c.h.b16 %v379
    %v794 = vunpack.c.l.b16 %v380
    %v795 = vunpack.c.h.b16 %v380
    %v796 = vunpack.c.l.b16 %v381
    %v797 = vunpack.c.h.b16 %v381
    %v798 = vunpack.c.l.b16 %v382
    %v799 = vunpack.c.h.b16 %v382
    %v800 = vunpack.c.l.b16 %v383
    %v801 = vunpack.c.h.b16 %v383
    %v802 = vunpack.c.l.b16 %v384
    %v803 = vunpack.c.h.b16 %v384
    %v804 = vunpack.c.l.b16 %v385
    %v805 = vunpack.c.h.b16 %v385
    %v806 = vunpack.c.l.b16 %v386
    %v807 = vunpack.c.h.b16 %v386
    %v808 = vunpack.c.l.b16 %v387
    %v809 = vunpack.c.h.b16 %v387
    %v810 = vunpack.c.l.b16 %v388
    %v811 = vunpack.c.h.b16 %v388
    %v812 = vunpack.c.l.b16 %v389
    %v813 = vunpack.c.h.b16 %v389
    %v814 = vunpack.c.l.b16 %v390
    %v815 = vunpack.c.h.b16 %v390
    %v816 = vunpack.c.l.b16 %v391
    %v817 = vunpack.c.h.b16 %v391
    %v818 = vunpack.c.l.b16 %v392
    %v819 = vunpack.c.h.b16 %v392
    %v820 = vunpack.c.l.b16 %v393
    %v821 = vunpack.c.h.b16 %v393
    %v822 = vunpack.c.l.b16 %v394
    %v823 = vunpack.c.h.b16 %v394
    %v824 = vunpack.c.l.b16 %v395
    %v825 = vunpack.c.h.b16 %v395
    %v826 = vunpack.c.l.b16 %v396
    %v827 = vunpack.c.h.b16 %v396
    %v828 = vunpack.c.l.b16 %v397
    %v829 = vunpack.c.h.b16 %v397
    %v830 = vunpack.c.l.b16 %v398
    %v831 = vunpack.c.h.b16 %v398
    %v832 = vunpack.c.l.b16 %v399
    %v833 = vunpack.c.h.b16 %v399
    %v834 = vunpack.c.l.b16 %v400
    %v835 = vunpack.c.h.b16 %v400
    %v836 = vunpack.c.l.b16 %v401
    %v837 = vunpack.c.h.b16 %v401
    %v838 = vunpack.c.l.b16 %v402
    %v839 = vunpack.c.h.b16 %v402
    %v840 = vunpack.c.l.b16 %v403
    %v841 = vunpack.c.h.b16 %v403
    %v842 = vunpack.c.l.b16 %v404
    %v843 = vunpack.c.h.b16 %v404
    %v844 = vunpack.c.l.b16 %v405
    %v845 = vunpack.c.h.b16 %v405
    %v846 = vunpack.c.l.b16 %v406
    %v847 = vunpack.c.h.b16 %v406
    %v848 = vunpack.c.l.b16 %v407
    %v849 = vunpack.c.h.b16 %v407
    %v850 = vunpack.c.l.b16 %v408
    %v851 = vunpack.c.h.b16 %v408
    %v852 = vunpack.c.l.b16 %v409
    %v853 = vunpack.c.h.b16 %v409
    %v854 = vunpack.c.l.b16 %v410
    %v855 = vunpack.c.h.b16 %v410
    %v856 = vunpack.c.l.b16 %v411
    %v857 = vunpack.c.h.b16 %v411
    %v858 = vunpack.c.l.b16 %v412
    %v859 = vunpack.c.h.b16 %v412
    %v860 = vunpack.c.l.b16 %v413
    %v861 = vunpack.c.h.b16 %v413
    %v862 = vunpack.c.l.b16 %v414
    %v863 = vunpack.c.h.b16 %v414
    %v864 = vunpack.c.l.b16 %v415
    %v865 = vunpack.c.h.b16 %v415
    %v866 = vunpack.c.l.b16 %v416
    %v867 = vunpack.c.h.b16 %v416
    %v868 = vunpack.c.l.b16 %v417
    %v869 = vunpack.c.h.b16 %v417
    %v870 = vunpack.c.l.b16 %v418
    %v871 = vunpack.c.h.b16 %v418
    %v872 = vunpack.c.l.b16 %v419
    %v873 = vunpack.c.h.b16 %v419
    %v874 = vunpack.c.l.b16 %v420
    %v875 = vunpack.c.h.b16 %v420
    %v876 = vunpack.c.l.b16 %v421
    %v877 = vunpack.c.h.b16 %v421
    %v878 = vunpack.c.l.b16 %v422
    %v879 = vunpack.c.h.b16 %v422
    %v880 = vunpack.c.l.b16 %v423
    %v881 = vunpack.c.h.b16 %v423
    %v882 = vpack.c.b16 %v630, %v626
    %v883 = vpack.c.b16 %v631, %v627
    %v884 = vpack.c.b16 %v632, %v628
    %v885 = vpack.c.b16 %v633, %v629
    %v886 = vpack.c.b16 %v638, %v634
    %v887 = vpack.c.b16 %v639, %v635
    %v888 = vpack.c.b16 %v640, %v636
    %v889 = vpack.c.b16 %v641, %v637
    %v890 = vpack.c.b16 %v646, %v642
    %v891 = vpack.c.b16 %v647, %v643
    %v892 = vpack.c.b16 %v648, %v644
    %v893 = vpack.c.b16 %v649, %v645
    %v894 = vpack.c.b16 %v654, %v650
    %v895 = vpack.c.b16 %v655, %v651
    %v896 = vpack.c.b16 %v656, %v652
    %v897 = vpack.c.b16 %v657, %v653
    %v898 = vpack.c.b16 %v662, %v658
    %v899 = vpack.c.b16 %v663, %v659
    %v900 = vpack.c.b16 %v664, %v660
    %v901 = vpack.c.b16 %v665, %v661
    %v902 = vpack.c.b16 %v670, %v666
    %v903 = vpack.c.b16 %v671, %v667
    %v904 = vpack.c.b16 %v672, %v668
    %v905 = vpack.c.b16 %v673, %v669
    %v906 = vpack.c.b16 %v678, %v674
    %v907 = vpack.c.b16 %v679, %v675
    %v908 = vpack.c.b16 %v680, %v676
    %v909 = vpack.c.b16 %v681, %v677
    %v910 = vpack.c.b16 %v686, %v682
    %v911 = vpack.c.b16 %v687, %v683
    %v912 = vpack.c.b16 %v688, %v684
    %v913 = vpack.c.b16 %v689, %v685
    %v914 = vpack.c.b16 %v694, %v690
    %v915 = vpack.c.b16 %v695, %v691
    %v916 = vpack.c.b16 %v696, %v692
    %v917 = vpack.c.b16 %v697, %v693
    %v918 = vpack.c.b16 %v702, %v698
    %v919 = vpack.c.b16 %v703, %v699
    %v920 = vpack.c.b16 %v704, %v700
    %v921 = vpack.c.b16 %v705, %v701
    %v922 = vpack.c.b16 %v710, %v706
    %v923 = vpack.c.b16 %v711, %v707
    %v924 = vpack.c.b16 %v712, %v708
    %v925 = vpack.c.b16 %v713, %v709
    %v926 = vpack.c.b16 %v718, %v714
    %v927 = vpack.c.b16 %v719, %v715
    %v928 = vpack.c.b16 %v720, %v716
    %v929 = vpack.c.b16 %v721, %v717
    %v930 = vpack.c.b16 %v726, %v722
    %v931 = vpack.c.b16 %v727, %v723
    %v932 = vpack.c.b16 %v728, %v724
    %v933 = vpack.c.b16 %v729, %v725
    %v934 = vpack.c.b16 %v734, %v730
    %v935 = vpack.c.b16 %v735, %v731
    %v936 = vpack.c.b16 %v736, %v732
    %v937 = vpack.c.b16 %v737, %v733
    %v938 = vpack.c.b16 %v742, %v738
    %v939 = vpack.c.b16 %v743, %v739
    %v940 = vpack.c.b16 %v744, %v740
    %v941 = vpack.c.b16 %v745, %v741
    %v942 = vpack.c.b16 %v750, %v746
    %v943 = vpack.c.b16 %v751, %v747
    %v944 = vpack.c.b16 %v752, %v748
    %v945 = vpack.c.b16 %v753, %v749
    %v946 = vpack.c.b16 %v758, %v754
    %v947 = vpack.c.b16 %v759, %v755
    %v948 = vpack.c.b16 %v760, %v756
    %v949 = vpack.c.b16 %v761, %v757
    %v950 = vpack.c.b16 %v766, %v762
    %v951 = vpack.c.b16 %v767, %v763
    %v952 = vpack.c.b16 %v768, %v764
    %v953 = vpack.c.b16 %v769, %v765
    %v954 = vpack.c.b16 %v774, %v770
    %v955 = vpack.c.b16 %v775, %v771
    %v956 = vpack.c.b16 %v776, %v772
    %v957 = vpack.c.b16 %v777, %v773
    %v958 = vpack.c.b16 %v782, %v778
    %v959 = vpack.c.b16 %v783, %v779
    %v960 = vpack.c.b16 %v784, %v780
    %v961 = vpack.c.b16 %v785, %v781
    %v962 = vpack.c.b16 %v790, %v786
    %v963 = vpack.c.b16 %v791, %v787
    %v964 = vpack.c.b16 %v792, %v788
    %v965 = vpack.c.b16 %v793, %v789
    %v966 = vpack.c.b16 %v798, %v794
    %v967 = vpack.c.b16 %v799, %v795
    %v968 = vpack.c.b16 %v800, %v796
    %v969 = vpack.c.b16 %v801, %v797
    %v970 = vpack.c.b16 %v806, %v802
    %v971 = vpack.c.b16 %v807, %v803
    %v972 = vpack.c.b16 %v808, %v804
    %v973 = vpack.c.b16 %v809, %v805
    %v974 = vpack.c.b16 %v814, %v810
    %v975 = vpack.c.b16 %v815, %v811
    %v976 = vpack.c.b16 %v816, %v812
    %v977 = vpack.c.b16 %v817, %v813
    %v978 = vpack.c.b16 %v822, %v818
    %v979 = vpack.c.b16 %v823, %v819
    %v980 = vpack.c.b16 %v824, %v820
    %v981 = vpack.c.b16 %v825, %v821
    %v982 = vpack.c.b16 %v830, %v826
    %v983 = vpack.c.b16 %v831, %v827
    %v984 = vpack.c.b16 %v832, %v828
    %v985 = vpack.c.b16 %v833, %v829
    %v986 = vpack.c.b16 %v838, %v834
    %v987 = vpack.c.b16 %v839, %v835
    %v988 = vpack.c.b16 %v840, %v836
    %v989 = vpack.c.b16 %v841, %v837
    %v990 = vpack.c.b16 %v846, %v842
    %v991 = vpack.c.b16 %v847, %v843
    %v992 = vpack.c.b16 %v848, %v844
    %v993 = vpack.c.b16 %v849, %v845
    %v994 = vpack.c.b16 %v854, %v850
    %v995 = vpack.c.b16 %v855, %v851
    %v996 = vpack.c.b16 %v856, %v852
    %v997 = vpack.c.b16 %v857, %v853
    %v998 = vpack.c.b16 %v862, %v858
    %v999 = vpack.c.b16 %v863, %v859
    %v1000 = vpack.c.b16 %v864, %v860
    %v1001 = vpack.c.b16 %v865, %v861
    %v1002 = vpack.c.b16 %v870, %v866
    %v1003 = vpack.c.b16 %v871, %v867
    %v1004 = vpack.c.b16 %v872, %v868
    %v1005 = vpack.c.b16 %v873, %v869
    %v1006 = vpack.c.b16 %v878, %v874
    %v1007 = vpack.c.b16 %v879, %v875
    %v1008 = vpack.c.b16 %v880, %v876
    %v1009 = vpack.c.b16 %v881, %v877
    %1138 = vmatpush.bf16.msra.mxu0 %v910
    %1139 = vmatpush.bf16.msra.mxu0 %v906
    %1140 = vmatpush.bf16.msra.mxu0 %v902
    %1141 = vmatpush.bf16.msra.mxu0 %v898
    %1142 = vmatpush.bf16.msra.mxu0 %v894
    %1143 = vmatpush.bf16.msra.mxu0 %v890
    %1144 = vmatpush.bf16.msra.mxu0 %v886
    %1145 = vmatpush.bf16.msra.mxu0 %v882
    %1146 = vmatmul.bf16.gmra.mxu0 %v292
    %v1147 = vpop.f32.mrf.mxu0
    %v1148 = vadd.f32 %v456, %v1147
    %v1149 = vpop.f32.mrf.mxu0
    %1150 = vdwg.mxu0
    %1151 = vmatpush.bf16.msra.mxu0 %v942
    %1152 = vmatpush.bf16.msra.mxu0 %v938
    %1153 = vmatpush.bf16.msra.mxu0 %v934
    %1154 = vmatpush.bf16.msra.mxu0 %v930
    %1155 = vmatpush.bf16.msra.mxu0 %v926
    %1156 = vmatpush.bf16.msra.mxu0 %v922
    %1157 = vmatpush.bf16.msra.mxu0 %v918
    %1158 = vmatpush.bf16.msra.mxu0 %v914
    %1159 = vmatmul.bf16.gmra.mxu0 %v293
    %v1160 = vpop.f32.mrf.mxu0
    %v1161 = vadd.f32 %v1148, %v1160
    %v1162 = vpop.f32.mrf.mxu0
    %1163 = vdwg.mxu0
    %1164 = vmatpush.bf16.msra.mxu0 %v974
    %1165 = vmatpush.bf16.msra.mxu0 %v970
    %1166 = vmatpush.bf16.msra.mxu0 %v966
    %1167 = vmatpush.bf16.msra.mxu0 %v962
    %1168 = vmatpush.bf16.msra.mxu0 %v958
    %1169 = vmatpush.bf16.msra.mxu0 %v954
    %1170 = vmatpush.bf16.msra.mxu0 %v950
    %1171 = vmatpush.bf16.msra.mxu0 %v946
    %1172 = vmatmul.bf16.gmra.mxu0 %v294
    %v1173 = vpop.f32.mrf.mxu0
    %v1174 = vadd.f32 %v1161, %v1173
    %v1175 = vpop.f32.mrf.mxu0
    %1176 = vdwg.mxu0
    %1177 = vmatpush.bf16.msra.mxu0 %v1006
    %1178 = vmatpush.bf16.msra.mxu0 %v1002
    %1179 = vmatpush.bf16.msra.mxu0 %v998
    %1180 = vmatpush.bf16.msra.mxu0 %v994
    %1181 = vmatpush.bf16.msra.mxu0 %v990
    %1182 = vmatpush.bf16.msra.mxu0 %v986
    %1183 = vmatpush.bf16.msra.mxu0 %v982
    %1184 = vmatpush.bf16.msra.mxu0 %v978
    %1185 = vmatmul.bf16.gmra.mxu0 %v295
    %v1186 = vpop.f32.mrf.mxu0
    %v1187 = vadd.f32 %v1174, %v1186
    %v1188 = vpop.f32.mrf.mxu0
    %1189 = vdwg.mxu0
    %1190 = vmatpush.bf16.msra.mxu0 %v911
    %1191 = vmatpush.bf16.msra.mxu0 %v907
    %1192 = vmatpush.bf16.msra.mxu0 %v903
    %1193 = vmatpush.bf16.msra.mxu0 %v899
    %1194 = vmatpush.bf16.msra.mxu0 %v895
    %1195 = vmatpush.bf16.msra.mxu0 %v891
    %1196 = vmatpush.bf16.msra.mxu0 %v887
    %1197 = vmatpush.bf16.msra.mxu0 %v883
    %1198 = vmatmul.bf16.gmra.mxu0 %v292
    %v1199 = vpop.f32.mrf.mxu0
    %v1200 = vadd.f32 %v469, %v1199
    %v1201 = vpop.f32.mrf.mxu0
    %1202 = vdwg.mxu0
    %1203 = vmatpush.bf16.msra.mxu0 %v943
    %1204 = vmatpush.bf16.msra.mxu0 %v939
    %1205 = vmatpush.bf16.msra.mxu0 %v935
    %1206 = vmatpush.bf16.msra.mxu0 %v931
    %1207 = vmatpush.bf16.msra.mxu0 %v927
    %1208 = vmatpush.bf16.msra.mxu0 %v923
    %1209 = vmatpush.bf16.msra.mxu0 %v919
    %1210 = vmatpush.bf16.msra.mxu0 %v915
    %1211 = vmatmul.bf16.gmra.mxu0 %v293
    %v1212 = vpop.f32.mrf.mxu0
    %v1213 = vadd.f32 %v1200, %v1212
    %v1214 = vpop.f32.mrf.mxu0
    %1215 = vdwg.mxu0
    %1216 = vmatpush.bf16.msra.mxu0 %v975
    %1217 = vmatpush.bf16.msra.mxu0 %v971
    %1218 = vmatpush.bf16.msra.mxu0 %v967
    %1219 = vmatpush.bf16.msra.mxu0 %v963
    %1220 = vmatpush.bf16.msra.mxu0 %v959
    %1221 = vmatpush.bf16.msra.mxu0 %v955
    %1222 = vmatpush.bf16.msra.mxu0 %v951
    %1223 = vmatpush.bf16.msra.mxu0 %v947
    %1224 = vmatmul.bf16.gmra.mxu0 %v294
    %v1225 = vpop.f32.mrf.mxu0
    %v1226 = vadd.f32 %v1213, %v1225
    %v1227 = vpop.f32.mrf.mxu0
    %1228 = vdwg.mxu0
    %1229 = vmatpush.bf16.msra.mxu0 %v1007
    %1230 = vmatpush.bf16.msra.mxu0 %v1003
    %1231 = vmatpush.bf16.msra.mxu0 %v999
    %1232 = vmatpush.bf16.msra.mxu0 %v995
    %1233 = vmatpush.bf16.msra.mxu0 %v991
    %1234 = vmatpush.bf16.msra.mxu0 %v987
    %1235 = vmatpush.bf16.msra.mxu0 %v983
    %1236 = vmatpush.bf16.msra.mxu0 %v979
    %1237 = vmatmul.bf16.gmra.mxu0 %v295
    %v1238 = vpop.f32.mrf.mxu0
    %v1239 = vadd.f32 %v1226, %v1238
    %v1240 = vpop.f32.mrf.mxu0
    %1241 = vdwg.mxu0
    %1242 = vmatpush.bf16.msra.mxu0 %v912
    %1243 = vmatpush.bf16.msra.mxu0 %v908
    %1244 = vmatpush.bf16.msra.mxu0 %v904
    %1245 = vmatpush.bf16.msra.mxu0 %v900
    %1246 = vmatpush.bf16.msra.mxu0 %v896
    %1247 = vmatpush.bf16.msra.mxu0 %v892
    %1248 = vmatpush.bf16.msra.mxu0 %v888
    %1249 = vmatpush.bf16.msra.mxu0 %v884
    %1250 = vmatmul.bf16.gmra.mxu0 %v292
    %v1251 = vpop.f32.mrf.mxu0
    %v1252 = vadd.f32 %v482, %v1251
    %v1253 = vpop.f32.mrf.mxu0
    %1254 = vdwg.mxu0
    %1255 = vmatpush.bf16.msra.mxu0 %v944
    %1256 = vmatpush.bf16.msra.mxu0 %v940
    %1257 = vmatpush.bf16.msra.mxu0 %v936
    %1258 = vmatpush.bf16.msra.mxu0 %v932
    %1259 = vmatpush.bf16.msra.mxu0 %v928
    %1260 = vmatpush.bf16.msra.mxu0 %v924
    %1261 = vmatpush.bf16.msra.mxu0 %v920
    %1262 = vmatpush.bf16.msra.mxu0 %v916
    %1263 = vmatmul.bf16.gmra.mxu0 %v293
    %v1264 = vpop.f32.mrf.mxu0
    %v1265 = vadd.f32 %v1252, %v1264
    %v1266 = vpop.f32.mrf.mxu0
    %1267 = vdwg.mxu0
    %1268 = vmatpush.bf16.msra.mxu0 %v976
    %1269 = vmatpush.bf16.msra.mxu0 %v972
    %1270 = vmatpush.bf16.msra.mxu0 %v968
    %1271 = vmatpush.bf16.msra.mxu0 %v964
    %1272 = vmatpush.bf16.msra.mxu0 %v960
    %1273 = vmatpush.bf16.msra.mxu0 %v956
    %1274 = vmatpush.bf16.msra.mxu0 %v952
    %1275 = vmatpush.bf16.msra.mxu0 %v948
    %1276 = vmatmul.bf16.gmra.mxu0 %v294
    %v1277 = vpop.f32.mrf.mxu0
    %v1278 = vadd.f32 %v1265, %v1277
    %v1279 = vpop.f32.mrf.mxu0
    %1280 = vdwg.mxu0
    %1281 = vmatpush.bf16.msra.mxu0 %v1008
    %1282 = vmatpush.bf16.msra.mxu0 %v1004
    %1283 = vmatpush.bf16.msra.mxu0 %v1000
    %1284 = vmatpush.bf16.msra.mxu0 %v996
    %1285 = vmatpush.bf16.msra.mxu0 %v992
    %1286 = vmatpush.bf16.msra.mxu0 %v988
    %1287 = vmatpush.bf16.msra.mxu0 %v984
    %1288 = vmatpush.bf16.msra.mxu0 %v980
    %1289 = vmatmul.bf16.gmra.mxu0 %v295
    %v1290 = vpop.f32.mrf.mxu0
    %v1291 = vadd.f32 %v1278, %v1290
    %v1292 = vpop.f32.mrf.mxu0
    %1293 = vdwg.mxu0
    %1294 = vmatpush.bf16.msra.mxu0 %v913
    %1295 = vmatpush.bf16.msra.mxu0 %v909
    %1296 = vmatpush.bf16.msra.mxu0 %v905
    %1297 = vmatpush.bf16.msra.mxu0 %v901
    %1298 = vmatpush.bf16.msra.mxu0 %v897
    %1299 = vmatpush.bf16.msra.mxu0 %v893
    %1300 = vmatpush.bf16.msra.mxu0 %v889
    %1301 = vmatpush.bf16.msra.mxu0 %v885
    %1302 = vmatmul.bf16.gmra.mxu0 %v292
    %v1303 = vpop.f32.mrf.mxu0
    %v1304 = vadd.f32 %v495, %v1303
    %v1305 = vpop.f32.mrf.mxu0
    %1306 = vdwg.mxu0
    %1307 = vmatpush.bf16.msra.mxu0 %v945
    %1308 = vmatpush.bf16.msra.mxu0 %v941
    %1309 = vmatpush.bf16.msra.mxu0 %v937
    %1310 = vmatpush.bf16.msra.mxu0 %v933
    %1311 = vmatpush.bf16.msra.mxu0 %v929
    %1312 = vmatpush.bf16.msra.mxu0 %v925
    %1313 = vmatpush.bf16.msra.mxu0 %v921
    %1314 = vmatpush.bf16.msra.mxu0 %v917
    %1315 = vmatmul.bf16.gmra.mxu0 %v293
    %v1316 = vpop.f32.mrf.mxu0
    %v1317 = vadd.f32 %v1304, %v1316
    %v1318 = vpop.f32.mrf.mxu0
    %1319 = vdwg.mxu0
    %1320 = vmatpush.bf16.msra.mxu0 %v977
    %1321 = vmatpush.bf16.msra.mxu0 %v973
    %1322 = vmatpush.bf16.msra.mxu0 %v969
    %1323 = vmatpush.bf16.msra.mxu0 %v965
    %1324 = vmatpush.bf16.msra.mxu0 %v961
    %1325 = vmatpush.bf16.msra.mxu0 %v957
    %1326 = vmatpush.bf16.msra.mxu0 %v953
    %1327 = vmatpush.bf16.msra.mxu0 %v949
    %1328 = vmatmul.bf16.gmra.mxu0 %v294
    %v1329 = vpop.f32.mrf.mxu0
    %v1330 = vadd.f32 %v1317, %v1329
    %v1331 = vpop.f32.mrf.mxu0
    %1332 = vdwg.mxu0
    %1333 = vmatpush.bf16.msra.mxu0 %v1009
    %1334 = vmatpush.bf16.msra.mxu0 %v1005
    %1335 = vmatpush.bf16.msra.mxu0 %v1001
    %1336 = vmatpush.bf16.msra.mxu0 %v997
    %1337 = vmatpush.bf16.msra.mxu0 %v993
    %1338 = vmatpush.bf16.msra.mxu0 %v989
    %1339 = vmatpush.bf16.msra.mxu0 %v985
    %1340 = vmatpush.bf16.msra.mxu0 %v981
    %1341 = vmatmul.bf16.gmra.mxu0 %v295
    %v1342 = vpop.f32.mrf.mxu0
    %v1343 = vadd.f32 %v1330, %v1342
    %v1344 = vpop.f32.mrf.mxu0
    %1345 = vdwg.mxu0
    %v1346 = vld [vmem:[#allocation11] sm:$0xf]
    %v1348 = vperm.slane %v1346, 0
    %v1349 = vperm.slane %v1346, 1
    %v1350 = vperm.slane %v1346, 2
    %v1351 = vperm.slane %v1346, 3
    %v1356 = vadd.f32 %v1187, %v1348
    %v1357 = vadd.f32 %v1239, %v1349
    %v1358 = vadd.f32 %v1291, %v1350
    %v1359 = vadd.f32 %v1343, %v1351
    %v1360 = vmax.f32 %v1356, 0.0
    %v1361 = vmax.f32 %v1357, 0.0
    %v1362 = vmax.f32 %v1358, 0.0
    %v1363 = vmax.f32 %v1359, 0.0
    %v1364 = vpack.c.bf16 %v1360, %v1360
    %v1365 = vpack.c.bf16 %v1361, %v1361
    %v1366 = vpack.c.bf16 %v1362, %v1362
    %v1367 = vpack.c.bf16 %v1363, %v1363
    %v1368 = vld [vmem:[#allocation13] sm:$0xff]
    %v1369 = vld [vmem:[#allocation13 + $0x8] sm:$0xff]
    %v1370 = vld [vmem:[#allocation13 + $0x10] sm:$0xff]
    %v1371 = vld [vmem:[#allocation13 + $0x18] sm:$0xff]
    %v1372 = vld [vmem:[#allocation13 + $0x20] sm:$0xff]
    %v1373 = vld [vmem:[#allocation13 + $0x28] sm:$0xff]
    %v1374 = vld [vmem:[#allocation13 + $0x30] sm:$0xff]
    %v1375 = vld [vmem:[#allocation13 + $0x38] sm:$0xff]
    %v1376 = vld [vmem:[#allocation13 + $0x40] sm:$0xff]
    %v1377 = vld [vmem:[#allocation13 + $0x48] sm:$0xff]
    %v1378 = vld [vmem:[#allocation13 + $0x50] sm:$0xff]
    %v1379 = vld [vmem:[#allocation13 + $0x58] sm:$0xff]
    %v1380 = vld [vmem:[#allocation13 + $0x60] sm:$0xff]
    %v1381 = vld [vmem:[#allocation13 + $0x68] sm:$0xff]
    %v1382 = vld [vmem:[#allocation13 + $0x70] sm:$0xff]
    %v1383 = vld [vmem:[#allocation13 + $0x78] sm:$0xff]
    %v1384 = vld [vmem:[#allocation13 + $0x80] sm:$0xff]
    %v1385 = vld [vmem:[#allocation13 + $0x88] sm:$0xff]
    %v1386 = vld [vmem:[#allocation13 + $0x90] sm:$0xff]
    %v1387 = vld [vmem:[#allocation13 + $0x98] sm:$0xff]
    %v1388 = vld [vmem:[#allocation13 + $0xa0] sm:$0xff]
    %v1389 = vld [vmem:[#allocation13 + $0xa8] sm:$0xff]
    %v1390 = vld [vmem:[#allocation13 + $0xb0] sm:$0xff]
    %v1391 = vld [vmem:[#allocation13 + $0xb8] sm:$0xff]
    %v1392 = vld [vmem:[#allocation13 + $0xc0] sm:$0xff]
    %v1393 = vld [vmem:[#allocation13 + $0xc8] sm:$0xff]
    %v1394 = vld [vmem:[#allocation13 + $0xd0] sm:$0xff]
    %v1395 = vld [vmem:[#allocation13 + $0xd8] sm:$0xff]
    %v1396 = vld [vmem:[#allocation13 + $0xe0] sm:$0xff]
    %v1397 = vld [vmem:[#allocation13 + $0xe8] sm:$0xff]
    %v1398 = vld [vmem:[#allocation13 + $0xf0] sm:$0xff]
    %v1399 = vld [vmem:[#allocation13 + $0xf8] sm:$0xff]
    %v1400 = vld [vmem:[#allocation13 + $0x100] sm:$0xff]
    %v1401 = vld [vmem:[#allocation13 + $0x108] sm:$0xff]
    %v1402 = vld [vmem:[#allocation13 + $0x110] sm:$0xff]
    %v1403 = vld [vmem:[#allocation13 + $0x118] sm:$0xff]
    %v1404 = vld [vmem:[#allocation13 + $0x120] sm:$0xff]
    %v1405 = vld [vmem:[#allocation13 + $0x128] sm:$0xff]
    %v1406 = vld [vmem:[#allocation13 + $0x130] sm:$0xff]
    %v1407 = vld [vmem:[#allocation13 + $0x138] sm:$0xff]
    %v1408 = vld [vmem:[#allocation13 + $0x140] sm:$0xff]
    %v1409 = vld [vmem:[#allocation13 + $0x148] sm:$0xff]
    %v1410 = vld [vmem:[#allocation13 + $0x150] sm:$0xff]
    %v1411 = vld [vmem:[#allocation13 + $0x158] sm:$0xff]
    %v1412 = vld [vmem:[#allocation13 + $0x160] sm:$0xff]
    %v1413 = vld [vmem:[#allocation13 + $0x168] sm:$0xff]
    %v1414 = vld [vmem:[#allocation13 + $0x170] sm:$0xff]
    %v1415 = vld [vmem:[#allocation13 + $0x178] sm:$0xff]
    %v1416 = vld [vmem:[#allocation13 + $0x180] sm:$0xff]
    %v1417 = vld [vmem:[#allocation13 + $0x188] sm:$0xff]
    %v1418 = vld [vmem:[#allocation13 + $0x190] sm:$0xff]
    %v1419 = vld [vmem:[#allocation13 + $0x198] sm:$0xff]
    %v1420 = vld [vmem:[#allocation13 + $0x1a0] sm:$0xff]
    %v1421 = vld [vmem:[#allocation13 + $0x1a8] sm:$0xff]
    %v1422 = vld [vmem:[#allocation13 + $0x1b0] sm:$0xff]
    %v1423 = vld [vmem:[#allocation13 + $0x1b8] sm:$0xff]
    %v1424 = vld [vmem:[#allocation13 + $0x1c0] sm:$0xff]
    %v1425 = vld [vmem:[#allocation13 + $0x1c8] sm:$0xff]
    %v1426 = vld [vmem:[#allocation13 + $0x1d0] sm:$0xff]
    %v1427 = vld [vmem:[#allocation13 + $0x1d8] sm:$0xff]
    %v1428 = vld [vmem:[#allocation13 + $0x1e0] sm:$0xff]
    %v1429 = vld [vmem:[#allocation13 + $0x1e8] sm:$0xff]
    %v1430 = vld [vmem:[#allocation13 + $0x1f0] sm:$0xff]
    %v1431 = vld [vmem:[#allocation13 + $0x1f8] sm:$0xff]
    %v1432 = vld [vmem:[#allocation13 + $0x200] sm:$0xff]
    %v1433 = vld [vmem:[#allocation13 + $0x208] sm:$0xff]
    %v1434 = vld [vmem:[#allocation13 + $0x210] sm:$0xff]
    %v1435 = vld [vmem:[#allocation13 + $0x218] sm:$0xff]
    %v1436 = vld [vmem:[#allocation13 + $0x220] sm:$0xff]
    %v1437 = vld [vmem:[#allocation13 + $0x228] sm:$0xff]
    %v1438 = vld [vmem:[#allocation13 + $0x230] sm:$0xff]
    %v1439 = vld [vmem:[#allocation13 + $0x238] sm:$0xff]
    %v1440 = vld [vmem:[#allocation13 + $0x240] sm:$0xff]
    %v1441 = vld [vmem:[#allocation13 + $0x248] sm:$0xff]
    %v1442 = vld [vmem:[#allocation13 + $0x250] sm:$0xff]
    %v1443 = vld [vmem:[#allocation13 + $0x258] sm:$0xff]
    %v1444 = vld [vmem:[#allocation13 + $0x260] sm:$0xff]
    %v1445 = vld [vmem:[#allocation13 + $0x268] sm:$0xff]
    %v1446 = vld [vmem:[#allocation13 + $0x270] sm:$0xff]
    %v1447 = vld [vmem:[#allocation13 + $0x278] sm:$0xff]
    %v1448 = vld [vmem:[#allocation13 + $0x280] sm:$0xff]
    %v1449 = vld [vmem:[#allocation13 + $0x288] sm:$0xff]
    %v1450 = vld [vmem:[#allocation13 + $0x290] sm:$0xff]
    %v1451 = vld [vmem:[#allocation13 + $0x298] sm:$0xff]
    %v1452 = vld [vmem:[#allocation13 + $0x2a0] sm:$0xff]
    %v1453 = vld [vmem:[#allocation13 + $0x2a8] sm:$0xff]
    %v1454 = vld [vmem:[#allocation13 + $0x2b0] sm:$0xff]
    %v1455 = vld [vmem:[#allocation13 + $0x2b8] sm:$0xff]
    %v1456 = vld [vmem:[#allocation13 + $0x2c0] sm:$0xff]
    %v1457 = vld [vmem:[#allocation13 + $0x2c8] sm:$0xff]
    %v1458 = vld [vmem:[#allocation13 + $0x2d0] sm:$0xff]
    %v1459 = vld [vmem:[#allocation13 + $0x2d8] sm:$0xff]
    %v1460 = vld [vmem:[#allocation13 + $0x2e0] sm:$0xff]
    %v1461 = vld [vmem:[#allocation13 + $0x2e8] sm:$0xff]
    %v1462 = vld [vmem:[#allocation13 + $0x2f0] sm:$0xff]
    %v1463 = vld [vmem:[#allocation13 + $0x2f8] sm:$0xff]
    %v1464 = vld [vmem:[#allocation13 + $0x300] sm:$0xff]
    %v1465 = vld [vmem:[#allocation13 + $0x308] sm:$0xff]
    %v1466 = vld [vmem:[#allocation13 + $0x310] sm:$0xff]
    %v1467 = vld [vmem:[#allocation13 + $0x318] sm:$0xff]
    %v1468 = vld [vmem:[#allocation13 + $0x320] sm:$0xff]
    %v1469 = vld [vmem:[#allocation13 + $0x328] sm:$0xff]
    %v1470 = vld [vmem:[#allocation13 + $0x330] sm:$0xff]
    %v1471 = vld [vmem:[#allocation13 + $0x338] sm:$0xff]
    %v1472 = vld [vmem:[#allocation13 + $0x340] sm:$0xff]
    %v1473 = vld [vmem:[#allocation13 + $0x348] sm:$0xff]
    %v1474 = vld [vmem:[#allocation13 + $0x350] sm:$0xff]
    %v1475 = vld [vmem:[#allocation13 + $0x358] sm:$0xff]
    %v1476 = vld [vmem:[#allocation13 + $0x360] sm:$0xff]
    %v1477 = vld [vmem:[#allocation13 + $0x368] sm:$0xff]
    %v1478 = vld [vmem:[#allocation13 + $0x370] sm:$0xff]
    %v1479 = vld [vmem:[#allocation13 + $0x378] sm:$0xff]
    %v1480 = vld [vmem:[#allocation13 + $0x380] sm:$0xff]
    %v1481 = vld [vmem:[#allocation13 + $0x388] sm:$0xff]
    %v1482 = vld [vmem:[#allocation13 + $0x390] sm:$0xff]
    %v1483 = vld [vmem:[#allocation13 + $0x398] sm:$0xff]
    %v1484 = vld [vmem:[#allocation13 + $0x3a0] sm:$0xff]
    %v1485 = vld [vmem:[#allocation13 + $0x3a8] sm:$0xff]
    %v1486 = vld [vmem:[#allocation13 + $0x3b0] sm:$0xff]
    %v1487 = vld [vmem:[#allocation13 + $0x3b8] sm:$0xff]
    %v1488 = vld [vmem:[#allocation13 + $0x3c0] sm:$0xff]
    %v1489 = vld [vmem:[#allocation13 + $0x3c8] sm:$0xff]
    %v1490 = vld [vmem:[#allocation13 + $0x3d0] sm:$0xff]
    %v1491 = vld [vmem:[#allocation13 + $0x3d8] sm:$0xff]
    %v1492 = vld [vmem:[#allocation13 + $0x3e0] sm:$0xff]
    %v1493 = vld [vmem:[#allocation13 + $0x3e8] sm:$0xff]
    %v1494 = vld [vmem:[#allocation13 + $0x3f0] sm:$0xff]
    %v1495 = vld [vmem:[#allocation13 + $0x3f8] sm:$0xff]
    %v1496 = vld [vmem:[#allocation14] sm:$0xf]
    %v1498 = vperm.slane %v1496, 0
    %v1499 = vperm.slane %v1496, 1
    %v1500 = vperm.slane %v1496, 2
    %v1501 = vperm.slane %v1496, 3
    %v1634 = vunpack.c.l.b16 %v1368
    %v1635 = vunpack.c.h.b16 %v1368
    %v1636 = vunpack.c.l.b16 %v1369
    %v1637 = vunpack.c.h.b16 %v1369
    %v1638 = vunpack.c.l.b16 %v1370
    %v1639 = vunpack.c.h.b16 %v1370
    %v1640 = vunpack.c.l.b16 %v1371
    %v1641 = vunpack.c.h.b16 %v1371
    %v1642 = vunpack.c.l.b16 %v1372
    %v1643 = vunpack.c.h.b16 %v1372
    %v1644 = vunpack.c.l.b16 %v1373
    %v1645 = vunpack.c.h.b16 %v1373
    %v1646 = vunpack.c.l.b16 %v1374
    %v1647 = vunpack.c.h.b16 %v1374
    %v1648 = vunpack.c.l.b16 %v1375
    %v1649 = vunpack.c.h.b16 %v1375
    %v1650 = vunpack.c.l.b16 %v1376
    %v1651 = vunpack.c.h.b16 %v1376
    %v1652 = vunpack.c.l.b16 %v1377
    %v1653 = vunpack.c.h.b16 %v1377
    %v1654 = vunpack.c.l.b16 %v1378
    %v1655 = vunpack.c.h.b16 %v1378
    %v1656 = vunpack.c.l.b16 %v1379
    %v1657 = vunpack.c.h.b16 %v1379
    %v1658 = vunpack.c.l.b16 %v1380
    %v1659 = vunpack.c.h.b16 %v1380
    %v1660 = vunpack.c.l.b16 %v1381
    %v1661 = vunpack.c.h.b16 %v1381
    %v1662 = vunpack.c.l.b16 %v1382
    %v1663 = vunpack.c.h.b16 %v1382
    %v1664 = vunpack.c.l.b16 %v1383
    %v1665 = vunpack.c.h.b16 %v1383
    %v1666 = vunpack.c.l.b16 %v1384
    %v1667 = vunpack.c.h.b16 %v1384
    %v1668 = vunpack.c.l.b16 %v1385
    %v1669 = vunpack.c.h.b16 %v1385
    %v1670 = vunpack.c.l.b16 %v1386
    %v1671 = vunpack.c.h.b16 %v1386
    %v1672 = vunpack.c.l.b16 %v1387
    %v1673 = vunpack.c.h.b16 %v1387
    %v1674 = vunpack.c.l.b16 %v1388
    %v1675 = vunpack.c.h.b16 %v1388
    %v1676 = vunpack.c.l.b16 %v1389
    %v1677 = vunpack.c.h.b16 %v1389
    %v1678 = vunpack.c.l.b16 %v1390
    %v1679 = vunpack.c.h.b16 %v1390
    %v1680 = vunpack.c.l.b16 %v1391
    %v1681 = vunpack.c.h.b16 %v1391
    %v1682 = vunpack.c.l.b16 %v1392
    %v1683 = vunpack.c.h.b16 %v1392
    %v1684 = vunpack.c.l.b16 %v1393
    %v1685 = vunpack.c.h.b16 %v1393
    %v1686 = vunpack.c.l.b16 %v1394
    %v1687 = vunpack.c.h.b16 %v1394
    %v1688 = vunpack.c.l.b16 %v1395
    %v1689 = vunpack.c.h.b16 %v1395
    %v1690 = vunpack.c.l.b16 %v1396
    %v1691 = vunpack.c.h.b16 %v1396
    %v1692 = vunpack.c.l.b16 %v1397
    %v1693 = vunpack.c.h.b16 %v1397
    %v1694 = vunpack.c.l.b16 %v1398
    %v1695 = vunpack.c.h.b16 %v1398
    %v1696 = vunpack.c.l.b16 %v1399
    %v1697 = vunpack.c.h.b16 %v1399
    %v1698 = vunpack.c.l.b16 %v1400
    %v1699 = vunpack.c.h.b16 %v1400
    %v1700 = vunpack.c.l.b16 %v1401
    %v1701 = vunpack.c.h.b16 %v1401
    %v1702 = vunpack.c.l.b16 %v1402
    %v1703 = vunpack.c.h.b16 %v1402
    %v1704 = vunpack.c.l.b16 %v1403
    %v1705 = vunpack.c.h.b16 %v1403
    %v1706 = vunpack.c.l.b16 %v1404
    %v1707 = vunpack.c.h.b16 %v1404
    %v1708 = vunpack.c.l.b16 %v1405
    %v1709 = vunpack.c.h.b16 %v1405
    %v1710 = vunpack.c.l.b16 %v1406
    %v1711 = vunpack.c.h.b16 %v1406
    %v1712 = vunpack.c.l.b16 %v1407
    %v1713 = vunpack.c.h.b16 %v1407
    %v1714 = vunpack.c.l.b16 %v1408
    %v1715 = vunpack.c.h.b16 %v1408
    %v1716 = vunpack.c.l.b16 %v1409
    %v1717 = vunpack.c.h.b16 %v1409
    %v1718 = vunpack.c.l.b16 %v1410
    %v1719 = vunpack.c.h.b16 %v1410
    %v1720 = vunpack.c.l.b16 %v1411
    %v1721 = vunpack.c.h.b16 %v1411
    %v1722 = vunpack.c.l.b16 %v1412
    %v1723 = vunpack.c.h.b16 %v1412
    %v1724 = vunpack.c.l.b16 %v1413
    %v1725 = vunpack.c.h.b16 %v1413
    %v1726 = vunpack.c.l.b16 %v1414
    %v1727 = vunpack.c.h.b16 %v1414
    %v1728 = vunpack.c.l.b16 %v1415
    %v1729 = vunpack.c.h.b16 %v1415
    %v1730 = vunpack.c.l.b16 %v1416
    %v1731 = vunpack.c.h.b16 %v1416
    %v1732 = vunpack.c.l.b16 %v1417
    %v1733 = vunpack.c.h.b16 %v1417
    %v1734 = vunpack.c.l.b16 %v1418
    %v1735 = vunpack.c.h.b16 %v1418
    %v1736 = vunpack.c.l.b16 %v1419
    %v1737 = vunpack.c.h.b16 %v1419
    %v1738 = vunpack.c.l.b16 %v1420
    %v1739 = vunpack.c.h.b16 %v1420
    %v1740 = vunpack.c.l.b16 %v1421
    %v1741 = vunpack.c.h.b16 %v1421
    %v1742 = vunpack.c.l.b16 %v1422
    %v1743 = vunpack.c.h.b16 %v1422
    %v1744 = vunpack.c.l.b16 %v1423
    %v1745 = vunpack.c.h.b16 %v1423
    %v1746 = vunpack.c.l.b16 %v1424
    %v1747 = vunpack.c.h.b16 %v1424
    %v1748 = vunpack.c.l.b16 %v1425
    %v1749 = vunpack.c.h.b16 %v1425
    %v1750 = vunpack.c.l.b16 %v1426
    %v1751 = vunpack.c.h.b16 %v1426
    %v1752 = vunpack.c.l.b16 %v1427
    %v1753 = vunpack.c.h.b16 %v1427
    %v1754 = vunpack.c.l.b16 %v1428
    %v1755 = vunpack.c.h.b16 %v1428
    %v1756 = vunpack.c.l.b16 %v1429
    %v1757 = vunpack.c.h.b16 %v1429
    %v1758 = vunpack.c.l.b16 %v1430
    %v1759 = vunpack.c.h.b16 %v1430
    %v1760 = vunpack.c.l.b16 %v1431
    %v1761 = vunpack.c.h.b16 %v1431
    %v1762 = vunpack.c.l.b16 %v1432
    %v1763 = vunpack.c.h.b16 %v1432
    %v1764 = vunpack.c.l.b16 %v1433
    %v1765 = vunpack.c.h.b16 %v1433
    %v1766 = vunpack.c.l.b16 %v1434
    %v1767 = vunpack.c.h.b16 %v1434
    %v1768 = vunpack.c.l.b16 %v1435
    %v1769 = vunpack.c.h.b16 %v1435
    %v1770 = vunpack.c.l.b16 %v1436
    %v1771 = vunpack.c.h.b16 %v1436
    %v1772 = vunpack.c.l.b16 %v1437
    %v1773 = vunpack.c.h.b16 %v1437
    %v1774 = vunpack.c.l.b16 %v1438
    %v1775 = vunpack.c.h.b16 %v1438
    %v1776 = vunpack.c.l.b16 %v1439
    %v1777 = vunpack.c.h.b16 %v1439
    %v1778 = vunpack.c.l.b16 %v1440
    %v1779 = vunpack.c.h.b16 %v1440
    %v1780 = vunpack.c.l.b16 %v1441
    %v1781 = vunpack.c.h.b16 %v1441
    %v1782 = vunpack.c.l.b16 %v1442
    %v1783 = vunpack.c.h.b16 %v1442
    %v1784 = vunpack.c.l.b16 %v1443
    %v1785 = vunpack.c.h.b16 %v1443
    %v1786 = vunpack.c.l.b16 %v1444
    %v1787 = vunpack.c.h.b16 %v1444
    %v1788 = vunpack.c.l.b16 %v1445
    %v1789 = vunpack.c.h.b16 %v1445
    %v1790 = vunpack.c.l.b16 %v1446
    %v1791 = vunpack.c.h.b16 %v1446
    %v1792 = vunpack.c.l.b16 %v1447
    %v1793 = vunpack.c.h.b16 %v1447
    %v1794 = vunpack.c.l.b16 %v1448
    %v1795 = vunpack.c.h.b16 %v1448
    %v1796 = vunpack.c.l.b16 %v1449
    %v1797 = vunpack.c.h.b16 %v1449
    %v1798 = vunpack.c.l.b16 %v1450
    %v1799 = vunpack.c.h.b16 %v1450
    %v1800 = vunpack.c.l.b16 %v1451
    %v1801 = vunpack.c.h.b16 %v1451
    %v1802 = vunpack.c.l.b16 %v1452
    %v1803 = vunpack.c.h.b16 %v1452
    %v1804 = vunpack.c.l.b16 %v1453
    %v1805 = vunpack.c.h.b16 %v1453
    %v1806 = vunpack.c.l.b16 %v1454
    %v1807 = vunpack.c.h.b16 %v1454
    %v1808 = vunpack.c.l.b16 %v1455
    %v1809 = vunpack.c.h.b16 %v1455
    %v1810 = vunpack.c.l.b16 %v1456
    %v1811 = vunpack.c.h.b16 %v1456
    %v1812 = vunpack.c.l.b16 %v1457
    %v1813 = vunpack.c.h.b16 %v1457
    %v1814 = vunpack.c.l.b16 %v1458
    %v1815 = vunpack.c.h.b16 %v1458
    %v1816 = vunpack.c.l.b16 %v1459
    %v1817 = vunpack.c.h.b16 %v1459
    %v1818 = vunpack.c.l.b16 %v1460
    %v1819 = vunpack.c.h.b16 %v1460
    %v1820 = vunpack.c.l.b16 %v1461
    %v1821 = vunpack.c.h.b16 %v1461
    %v1822 = vunpack.c.l.b16 %v1462
    %v1823 = vunpack.c.h.b16 %v1462
    %v1824 = vunpack.c.l.b16 %v1463
    %v1825 = vunpack.c.h.b16 %v1463
    %v1826 = vunpack.c.l.b16 %v1464
    %v1827 = vunpack.c.h.b16 %v1464
    %v1828 = vunpack.c.l.b16 %v1465
    %v1829 = vunpack.c.h.b16 %v1465
    %v1830 = vunpack.c.l.b16 %v1466
    %v1831 = vunpack.c.h.b16 %v1466
    %v1832 = vunpack.c.l.b16 %v1467
    %v1833 = vunpack.c.h.b16 %v1467
    %v1834 = vunpack.c.l.b16 %v1468
    %v1835 = vunpack.c.h.b16 %v1468
    %v1836 = vunpack.c.l.b16 %v1469
    %v1837 = vunpack.c.h.b16 %v1469
    %v1838 = vunpack.c.l.b16 %v1470
    %v1839 = vunpack.c.h.b16 %v1470
    %v1840 = vunpack.c.l.b16 %v1471
    %v1841 = vunpack.c.h.b16 %v1471
    %v1842 = vunpack.c.l.b16 %v1472
    %v1843 = vunpack.c.h.b16 %v1472
    %v1844 = vunpack.c.l.b16 %v1473
    %v1845 = vunpack.c.h.b16 %v1473
    %v1846 = vunpack.c.l.b16 %v1474
    %v1847 = vunpack.c.h.b16 %v1474
    %v1848 = vunpack.c.l.b16 %v1475
    %v1849 = vunpack.c.h.b16 %v1475
    %v1850 = vunpack.c.l.b16 %v1476
    %v1851 = vunpack.c.h.b16 %v1476
    %v1852 = vunpack.c.l.b16 %v1477
    %v1853 = vunpack.c.h.b16 %v1477
    %v1854 = vunpack.c.l.b16 %v1478
    %v1855 = vunpack.c.h.b16 %v1478
    %v1856 = vunpack.c.l.b16 %v1479
    %v1857 = vunpack.c.h.b16 %v1479
    %v1858 = vunpack.c.l.b16 %v1480
    %v1859 = vunpack.c.h.b16 %v1480
    %v1860 = vunpack.c.l.b16 %v1481
    %v1861 = vunpack.c.h.b16 %v1481
    %v1862 = vunpack.c.l.b16 %v1482
    %v1863 = vunpack.c.h.b16 %v1482
    %v1864 = vunpack.c.l.b16 %v1483
    %v1865 = vunpack.c.h.b16 %v1483
    %v1866 = vunpack.c.l.b16 %v1484
    %v1867 = vunpack.c.h.b16 %v1484
    %v1868 = vunpack.c.l.b16 %v1485
    %v1869 = vunpack.c.h.b16 %v1485
    %v1870 = vunpack.c.l.b16 %v1486
    %v1871 = vunpack.c.h.b16 %v1486
    %v1872 = vunpack.c.l.b16 %v1487
    %v1873 = vunpack.c.h.b16 %v1487
    %v1874 = vunpack.c.l.b16 %v1488
    %v1875 = vunpack.c.h.b16 %v1488
    %v1876 = vunpack.c.l.b16 %v1489
    %v1877 = vunpack.c.h.b16 %v1489
    %v1878 = vunpack.c.l.b16 %v1490
    %v1879 = vunpack.c.h.b16 %v1490
    %v1880 = vunpack.c.l.b16 %v1491
    %v1881 = vunpack.c.h.b16 %v1491
    %v1882 = vunpack.c.l.b16 %v1492
    %v1883 = vunpack.c.h.b16 %v1492
    %v1884 = vunpack.c.l.b16 %v1493
    %v1885 = vunpack.c.h.b16 %v1493
    %v1886 = vunpack.c.l.b16 %v1494
    %v1887 = vunpack.c.h.b16 %v1494
    %v1888 = vunpack.c.l.b16 %v1495
    %v1889 = vunpack.c.h.b16 %v1495
    %v1890 = vpack.c.b16 %v1638, %v1634
    %v1891 = vpack.c.b16 %v1639, %v1635
    %v1892 = vpack.c.b16 %v1640, %v1636
    %v1893 = vpack.c.b16 %v1641, %v1637
    %v1894 = vpack.c.b16 %v1646, %v1642
    %v1895 = vpack.c.b16 %v1647, %v1643
    %v1896 = vpack.c.b16 %v1648, %v1644
    %v1897 = vpack.c.b16 %v1649, %v1645
    %v1898 = vpack.c.b16 %v1654, %v1650
    %v1899 = vpack.c.b16 %v1655, %v1651
    %v1900 = vpack.c.b16 %v1656, %v1652
    %v1901 = vpack.c.b16 %v1657, %v1653
    %v1902 = vpack.c.b16 %v1662, %v1658
    %v1903 = vpack.c.b16 %v1663, %v1659
    %v1904 = vpack.c.b16 %v1664, %v1660
    %v1905 = vpack.c.b16 %v1665, %v1661
    %v1906 = vpack.c.b16 %v1670, %v1666
    %v1907 = vpack.c.b16 %v1671, %v1667
    %v1908 = vpack.c.b16 %v1672, %v1668
    %v1909 = vpack.c.b16 %v1673, %v1669
    %v1910 = vpack.c.b16 %v1678, %v1674
    %v1911 = vpack.c.b16 %v1679, %v1675
    %v1912 = vpack.c.b16 %v1680, %v1676
    %v1913 = vpack.c.b16 %v1681, %v1677
    %v1914 = vpack.c.b16 %v1686, %v1682
    %v1915 = vpack.c.b16 %v1687, %v1683
    %v1916 = vpack.c.b16 %v1688, %v1684
    %v1917 = vpack.c.b16 %v1689, %v1685
    %v1918 = vpack.c.b16 %v1694, %v1690
    %v1919 = vpack.c.b16 %v1695, %v1691
    %v1920 = vpack.c.b16 %v1696, %v1692
    %v1921 = vpack.c.b16 %v1697, %v1693
    %v1922 = vpack.c.b16 %v1702, %v1698
    %v1923 = vpack.c.b16 %v1703, %v1699
    %v1924 = vpack.c.b16 %v1704, %v1700
    %v1925 = vpack.c.b16 %v1705, %v1701
    %v1926 = vpack.c.b16 %v1710, %v1706
    %v1927 = vpack.c.b16 %v1711, %v1707
    %v1928 = vpack.c.b16 %v1712, %v1708
    %v1929 = vpack.c.b16 %v1713, %v1709
    %v1930 = vpack.c.b16 %v1718, %v1714
    %v1931 = vpack.c.b16 %v1719, %v1715
    %v1932 = vpack.c.b16 %v1720, %v1716
    %v1933 = vpack.c.b16 %v1721, %v1717
    %v1934 = vpack.c.b16 %v1726, %v1722
    %v1935 = vpack.c.b16 %v1727, %v1723
    %v1936 = vpack.c.b16 %v1728, %v1724
    %v1937 = vpack.c.b16 %v1729, %v1725
    %v1938 = vpack.c.b16 %v1734, %v1730
    %v1939 = vpack.c.b16 %v1735, %v1731
    %v1940 = vpack.c.b16 %v1736, %v1732
    %v1941 = vpack.c.b16 %v1737, %v1733
    %v1942 = vpack.c.b16 %v1742, %v1738
    %v1943 = vpack.c.b16 %v1743, %v1739
    %v1944 = vpack.c.b16 %v1744, %v1740
    %v1945 = vpack.c.b16 %v1745, %v1741
    %v1946 = vpack.c.b16 %v1750, %v1746
    %v1947 = vpack.c.b16 %v1751, %v1747
    %v1948 = vpack.c.b16 %v1752, %v1748
    %v1949 = vpack.c.b16 %v1753, %v1749
    %v1950 = vpack.c.b16 %v1758, %v1754
    %v1951 = vpack.c.b16 %v1759, %v1755
    %v1952 = vpack.c.b16 %v1760, %v1756
    %v1953 = vpack.c.b16 %v1761, %v1757
    %v1954 = vpack.c.b16 %v1766, %v1762
    %v1955 = vpack.c.b16 %v1767, %v1763
    %v1956 = vpack.c.b16 %v1768, %v1764
    %v1957 = vpack.c.b16 %v1769, %v1765
    %v1958 = vpack.c.b16 %v1774, %v1770
    %v1959 = vpack.c.b16 %v1775, %v1771
    %v1960 = vpack.c.b16 %v1776, %v1772
    %v1961 = vpack.c.b16 %v1777, %v1773
    %v1962 = vpack.c.b16 %v1782, %v1778
    %v1963 = vpack.c.b16 %v1783, %v1779
    %v1964 = vpack.c.b16 %v1784, %v1780
    %v1965 = vpack.c.b16 %v1785, %v1781
    %v1966 = vpack.c.b16 %v1790, %v1786
    %v1967 = vpack.c.b16 %v1791, %v1787
    %v1968 = vpack.c.b16 %v1792, %v1788
    %v1969 = vpack.c.b16 %v1793, %v1789
    %v1970 = vpack.c.b16 %v1798, %v1794
    %v1971 = vpack.c.b16 %v1799, %v1795
    %v1972 = vpack.c.b16 %v1800, %v1796
    %v1973 = vpack.c.b16 %v1801, %v1797
    %v1974 = vpack.c.b16 %v1806, %v1802
    %v1975 = vpack.c.b16 %v1807, %v1803
    %v1976 = vpack.c.b16 %v1808, %v1804
    %v1977 = vpack.c.b16 %v1809, %v1805
    %v1978 = vpack.c.b16 %v1814, %v1810
    %v1979 = vpack.c.b16 %v1815, %v1811
    %v1980 = vpack.c.b16 %v1816, %v1812
    %v1981 = vpack.c.b16 %v1817, %v1813
    %v1982 = vpack.c.b16 %v1822, %v1818
    %v1983 = vpack.c.b16 %v1823, %v1819
    %v1984 = vpack.c.b16 %v1824, %v1820
    %v1985 = vpack.c.b16 %v1825, %v1821
    %v1986 = vpack.c.b16 %v1830, %v1826
    %v1987 = vpack.c.b16 %v1831, %v1827
    %v1988 = vpack.c.b16 %v1832, %v1828
    %v1989 = vpack.c.b16 %v1833, %v1829
    %v1990 = vpack.c.b16 %v1838, %v1834
    %v1991 = vpack.c.b16 %v1839, %v1835
    %v1992 = vpack.c.b16 %v1840, %v1836
    %v1993 = vpack.c.b16 %v1841, %v1837
    %v1994 = vpack.c.b16 %v1846, %v1842
    %v1995 = vpack.c.b16 %v1847, %v1843
    %v1996 = vpack.c.b16 %v1848, %v1844
    %v1997 = vpack.c.b16 %v1849, %v1845
    %v1998 = vpack.c.b16 %v1854, %v1850
    %v1999 = vpack.c.b16 %v1855, %v1851
    %v2000 = vpack.c.b16 %v1856, %v1852
    %v2001 = vpack.c.b16 %v1857, %v1853
    %v2002 = vpack.c.b16 %v1862, %v1858
    %v2003 = vpack.c.b16 %v1863, %v1859
    %v2004 = vpack.c.b16 %v1864, %v1860
    %v2005 = vpack.c.b16 %v1865, %v1861
    %v2006 = vpack.c.b16 %v1870, %v1866
    %v2007 = vpack.c.b16 %v1871, %v1867
    %v2008 = vpack.c.b16 %v1872, %v1868
    %v2009 = vpack.c.b16 %v1873, %v1869
    %v2010 = vpack.c.b16 %v1878, %v1874
    %v2011 = vpack.c.b16 %v1879, %v1875
    %v2012 = vpack.c.b16 %v1880, %v1876
    %v2013 = vpack.c.b16 %v1881, %v1877
    %v2014 = vpack.c.b16 %v1886, %v1882
    %v2015 = vpack.c.b16 %v1887, %v1883
    %v2016 = vpack.c.b16 %v1888, %v1884
    %v2017 = vpack.c.b16 %v1889, %v1885
    %2146 = vmatpush.bf16.msra.mxu0 %v1918
    %2147 = vmatpush.bf16.msra.mxu0 %v1914
    %2148 = vmatpush.bf16.msra.mxu0 %v1910
    %2149 = vmatpush.bf16.msra.mxu0 %v1906
    %2150 = vmatpush.bf16.msra.mxu0 %v1902
    %2151 = vmatpush.bf16.msra.mxu0 %v1898
    %2152 = vmatpush.bf16.msra.mxu0 %v1894
    %2153 = vmatpush.bf16.msra.mxu0 %v1890
    %2154 = vmatmul.bf16.gmra.mxu0 %v1364
    %v2155 = vpop.f32.mrf.mxu0
    %v2156 = vadd.f32 %v1498, %v2155
    %v2157 = vpop.f32.mrf.mxu0
    %2158 = vdwg.mxu0
    %2159 = vmatpush.bf16.msra.mxu0 %v1950
    %2160 = vmatpush.bf16.msra.mxu0 %v1946
    %2161 = vmatpush.bf16.msra.mxu0 %v1942
    %2162 = vmatpush.bf16.msra.mxu0 %v1938
    %2163 = vmatpush.bf16.msra.mxu0 %v1934
    %2164 = vmatpush.bf16.msra.mxu0 %v1930
    %2165 = vmatpush.bf16.msra.mxu0 %v1926
    %2166 = vmatpush.bf16.msra.mxu0 %v1922
    %2167 = vmatmul.bf16.gmra.mxu0 %v1365
    %v2168 = vpop.f32.mrf.mxu0
    %v2169 = vadd.f32 %v2156, %v2168
    %v2170 = vpop.f32.mrf.mxu0
    %2171 = vdwg.mxu0
    %2172 = vmatpush.bf16.msra.mxu0 %v1982
    %2173 = vmatpush.bf16.msra.mxu0 %v1978
    %2174 = vmatpush.bf16.msra.mxu0 %v1974
    %2175 = vmatpush.bf16.msra.mxu0 %v1970
    %2176 = vmatpush.bf16.msra.mxu0 %v1966
    %2177 = vmatpush.bf16.msra.mxu0 %v1962
    %2178 = vmatpush.bf16.msra.mxu0 %v1958
    %2179 = vmatpush.bf16.msra.mxu0 %v1954
    %2180 = vmatmul.bf16.gmra.mxu0 %v1366
    %v2181 = vpop.f32.mrf.mxu0
    %v2182 = vadd.f32 %v2169, %v2181
    %v2183 = vpop.f32.mrf.mxu0
    %2184 = vdwg.mxu0
    %2185 = vmatpush.bf16.msra.mxu0 %v2014
    %2186 = vmatpush.bf16.msra.mxu0 %v2010
    %2187 = vmatpush.bf16.msra.mxu0 %v2006
    %2188 = vmatpush.bf16.msra.mxu0 %v2002
    %2189 = vmatpush.bf16.msra.mxu0 %v1998
    %2190 = vmatpush.bf16.msra.mxu0 %v1994
    %2191 = vmatpush.bf16.msra.mxu0 %v1990
    %2192 = vmatpush.bf16.msra.mxu0 %v1986
    %2193 = vmatmul.bf16.gmra.mxu0 %v1367
    %v2194 = vpop.f32.mrf.mxu0
    %v2195 = vadd.f32 %v2182, %v2194
    %v2196 = vpop.f32.mrf.mxu0
    %2197 = vdwg.mxu0
    %2198 = vmatpush.bf16.msra.mxu0 %v1919
    %2199 = vmatpush.bf16.msra.mxu0 %v1915
    %2200 = vmatpush.bf16.msra.mxu0 %v1911
    %2201 = vmatpush.bf16.msra.mxu0 %v1907
    %2202 = vmatpush.bf16.msra.mxu0 %v1903
    %2203 = vmatpush.bf16.msra.mxu0 %v1899
    %2204 = vmatpush.bf16.msra.mxu0 %v1895
    %2205 = vmatpush.bf16.msra.mxu0 %v1891
    %2206 = vmatmul.bf16.gmra.mxu0 %v1364
    %v2207 = vpop.f32.mrf.mxu0
    %v2208 = vadd.f32 %v1499, %v2207
    %v2209 = vpop.f32.mrf.mxu0
    %2210 = vdwg.mxu0
    %2211 = vmatpush.bf16.msra.mxu0 %v1951
    %2212 = vmatpush.bf16.msra.mxu0 %v1947
    %2213 = vmatpush.bf16.msra.mxu0 %v1943
    %2214 = vmatpush.bf16.msra.mxu0 %v1939
    %2215 = vmatpush.bf16.msra.mxu0 %v1935
    %2216 = vmatpush.bf16.msra.mxu0 %v1931
    %2217 = vmatpush.bf16.msra.mxu0 %v1927
    %2218 = vmatpush.bf16.msra.mxu0 %v1923
    %2219 = vmatmul.bf16.gmra.mxu0 %v1365
    %v2220 = vpop.f32.mrf.mxu0
    %v2221 = vadd.f32 %v2208, %v2220
    %v2222 = vpop.f32.mrf.mxu0
    %2223 = vdwg.mxu0
    %2224 = vmatpush.bf16.msra.mxu0 %v1983
    %2225 = vmatpush.bf16.msra.mxu0 %v1979
    %2226 = vmatpush.bf16.msra.mxu0 %v1975
    %2227 = vmatpush.bf16.msra.mxu0 %v1971
    %2228 = vmatpush.bf16.msra.mxu0 %v1967
    %2229 = vmatpush.bf16.msra.mxu0 %v1963
    %2230 = vmatpush.bf16.msra.mxu0 %v1959
    %2231 = vmatpush.bf16.msra.mxu0 %v1955
    %2232 = vmatmul.bf16.gmra.mxu0 %v1366
    %v2233 = vpop.f32.mrf.mxu0
    %v2234 = vadd.f32 %v2221, %v2233
    %v2235 = vpop.f32.mrf.mxu0
    %2236 = vdwg.mxu0
    %2237 = vmatpush.bf16.msra.mxu0 %v2015
    %2238 = vmatpush.bf16.msra.mxu0 %v2011
    %2239 = vmatpush.bf16.msra.mxu0 %v2007
    %2240 = vmatpush.bf16.msra.mxu0 %v2003
    %2241 = vmatpush.bf16.msra.mxu0 %v1999
    %2242 = vmatpush.bf16.msra.mxu0 %v1995
    %2243 = vmatpush.bf16.msra.mxu0 %v1991
    %2244 = vmatpush.bf16.msra.mxu0 %v1987
    %2245 = vmatmul.bf16.gmra.mxu0 %v1367
    %v2246 = vpop.f32.mrf.mxu0
    %v2247 = vadd.f32 %v2234, %v2246
    %v2248 = vpop.f32.mrf.mxu0
    %2249 = vdwg.mxu0
    %2250 = vmatpush.bf16.msra.mxu0 %v1920
    %2251 = vmatpush.bf16.msra.mxu0 %v1916
    %2252 = vmatpush.bf16.msra.mxu0 %v1912
    %2253 = vmatpush.bf16.msra.mxu0 %v1908
    %2254 = vmatpush.bf16.msra.mxu0 %v1904
    %2255 = vmatpush.bf16.msra.mxu0 %v1900
    %2256 = vmatpush.bf16.msra.mxu0 %v1896
    %2257 = vmatpush.bf16.msra.mxu0 %v1892
    %2258 = vmatmul.bf16.gmra.mxu0 %v1364
    %v2259 = vpop.f32.mrf.mxu0
    %v2260 = vadd.f32 %v1500, %v2259
    %v2261 = vpop.f32.mrf.mxu0
    %2262 = vdwg.mxu0
    %2263 = vmatpush.bf16.msra.mxu0 %v1952
    %2264 = vmatpush.bf16.msra.mxu0 %v1948
    %2265 = vmatpush.bf16.msra.mxu0 %v1944
    %2266 = vmatpush.bf16.msra.mxu0 %v1940
    %2267 = vmatpush.bf16.msra.mxu0 %v1936
    %2268 = vmatpush.bf16.msra.mxu0 %v1932
    %2269 = vmatpush.bf16.msra.mxu0 %v1928
    %2270 = vmatpush.bf16.msra.mxu0 %v1924
    %2271 = vmatmul.bf16.gmra.mxu0 %v1365
    %v2272 = vpop.f32.mrf.mxu0
    %v2273 = vadd.f32 %v2260, %v2272
    %v2274 = vpop.f32.mrf.mxu0
    %2275 = vdwg.mxu0
    %2276 = vmatpush.bf16.msra.mxu0 %v1984
    %2277 = vmatpush.bf16.msra.mxu0 %v1980
    %2278 = vmatpush.bf16.msra.mxu0 %v1976
    %2279 = vmatpush.bf16.msra.mxu0 %v1972
    %2280 = vmatpush.bf16.msra.mxu0 %v1968
    %2281 = vmatpush.bf16.msra.mxu0 %v1964
    %2282 = vmatpush.bf16.msra.mxu0 %v1960
    %2283 = vmatpush.bf16.msra.mxu0 %v1956
    %2284 = vmatmul.bf16.gmra.mxu0 %v1366
    %v2285 = vpop.f32.mrf.mxu0
    %v2286 = vadd.f32 %v2273, %v2285
    %v2287 = vpop.f32.mrf.mxu0
    %2288 = vdwg.mxu0
    %2289 = vmatpush.bf16.msra.mxu0 %v2016
    %2290 = vmatpush.bf16.msra.mxu0 %v2012
    %2291 = vmatpush.bf16.msra.mxu0 %v2008
    %2292 = vmatpush.bf16.msra.mxu0 %v2004
    %2293 = vmatpush.bf16.msra.mxu0 %v2000
    %2294 = vmatpush.bf16.msra.mxu0 %v1996
    %2295 = vmatpush.bf16.msra.mxu0 %v1992
    %2296 = vmatpush.bf16.msra.mxu0 %v1988
    %2297 = vmatmul.bf16.gmra.mxu0 %v1367
    %v2298 = vpop.f32.mrf.mxu0
    %v2299 = vadd.f32 %v2286, %v2298
    %v2300 = vpop.f32.mrf.mxu0
    %2301 = vdwg.mxu0
    %2302 = vmatpush.bf16.msra.mxu0 %v1921
    %2303 = vmatpush.bf16.msra.mxu0 %v1917
    %2304 = vmatpush.bf16.msra.mxu0 %v1913
    %2305 = vmatpush.bf16.msra.mxu0 %v1909
    %2306 = vmatpush.bf16.msra.mxu0 %v1905
    %2307 = vmatpush.bf16.msra.mxu0 %v1901
    %2308 = vmatpush.bf16.msra.mxu0 %v1897
    %2309 = vmatpush.bf16.msra.mxu0 %v1893
    %2310 = vmatmul.bf16.gmra.mxu0 %v1364
    %v2311 = vpop.f32.mrf.mxu0
    %v2312 = vadd.f32 %v1501, %v2311
    %v2313 = vpop.f32.mrf.mxu0
    %2314 = vdwg.mxu0
    %2315 = vmatpush.bf16.msra.mxu0 %v1953
    %2316 = vmatpush.bf16.msra.mxu0 %v1949
    %2317 = vmatpush.bf16.msra.mxu0 %v1945
    %2318 = vmatpush.bf16.msra.mxu0 %v1941
    %2319 = vmatpush.bf16.msra.mxu0 %v1937
    %2320 = vmatpush.bf16.msra.mxu0 %v1933
    %2321 = vmatpush.bf16.msra.mxu0 %v1929
    %2322 = vmatpush.bf16.msra.mxu0 %v1925
    %2323 = vmatmul.bf16.gmra.mxu0 %v1365
    %v2324 = vpop.f32.mrf.mxu0
    %v2325 = vadd.f32 %v2312, %v2324
    %v2326 = vpop.f32.mrf.mxu0
    %2327 = vdwg.mxu0
    %2328 = vmatpush.bf16.msra.mxu0 %v1985
    %2329 = vmatpush.bf16.msra.mxu0 %v1981
    %2330 = vmatpush.bf16.msra.mxu0 %v1977
    %2331 = vmatpush.bf16.msra.mxu0 %v1973
    %2332 = vmatpush.bf16.msra.mxu0 %v1969
    %2333 = vmatpush.bf16.msra.mxu0 %v1965
    %2334 = vmatpush.bf16.msra.mxu0 %v1961
    %2335 = vmatpush.bf16.msra.mxu0 %v1957
    %2336 = vmatmul.bf16.gmra.mxu0 %v1366
    %v2337 = vpop.f32.mrf.mxu0
    %v2338 = vadd.f32 %v2325, %v2337
    %v2339 = vpop.f32.mrf.mxu0
    %2340 = vdwg.mxu0
    %2341 = vmatpush.bf16.msra.mxu0 %v2017
    %2342 = vmatpush.bf16.msra.mxu0 %v2013
    %2343 = vmatpush.bf16.msra.mxu0 %v2009
    %2344 = vmatpush.bf16.msra.mxu0 %v2005
    %2345 = vmatpush.bf16.msra.mxu0 %v2001
    %2346 = vmatpush.bf16.msra.mxu0 %v1997
    %2347 = vmatpush.bf16.msra.mxu0 %v1993
    %2348 = vmatpush.bf16.msra.mxu0 %v1989
    %2349 = vmatmul.bf16.gmra.mxu0 %v1367
    %v2350 = vpop.f32.mrf.mxu0
    %v2351 = vadd.f32 %v2338, %v2350
    %v2352 = vpop.f32.mrf.mxu0
    %2353 = vdwg.mxu0
    %v2354 = vmax.f32 %v2195, 0.0
    %v2355 = vmax.f32 %v2247, 0.0
    %v2356 = vmax.f32 %v2299, 0.0
    %v2357 = vmax.f32 %v2351, 0.0
    %v2358 = vpack.c.bf16 %v2354, %v2354
    %v2359 = vpack.c.bf16 %v2355, %v2355
    %v2360 = vpack.c.bf16 %v2356, %v2356
    %v2361 = vpack.c.bf16 %v2357, %v2357
    %s2362 = scalar_lea.vmem [#allocation13], 1024
    %v2363 = vld [vmem:[%s2362] sm:$0xff]
    %v2364 = vld [vmem:[%s2362 + $0x8] sm:$0xff]
    %v2365 = vld [vmem:[%s2362 + $0x10] sm:$0xff]
    %v2366 = vld [vmem:[%s2362 + $0x18] sm:$0xff]
    %v2367 = vld [vmem:[%s2362 + $0x20] sm:$0xff]
    %v2368 = vld [vmem:[%s2362 + $0x28] sm:$0xff]
    %v2369 = vld [vmem:[%s2362 + $0x30] sm:$0xff]
    %v2370 = vld [vmem:[%s2362 + $0x38] sm:$0xff]
    %v2371 = vld [vmem:[%s2362 + $0x40] sm:$0xff]
    %v2372 = vld [vmem:[%s2362 + $0x48] sm:$0xff]
    %v2373 = vld [vmem:[%s2362 + $0x50] sm:$0xff]
    %v2374 = vld [vmem:[%s2362 + $0x58] sm:$0xff]
    %v2375 = vld [vmem:[%s2362 + $0x60] sm:$0xff]
    %v2376 = vld [vmem:[%s2362 + $0x68] sm:$0xff]
    %v2377 = vld [vmem:[%s2362 + $0x70] sm:$0xff]
    %v2378 = vld [vmem:[%s2362 + $0x78] sm:$0xff]
    %v2379 = vld [vmem:[%s2362 + $0x80] sm:$0xff]
    %v2380 = vld [vmem:[%s2362 + $0x88] sm:$0xff]
    %v2381 = vld [vmem:[%s2362 + $0x90] sm:$0xff]
    %v2382 = vld [vmem:[%s2362 + $0x98] sm:$0xff]
    %v2383 = vld [vmem:[%s2362 + $0xa0] sm:$0xff]
    %v2384 = vld [vmem:[%s2362 + $0xa8] sm:$0xff]
    %v2385 = vld [vmem:[%s2362 + $0xb0] sm:$0xff]
    %v2386 = vld [vmem:[%s2362 + $0xb8] sm:$0xff]
    %v2387 = vld [vmem:[%s2362 + $0xc0] sm:$0xff]
    %v2388 = vld [vmem:[%s2362 + $0xc8] sm:$0xff]
    %v2389 = vld [vmem:[%s2362 + $0xd0] sm:$0xff]
    %v2390 = vld [vmem:[%s2362 + $0xd8] sm:$0xff]
    %v2391 = vld [vmem:[%s2362 + $0xe0] sm:$0xff]
    %v2392 = vld [vmem:[%s2362 + $0xe8] sm:$0xff]
    %v2393 = vld [vmem:[%s2362 + $0xf0] sm:$0xff]
    %v2394 = vld [vmem:[%s2362 + $0xf8] sm:$0xff]
    %v2395 = vld [vmem:[%s2362 + $0x100] sm:$0xff]
    %v2396 = vld [vmem:[%s2362 + $0x108] sm:$0xff]
    %v2397 = vld [vmem:[%s2362 + $0x110] sm:$0xff]
    %v2398 = vld [vmem:[%s2362 + $0x118] sm:$0xff]
    %v2399 = vld [vmem:[%s2362 + $0x120] sm:$0xff]
    %v2400 = vld [vmem:[%s2362 + $0x128] sm:$0xff]
    %v2401 = vld [vmem:[%s2362 + $0x130] sm:$0xff]
    %v2402 = vld [vmem:[%s2362 + $0x138] sm:$0xff]
    %v2403 = vld [vmem:[%s2362 + $0x140] sm:$0xff]
    %v2404 = vld [vmem:[%s2362 + $0x148] sm:$0xff]
    %v2405 = vld [vmem:[%s2362 + $0x150] sm:$0xff]
    %v2406 = vld [vmem:[%s2362 + $0x158] sm:$0xff]
    %v2407 = vld [vmem:[%s2362 + $0x160] sm:$0xff]
    %v2408 = vld [vmem:[%s2362 + $0x168] sm:$0xff]
    %v2409 = vld [vmem:[%s2362 + $0x170] sm:$0xff]
    %v2410 = vld [vmem:[%s2362 + $0x178] sm:$0xff]
    %v2411 = vld [vmem:[%s2362 + $0x180] sm:$0xff]
    %v2412 = vld [vmem:[%s2362 + $0x188] sm:$0xff]
    %v2413 = vld [vmem:[%s2362 + $0x190] sm:$0xff]
    %v2414 = vld [vmem:[%s2362 + $0x198] sm:$0xff]
    %v2415 = vld [vmem:[%s2362 + $0x1a0] sm:$0xff]
    %v2416 = vld [vmem:[%s2362 + $0x1a8] sm:$0xff]
    %v2417 = vld [vmem:[%s2362 + $0x1b0] sm:$0xff]
    %v2418 = vld [vmem:[%s2362 + $0x1b8] sm:$0xff]
    %v2419 = vld [vmem:[%s2362 + $0x1c0] sm:$0xff]
    %v2420 = vld [vmem:[%s2362 + $0x1c8] sm:$0xff]
    %v2421 = vld [vmem:[%s2362 + $0x1d0] sm:$0xff]
    %v2422 = vld [vmem:[%s2362 + $0x1d8] sm:$0xff]
    %v2423 = vld [vmem:[%s2362 + $0x1e0] sm:$0xff]
    %v2424 = vld [vmem:[%s2362 + $0x1e8] sm:$0xff]
    %v2425 = vld [vmem:[%s2362 + $0x1f0] sm:$0xff]
    %v2426 = vld [vmem:[%s2362 + $0x1f8] sm:$0xff]
    %v2427 = vld [vmem:[%s2362 + $0x200] sm:$0xff]
    %v2428 = vld [vmem:[%s2362 + $0x208] sm:$0xff]
    %v2429 = vld [vmem:[%s2362 + $0x210] sm:$0xff]
    %v2430 = vld [vmem:[%s2362 + $0x218] sm:$0xff]
    %v2431 = vld [vmem:[%s2362 + $0x220] sm:$0xff]
    %v2432 = vld [vmem:[%s2362 + $0x228] sm:$0xff]
    %v2433 = vld [vmem:[%s2362 + $0x230] sm:$0xff]
    %v2434 = vld [vmem:[%s2362 + $0x238] sm:$0xff]
    %v2435 = vld [vmem:[%s2362 + $0x240] sm:$0xff]
    %v2436 = vld [vmem:[%s2362 + $0x248] sm:$0xff]
    %v2437 = vld [vmem:[%s2362 + $0x250] sm:$0xff]
    %v2438 = vld [vmem:[%s2362 + $0x258] sm:$0xff]
    %v2439 = vld [vmem:[%s2362 + $0x260] sm:$0xff]
    %v2440 = vld [vmem:[%s2362 + $0x268] sm:$0xff]
    %v2441 = vld [vmem:[%s2362 + $0x270] sm:$0xff]
    %v2442 = vld [vmem:[%s2362 + $0x278] sm:$0xff]
    %v2443 = vld [vmem:[%s2362 + $0x280] sm:$0xff]
    %v2444 = vld [vmem:[%s2362 + $0x288] sm:$0xff]
    %v2445 = vld [vmem:[%s2362 + $0x290] sm:$0xff]
    %v2446 = vld [vmem:[%s2362 + $0x298] sm:$0xff]
    %v2447 = vld [vmem:[%s2362 + $0x2a0] sm:$0xff]
    %v2448 = vld [vmem:[%s2362 + $0x2a8] sm:$0xff]
    %v2449 = vld [vmem:[%s2362 + $0x2b0] sm:$0xff]
    %v2450 = vld [vmem:[%s2362 + $0x2b8] sm:$0xff]
    %v2451 = vld [vmem:[%s2362 + $0x2c0] sm:$0xff]
    %v2452 = vld [vmem:[%s2362 + $0x2c8] sm:$0xff]
    %v2453 = vld [vmem:[%s2362 + $0x2d0] sm:$0xff]
    %v2454 = vld [vmem:[%s2362 + $0x2d8] sm:$0xff]
    %v2455 = vld [vmem:[%s2362 + $0x2e0] sm:$0xff]
    %v2456 = vld [vmem:[%s2362 + $0x2e8] sm:$0xff]
    %v2457 = vld [vmem:[%s2362 + $0x2f0] sm:$0xff]
    %v2458 = vld [vmem:[%s2362 + $0x2f8] sm:$0xff]
    %v2459 = vld [vmem:[%s2362 + $0x300] sm:$0xff]
    %v2460 = vld [vmem:[%s2362 + $0x308] sm:$0xff]
    %v2461 = vld [vmem:[%s2362 + $0x310] sm:$0xff]
    %v2462 = vld [vmem:[%s2362 + $0x318] sm:$0xff]
    %v2463 = vld [vmem:[%s2362 + $0x320] sm:$0xff]
    %v2464 = vld [vmem:[%s2362 + $0x328] sm:$0xff]
    %v2465 = vld [vmem:[%s2362 + $0x330] sm:$0xff]
    %v2466 = vld [vmem:[%s2362 + $0x338] sm:$0xff]
    %v2467 = vld [vmem:[%s2362 + $0x340] sm:$0xff]
    %v2468 = vld [vmem:[%s2362 + $0x348] sm:$0xff]
    %v2469 = vld [vmem:[%s2362 + $0x350] sm:$0xff]
    %v2470 = vld [vmem:[%s2362 + $0x358] sm:$0xff]
    %v2471 = vld [vmem:[%s2362 + $0x360] sm:$0xff]
    %v2472 = vld [vmem:[%s2362 + $0x368] sm:$0xff]
    %v2473 = vld [vmem:[%s2362 + $0x370] sm:$0xff]
    %v2474 = vld [vmem:[%s2362 + $0x378] sm:$0xff]
    %v2475 = vld [vmem:[%s2362 + $0x380] sm:$0xff]
    %v2476 = vld [vmem:[%s2362 + $0x388] sm:$0xff]
    %v2477 = vld [vmem:[%s2362 + $0x390] sm:$0xff]
    %v2478 = vld [vmem:[%s2362 + $0x398] sm:$0xff]
    %v2479 = vld [vmem:[%s2362 + $0x3a0] sm:$0xff]
    %v2480 = vld [vmem:[%s2362 + $0x3a8] sm:$0xff]
    %v2481 = vld [vmem:[%s2362 + $0x3b0] sm:$0xff]
    %v2482 = vld [vmem:[%s2362 + $0x3b8] sm:$0xff]
    %v2483 = vld [vmem:[%s2362 + $0x3c0] sm:$0xff]
    %v2484 = vld [vmem:[%s2362 + $0x3c8] sm:$0xff]
    %v2485 = vld [vmem:[%s2362 + $0x3d0] sm:$0xff]
    %v2486 = vld [vmem:[%s2362 + $0x3d8] sm:$0xff]
    %v2487 = vld [vmem:[%s2362 + $0x3e0] sm:$0xff]
    %v2488 = vld [vmem:[%s2362 + $0x3e8] sm:$0xff]
    %v2489 = vld [vmem:[%s2362 + $0x3f0] sm:$0xff]
    %v2490 = vld [vmem:[%s2362 + $0x3f8] sm:$0xff]
    %s2491 = scalar_lea.vmem [#allocation14], 4
    %v2492 = vld [vmem:[%s2491] sm:$0xf]
    %v2494 = vperm.slane %v2492, 0
    %v2495 = vperm.slane %v2492, 1
    %v2496 = vperm.slane %v2492, 2
    %v2497 = vperm.slane %v2492, 3
    %v2630 = vunpack.c.l.b16 %v2363
    %v2631 = vunpack.c.h.b16 %v2363
    %v2632 = vunpack.c.l.b16 %v2364
    %v2633 = vunpack.c.h.b16 %v2364
    %v2634 = vunpack.c.l.b16 %v2365
    %v2635 = vunpack.c.h.b16 %v2365
    %v2636 = vunpack.c.l.b16 %v2366
    %v2637 = vunpack.c.h.b16 %v2366
    %v2638 = vunpack.c.l.b16 %v2367
    %v2639 = vunpack.c.h.b16 %v2367
    %v2640 = vunpack.c.l.b16 %v2368
    %v2641 = vunpack.c.h.b16 %v2368
    %v2642 = vunpack.c.l.b16 %v2369
    %v2643 = vunpack.c.h.b16 %v2369
    %v2644 = vunpack.c.l.b16 %v2370
    %v2645 = vunpack.c.h.b16 %v2370
    %v2646 = vunpack.c.l.b16 %v2371
    %v2647 = vunpack.c.h.b16 %v2371
    %v2648 = vunpack.c.l.b16 %v2372
    %v2649 = vunpack.c.h.b16 %v2372
    %v2650 = vunpack.c.l.b16 %v2373
    %v2651 = vunpack.c.h.b16 %v2373
    %v2652 = vunpack.c.l.b16 %v2374
    %v2653 = vunpack.c.h.b16 %v2374
    %v2654 = vunpack.c.l.b16 %v2375
    %v2655 = vunpack.c.h.b16 %v2375
    %v2656 = vunpack.c.l.b16 %v2376
    %v2657 = vunpack.c.h.b16 %v2376
    %v2658 = vunpack.c.l.b16 %v2377
    %v2659 = vunpack.c.h.b16 %v2377
    %v2660 = vunpack.c.l.b16 %v2378
    %v2661 = vunpack.c.h.b16 %v2378
    %v2662 = vunpack.c.l.b16 %v2379
    %v2663 = vunpack.c.h.b16 %v2379
    %v2664 = vunpack.c.l.b16 %v2380
    %v2665 = vunpack.c.h.b16 %v2380
    %v2666 = vunpack.c.l.b16 %v2381
    %v2667 = vunpack.c.h.b16 %v2381
    %v2668 = vunpack.c.l.b16 %v2382
    %v2669 = vunpack.c.h.b16 %v2382
    %v2670 = vunpack.c.l.b16 %v2383
    %v2671 = vunpack.c.h.b16 %v2383
    %v2672 = vunpack.c.l.b16 %v2384
    %v2673 = vunpack.c.h.b16 %v2384
    %v2674 = vunpack.c.l.b16 %v2385
    %v2675 = vunpack.c.h.b16 %v2385
    %v2676 = vunpack.c.l.b16 %v2386
    %v2677 = vunpack.c.h.b16 %v2386
    %v2678 = vunpack.c.l.b16 %v2387
    %v2679 = vunpack.c.h.b16 %v2387
    %v2680 = vunpack.c.l.b16 %v2388
    %v2681 = vunpack.c.h.b16 %v2388
    %v2682 = vunpack.c.l.b16 %v2389
    %v2683 = vunpack.c.h.b16 %v2389
    %v2684 = vunpack.c.l.b16 %v2390
    %v2685 = vunpack.c.h.b16 %v2390
    %v2686 = vunpack.c.l.b16 %v2391
    %v2687 = vunpack.c.h.b16 %v2391
    %v2688 = vunpack.c.l.b16 %v2392
    %v2689 = vunpack.c.h.b16 %v2392
    %v2690 = vunpack.c.l.b16 %v2393
    %v2691 = vunpack.c.h.b16 %v2393
    %v2692 = vunpack.c.l.b16 %v2394
    %v2693 = vunpack.c.h.b16 %v2394
    %v2694 = vunpack.c.l.b16 %v2395
    %v2695 = vunpack.c.h.b16 %v2395
    %v2696 = vunpack.c.l.b16 %v2396
    %v2697 = vunpack.c.h.b16 %v2396
    %v2698 = vunpack.c.l.b16 %v2397
    %v2699 = vunpack.c.h.b16 %v2397
    %v2700 = vunpack.c.l.b16 %v2398
    %v2701 = vunpack.c.h.b16 %v2398
    %v2702 = vunpack.c.l.b16 %v2399
    %v2703 = vunpack.c.h.b16 %v2399
    %v2704 = vunpack.c.l.b16 %v2400
    %v2705 = vunpack.c.h.b16 %v2400
    %v2706 = vunpack.c.l.b16 %v2401
    %v2707 = vunpack.c.h.b16 %v2401
    %v2708 = vunpack.c.l.b16 %v2402
    %v2709 = vunpack.c.h.b16 %v2402
    %v2710 = vunpack.c.l.b16 %v2403
    %v2711 = vunpack.c.h.b16 %v2403
    %v2712 = vunpack.c.l.b16 %v2404
    %v2713 = vunpack.c.h.b16 %v2404
    %v2714 = vunpack.c.l.b16 %v2405
    %v2715 = vunpack.c.h.b16 %v2405
    %v2716 = vunpack.c.l.b16 %v2406
    %v2717 = vunpack.c.h.b16 %v2406
    %v2718 = vunpack.c.l.b16 %v2407
    %v2719 = vunpack.c.h.b16 %v2407
    %v2720 = vunpack.c.l.b16 %v2408
    %v2721 = vunpack.c.h.b16 %v2408
    %v2722 = vunpack.c.l.b16 %v2409
    %v2723 = vunpack.c.h.b16 %v2409
    %v2724 = vunpack.c.l.b16 %v2410
    %v2725 = vunpack.c.h.b16 %v2410
    %v2726 = vunpack.c.l.b16 %v2411
    %v2727 = vunpack.c.h.b16 %v2411
    %v2728 = vunpack.c.l.b16 %v2412
    %v2729 = vunpack.c.h.b16 %v2412
    %v2730 = vunpack.c.l.b16 %v2413
    %v2731 = vunpack.c.h.b16 %v2413
    %v2732 = vunpack.c.l.b16 %v2414
    %v2733 = vunpack.c.h.b16 %v2414
    %v2734 = vunpack.c.l.b16 %v2415
    %v2735 = vunpack.c.h.b16 %v2415
    %v2736 = vunpack.c.l.b16 %v2416
    %v2737 = vunpack.c.h.b16 %v2416
    %v2738 = vunpack.c.l.b16 %v2417
    %v2739 = vunpack.c.h.b16 %v2417
    %v2740 = vunpack.c.l.b16 %v2418
    %v2741 = vunpack.c.h.b16 %v2418
    %v2742 = vunpack.c.l.b16 %v2419
    %v2743 = vunpack.c.h.b16 %v2419
    %v2744 = vunpack.c.l.b16 %v2420
    %v2745 = vunpack.c.h.b16 %v2420
    %v2746 = vunpack.c.l.b16 %v2421
    %v2747 = vunpack.c.h.b16 %v2421
    %v2748 = vunpack.c.l.b16 %v2422
    %v2749 = vunpack.c.h.b16 %v2422
    %v2750 = vunpack.c.l.b16 %v2423
    %v2751 = vunpack.c.h.b16 %v2423
    %v2752 = vunpack.c.l.b16 %v2424
    %v2753 = vunpack.c.h.b16 %v2424
    %v2754 = vunpack.c.l.b16 %v2425
    %v2755 = vunpack.c.h.b16 %v2425
    %v2756 = vunpack.c.l.b16 %v2426
    %v2757 = vunpack.c.h.b16 %v2426
    %v2758 = vunpack.c.l.b16 %v2427
    %v2759 = vunpack.c.h.b16 %v2427
    %v2760 = vunpack.c.l.b16 %v2428
    %v2761 = vunpack.c.h.b16 %v2428
    %v2762 = vunpack.c.l.b16 %v2429
    %v2763 = vunpack.c.h.b16 %v2429
    %v2764 = vunpack.c.l.b16 %v2430
    %v2765 = vunpack.c.h.b16 %v2430
    %v2766 = vunpack.c.l.b16 %v2431
    %v2767 = vunpack.c.h.b16 %v2431
    %v2768 = vunpack.c.l.b16 %v2432
    %v2769 = vunpack.c.h.b16 %v2432
    %v2770 = vunpack.c.l.b16 %v2433
    %v2771 = vunpack.c.h.b16 %v2433
    %v2772 = vunpack.c.l.b16 %v2434
    %v2773 = vunpack.c.h.b16 %v2434
    %v2774 = vunpack.c.l.b16 %v2435
    %v2775 = vunpack.c.h.b16 %v2435
    %v2776 = vunpack.c.l.b16 %v2436
    %v2777 = vunpack.c.h.b16 %v2436
    %v2778 = vunpack.c.l.b16 %v2437
    %v2779 = vunpack.c.h.b16 %v2437
    %v2780 = vunpack.c.l.b16 %v2438
    %v2781 = vunpack.c.h.b16 %v2438
    %v2782 = vunpack.c.l.b16 %v2439
    %v2783 = vunpack.c.h.b16 %v2439
    %v2784 = vunpack.c.l.b16 %v2440
    %v2785 = vunpack.c.h.b16 %v2440
    %v2786 = vunpack.c.l.b16 %v2441
    %v2787 = vunpack.c.h.b16 %v2441
    %v2788 = vunpack.c.l.b16 %v2442
    %v2789 = vunpack.c.h.b16 %v2442
    %v2790 = vunpack.c.l.b16 %v2443
    %v2791 = vunpack.c.h.b16 %v2443
    %v2792 = vunpack.c.l.b16 %v2444
    %v2793 = vunpack.c.h.b16 %v2444
    %v2794 = vunpack.c.l.b16 %v2445
    %v2795 = vunpack.c.h.b16 %v2445
    %v2796 = vunpack.c.l.b16 %v2446
    %v2797 = vunpack.c.h.b16 %v2446
    %v2798 = vunpack.c.l.b16 %v2447
    %v2799 = vunpack.c.h.b16 %v2447
    %v2800 = vunpack.c.l.b16 %v2448
    %v2801 = vunpack.c.h.b16 %v2448
    %v2802 = vunpack.c.l.b16 %v2449
    %v2803 = vunpack.c.h.b16 %v2449
    %v2804 = vunpack.c.l.b16 %v2450
    %v2805 = vunpack.c.h.b16 %v2450
    %v2806 = vunpack.c.l.b16 %v2451
    %v2807 = vunpack.c.h.b16 %v2451
    %v2808 = vunpack.c.l.b16 %v2452
    %v2809 = vunpack.c.h.b16 %v2452
    %v2810 = vunpack.c.l.b16 %v2453
    %v2811 = vunpack.c.h.b16 %v2453
    %v2812 = vunpack.c.l.b16 %v2454
    %v2813 = vunpack.c.h.b16 %v2454
    %v2814 = vunpack.c.l.b16 %v2455
    %v2815 = vunpack.c.h.b16 %v2455
    %v2816 = vunpack.c.l.b16 %v2456
    %v2817 = vunpack.c.h.b16 %v2456
    %v2818 = vunpack.c.l.b16 %v2457
    %v2819 = vunpack.c.h.b16 %v2457
    %v2820 = vunpack.c.l.b16 %v2458
    %v2821 = vunpack.c.h.b16 %v2458
    %v2822 = vunpack.c.l.b16 %v2459
    %v2823 = vunpack.c.h.b16 %v2459
    %v2824 = vunpack.c.l.b16 %v2460
    %v2825 = vunpack.c.h.b16 %v2460
    %v2826 = vunpack.c.l.b16 %v2461
    %v2827 = vunpack.c.h.b16 %v2461
    %v2828 = vunpack.c.l.b16 %v2462
    %v2829 = vunpack.c.h.b16 %v2462
    %v2830 = vunpack.c.l.b16 %v2463
    %v2831 = vunpack.c.h.b16 %v2463
    %v2832 = vunpack.c.l.b16 %v2464
    %v2833 = vunpack.c.h.b16 %v2464
    %v2834 = vunpack.c.l.b16 %v2465
    %v2835 = vunpack.c.h.b16 %v2465
    %v2836 = vunpack.c.l.b16 %v2466
    %v2837 = vunpack.c.h.b16 %v2466
    %v2838 = vunpack.c.l.b16 %v2467
    %v2839 = vunpack.c.h.b16 %v2467
    %v2840 = vunpack.c.l.b16 %v2468
    %v2841 = vunpack.c.h.b16 %v2468
    %v2842 = vunpack.c.l.b16 %v2469
    %v2843 = vunpack.c.h.b16 %v2469
    %v2844 = vunpack.c.l.b16 %v2470
    %v2845 = vunpack.c.h.b16 %v2470
    %v2846 = vunpack.c.l.b16 %v2471
    %v2847 = vunpack.c.h.b16 %v2471
    %v2848 = vunpack.c.l.b16 %v2472
    %v2849 = vunpack.c.h.b16 %v2472
    %v2850 = vunpack.c.l.b16 %v2473
    %v2851 = vunpack.c.h.b16 %v2473
    %v2852 = vunpack.c.l.b16 %v2474
    %v2853 = vunpack.c.h.b16 %v2474
    %v2854 = vunpack.c.l.b16 %v2475
    %v2855 = vunpack.c.h.b16 %v2475
    %v2856 = vunpack.c.l.b16 %v2476
    %v2857 = vunpack.c.h.b16 %v2476
    %v2858 = vunpack.c.l.b16 %v2477
    %v2859 = vunpack.c.h.b16 %v2477
    %v2860 = vunpack.c.l.b16 %v2478
    %v2861 = vunpack.c.h.b16 %v2478
    %v2862 = vunpack.c.l.b16 %v2479
    %v2863 = vunpack.c.h.b16 %v2479
    %v2864 = vunpack.c.l.b16 %v2480
    %v2865 = vunpack.c.h.b16 %v2480
    %v2866 = vunpack.c.l.b16 %v2481
    %v2867 = vunpack.c.h.b16 %v2481
    %v2868 = vunpack.c.l.b16 %v2482
    %v2869 = vunpack.c.h.b16 %v2482
    %v2870 = vunpack.c.l.b16 %v2483
    %v2871 = vunpack.c.h.b16 %v2483
    %v2872 = vunpack.c.l.b16 %v2484
    %v2873 = vunpack.c.h.b16 %v2484
    %v2874 = vunpack.c.l.b16 %v2485
    %v2875 = vunpack.c.h.b16 %v2485
    %v2876 = vunpack.c.l.b16 %v2486
    %v2877 = vunpack.c.h.b16 %v2486
    %v2878 = vunpack.c.l.b16 %v2487
    %v2879 = vunpack.c.h.b16 %v2487
    %v2880 = vunpack.c.l.b16 %v2488
    %v2881 = vunpack.c.h.b16 %v2488
    %v2882 = vunpack.c.l.b16 %v2489
    %v2883 = vunpack.c.h.b16 %v2489
    %v2884 = vunpack.c.l.b16 %v2490
    %v2885 = vunpack.c.h.b16 %v2490
    %v2886 = vpack.c.b16 %v2634, %v2630
    %v2887 = vpack.c.b16 %v2635, %v2631
    %v2888 = vpack.c.b16 %v2636, %v2632
    %v2889 = vpack.c.b16 %v2637, %v2633
    %v2890 = vpack.c.b16 %v2642, %v2638
    %v2891 = vpack.c.b16 %v2643, %v2639
    %v2892 = vpack.c.b16 %v2644, %v2640
    %v2893 = vpack.c.b16 %v2645, %v2641
    %v2894 = vpack.c.b16 %v2650, %v2646
    %v2895 = vpack.c.b16 %v2651, %v2647
    %v2896 = vpack.c.b16 %v2652, %v2648
    %v2897 = vpack.c.b16 %v2653, %v2649
    %v2898 = vpack.c.b16 %v2658, %v2654
    %v2899 = vpack.c.b16 %v2659, %v2655
    %v2900 = vpack.c.b16 %v2660, %v2656
    %v2901 = vpack.c.b16 %v2661, %v2657
    %v2902 = vpack.c.b16 %v2666, %v2662
    %v2903 = vpack.c.b16 %v2667, %v2663
    %v2904 = vpack.c.b16 %v2668, %v2664
    %v2905 = vpack.c.b16 %v2669, %v2665
    %v2906 = vpack.c.b16 %v2674, %v2670
    %v2907 = vpack.c.b16 %v2675, %v2671
    %v2908 = vpack.c.b16 %v2676, %v2672
    %v2909 = vpack.c.b16 %v2677, %v2673
    %v2910 = vpack.c.b16 %v2682, %v2678
    %v2911 = vpack.c.b16 %v2683, %v2679
    %v2912 = vpack.c.b16 %v2684, %v2680
    %v2913 = vpack.c.b16 %v2685, %v2681
    %v2914 = vpack.c.b16 %v2690, %v2686
    %v2915 = vpack.c.b16 %v2691, %v2687
    %v2916 = vpack.c.b16 %v2692, %v2688
    %v2917 = vpack.c.b16 %v2693, %v2689
    %v2918 = vpack.c.b16 %v2698, %v2694
    %v2919 = vpack.c.b16 %v2699, %v2695
    %v2920 = vpack.c.b16 %v2700, %v2696
    %v2921 = vpack.c.b16 %v2701, %v2697
    %v2922 = vpack.c.b16 %v2706, %v2702
    %v2923 = vpack.c.b16 %v2707, %v2703
    %v2924 = vpack.c.b16 %v2708, %v2704
    %v2925 = vpack.c.b16 %v2709, %v2705
    %v2926 = vpack.c.b16 %v2714, %v2710
    %v2927 = vpack.c.b16 %v2715, %v2711
    %v2928 = vpack.c.b16 %v2716, %v2712
    %v2929 = vpack.c.b16 %v2717, %v2713
    %v2930 = vpack.c.b16 %v2722, %v2718
    %v2931 = vpack.c.b16 %v2723, %v2719
    %v2932 = vpack.c.b16 %v2724, %v2720
    %v2933 = vpack.c.b16 %v2725, %v2721
    %v2934 = vpack.c.b16 %v2730, %v2726
    %v2935 = vpack.c.b16 %v2731, %v2727
    %v2936 = vpack.c.b16 %v2732, %v2728
    %v2937 = vpack.c.b16 %v2733, %v2729
    %v2938 = vpack.c.b16 %v2738, %v2734
    %v2939 = vpack.c.b16 %v2739, %v2735
    %v2940 = vpack.c.b16 %v2740, %v2736
    %v2941 = vpack.c.b16 %v2741, %v2737
    %v2942 = vpack.c.b16 %v2746, %v2742
    %v2943 = vpack.c.b16 %v2747, %v2743
    %v2944 = vpack.c.b16 %v2748, %v2744
    %v2945 = vpack.c.b16 %v2749, %v2745
    %v2946 = vpack.c.b16 %v2754, %v2750
    %v2947 = vpack.c.b16 %v2755, %v2751
    %v2948 = vpack.c.b16 %v2756, %v2752
    %v2949 = vpack.c.b16 %v2757, %v2753
    %v2950 = vpack.c.b16 %v2762, %v2758
    %v2951 = vpack.c.b16 %v2763, %v2759
    %v2952 = vpack.c.b16 %v2764, %v2760
    %v2953 = vpack.c.b16 %v2765, %v2761
    %v2954 = vpack.c.b16 %v2770, %v2766
    %v2955 = vpack.c.b16 %v2771, %v2767
    %v2956 = vpack.c.b16 %v2772, %v2768
    %v2957 = vpack.c.b16 %v2773, %v2769
    %v2958 = vpack.c.b16 %v2778, %v2774
    %v2959 = vpack.c.b16 %v2779, %v2775
    %v2960 = vpack.c.b16 %v2780, %v2776
    %v2961 = vpack.c.b16 %v2781, %v2777
    %v2962 = vpack.c.b16 %v2786, %v2782
    %v2963 = vpack.c.b16 %v2787, %v2783
    %v2964 = vpack.c.b16 %v2788, %v2784
    %v2965 = vpack.c.b16 %v2789, %v2785
    %v2966 = vpack.c.b16 %v2794, %v2790
    %v2967 = vpack.c.b16 %v2795, %v2791
    %v2968 = vpack.c.b16 %v2796, %v2792
    %v2969 = vpack.c.b16 %v2797, %v2793
    %v2970 = vpack.c.b16 %v2802, %v2798
    %v2971 = vpack.c.b16 %v2803, %v2799
    %v2972 = vpack.c.b16 %v2804, %v2800
    %v2973 = vpack.c.b16 %v2805, %v2801
    %v2974 = vpack.c.b16 %v2810, %v2806
    %v2975 = vpack.c.b16 %v2811, %v2807
    %v2976 = vpack.c.b16 %v2812, %v2808
    %v2977 = vpack.c.b16 %v2813, %v2809
    %v2978 = vpack.c.b16 %v2818, %v2814
    %v2979 = vpack.c.b16 %v2819, %v2815
    %v2980 = vpack.c.b16 %v2820, %v2816
    %v2981 = vpack.c.b16 %v2821, %v2817
    %v2982 = vpack.c.b16 %v2826, %v2822
    %v2983 = vpack.c.b16 %v2827, %v2823
    %v2984 = vpack.c.b16 %v2828, %v2824
    %v2985 = vpack.c.b16 %v2829, %v2825
    %v2986 = vpack.c.b16 %v2834, %v2830
    %v2987 = vpack.c.b16 %v2835, %v2831
    %v2988 = vpack.c.b16 %v2836, %v2832
    %v2989 = vpack.c.b16 %v2837, %v2833
    %v2990 = vpack.c.b16 %v2842, %v2838
    %v2991 = vpack.c.b16 %v2843, %v2839
    %v2992 = vpack.c.b16 %v2844, %v2840
    %v2993 = vpack.c.b16 %v2845, %v2841
    %v2994 = vpack.c.b16 %v2850, %v2846
    %v2995 = vpack.c.b16 %v2851, %v2847
    %v2996 = vpack.c.b16 %v2852, %v2848
    %v2997 = vpack.c.b16 %v2853, %v2849
    %v2998 = vpack.c.b16 %v2858, %v2854
    %v2999 = vpack.c.b16 %v2859, %v2855
    %v3000 = vpack.c.b16 %v2860, %v2856
    %v3001 = vpack.c.b16 %v2861, %v2857
    %v3002 = vpack.c.b16 %v2866, %v2862
    %v3003 = vpack.c.b16 %v2867, %v2863
    %v3004 = vpack.c.b16 %v2868, %v2864
    %v3005 = vpack.c.b16 %v2869, %v2865
    %v3006 = vpack.c.b16 %v2874, %v2870
    %v3007 = vpack.c.b16 %v2875, %v2871
    %v3008 = vpack.c.b16 %v2876, %v2872
    %v3009 = vpack.c.b16 %v2877, %v2873
    %v3010 = vpack.c.b16 %v2882, %v2878
    %v3011 = vpack.c.b16 %v2883, %v2879
    %v3012 = vpack.c.b16 %v2884, %v2880
    %v3013 = vpack.c.b16 %v2885, %v2881
    %3142 = vmatpush.bf16.msra.mxu0 %v2914
    %3143 = vmatpush.bf16.msra.mxu0 %v2910
    %3144 = vmatpush.bf16.msra.mxu0 %v2906
    %3145 = vmatpush.bf16.msra.mxu0 %v2902
    %3146 = vmatpush.bf16.msra.mxu0 %v2898
    %3147 = vmatpush.bf16.msra.mxu0 %v2894
    %3148 = vmatpush.bf16.msra.mxu0 %v2890
    %3149 = vmatpush.bf16.msra.mxu0 %v2886
    %3150 = vmatmul.bf16.gmra.mxu0 %v2358
    %v3151 = vpop.f32.mrf.mxu0
    %v3152 = vadd.f32 %v2494, %v3151
    %v3153 = vpop.f32.mrf.mxu0
    %3154 = vdwg.mxu0
    %3155 = vmatpush.bf16.msra.mxu0 %v2946
    %3156 = vmatpush.bf16.msra.mxu0 %v2942
    %3157 = vmatpush.bf16.msra.mxu0 %v2938
    %3158 = vmatpush.bf16.msra.mxu0 %v2934
    %3159 = vmatpush.bf16.msra.mxu0 %v2930
    %3160 = vmatpush.bf16.msra.mxu0 %v2926
    %3161 = vmatpush.bf16.msra.mxu0 %v2922
    %3162 = vmatpush.bf16.msra.mxu0 %v2918
    %3163 = vmatmul.bf16.gmra.mxu0 %v2359
    %v3164 = vpop.f32.mrf.mxu0
    %v3165 = vadd.f32 %v3152, %v3164
    %v3166 = vpop.f32.mrf.mxu0
    %3167 = vdwg.mxu0
    %3168 = vmatpush.bf16.msra.mxu0 %v2978
    %3169 = vmatpush.bf16.msra.mxu0 %v2974
    %3170 = vmatpush.bf16.msra.mxu0 %v2970
    %3171 = vmatpush.bf16.msra.mxu0 %v2966
    %3172 = vmatpush.bf16.msra.mxu0 %v2962
    %3173 = vmatpush.bf16.msra.mxu0 %v2958
    %3174 = vmatpush.bf16.msra.mxu0 %v2954
    %3175 = vmatpush.bf16.msra.mxu0 %v2950
    %3176 = vmatmul.bf16.gmra.mxu0 %v2360
    %v3177 = vpop.f32.mrf.mxu0
    %v3178 = vadd.f32 %v3165, %v3177
    %v3179 = vpop.f32.mrf.mxu0
    %3180 = vdwg.mxu0
    %3181 = vmatpush.bf16.msra.mxu0 %v3010
    %3182 = vmatpush.bf16.msra.mxu0 %v3006
    %3183 = vmatpush.bf16.msra.mxu0 %v3002
    %3184 = vmatpush.bf16.msra.mxu0 %v2998
    %3185 = vmatpush.bf16.msra.mxu0 %v2994
    %3186 = vmatpush.bf16.msra.mxu0 %v2990
    %3187 = vmatpush.bf16.msra.mxu0 %v2986
    %3188 = vmatpush.bf16.msra.mxu0 %v2982
    %3189 = vmatmul.bf16.gmra.mxu0 %v2361
    %v3190 = vpop.f32.mrf.mxu0
    %v3191 = vadd.f32 %v3178, %v3190
    %v3192 = vpop.f32.mrf.mxu0
    %3193 = vdwg.mxu0
    %3194 = vmatpush.bf16.msra.mxu0 %v2915
    %3195 = vmatpush.bf16.msra.mxu0 %v2911
    %3196 = vmatpush.bf16.msra.mxu0 %v2907
    %3197 = vmatpush.bf16.msra.mxu0 %v2903
    %3198 = vmatpush.bf16.msra.mxu0 %v2899
    %3199 = vmatpush.bf16.msra.mxu0 %v2895
    %3200 = vmatpush.bf16.msra.mxu0 %v2891
    %3201 = vmatpush.bf16.msra.mxu0 %v2887
    %3202 = vmatmul.bf16.gmra.mxu0 %v2358
    %v3203 = vpop.f32.mrf.mxu0
    %v3204 = vadd.f32 %v2495, %v3203
    %v3205 = vpop.f32.mrf.mxu0
    %3206 = vdwg.mxu0
    %3207 = vmatpush.bf16.msra.mxu0 %v2947
    %3208 = vmatpush.bf16.msra.mxu0 %v2943
    %3209 = vmatpush.bf16.msra.mxu0 %v2939
    %3210 = vmatpush.bf16.msra.mxu0 %v2935
    %3211 = vmatpush.bf16.msra.mxu0 %v2931
    %3212 = vmatpush.bf16.msra.mxu0 %v2927
    %3213 = vmatpush.bf16.msra.mxu0 %v2923
    %3214 = vmatpush.bf16.msra.mxu0 %v2919
    %3215 = vmatmul.bf16.gmra.mxu0 %v2359
    %v3216 = vpop.f32.mrf.mxu0
    %v3217 = vadd.f32 %v3204, %v3216
    %v3218 = vpop.f32.mrf.mxu0
    %3219 = vdwg.mxu0
    %3220 = vmatpush.bf16.msra.mxu0 %v2979
    %3221 = vmatpush.bf16.msra.mxu0 %v2975
    %3222 = vmatpush.bf16.msra.mxu0 %v2971
    %3223 = vmatpush.bf16.msra.mxu0 %v2967
    %3224 = vmatpush.bf16.msra.mxu0 %v2963
    %3225 = vmatpush.bf16.msra.mxu0 %v2959
    %3226 = vmatpush.bf16.msra.mxu0 %v2955
    %3227 = vmatpush.bf16.msra.mxu0 %v2951
    %3228 = vmatmul.bf16.gmra.mxu0 %v2360
    %v3229 = vpop.f32.mrf.mxu0
    %v3230 = vadd.f32 %v3217, %v3229
    %v3231 = vpop.f32.mrf.mxu0
    %3232 = vdwg.mxu0
    %3233 = vmatpush.bf16.msra.mxu0 %v3011
    %3234 = vmatpush.bf16.msra.mxu0 %v3007
    %3235 = vmatpush.bf16.msra.mxu0 %v3003
    %3236 = vmatpush.bf16.msra.mxu0 %v2999
    %3237 = vmatpush.bf16.msra.mxu0 %v2995
    %3238 = vmatpush.bf16.msra.mxu0 %v2991
    %3239 = vmatpush.bf16.msra.mxu0 %v2987
    %3240 = vmatpush.bf16.msra.mxu0 %v2983
    %3241 = vmatmul.bf16.gmra.mxu0 %v2361
    %v3242 = vpop.f32.mrf.mxu0
    %v3243 = vadd.f32 %v3230, %v3242
    %v3244 = vpop.f32.mrf.mxu0
    %3245 = vdwg.mxu0
    %3246 = vmatpush.bf16.msra.mxu0 %v2916
    %3247 = vmatpush.bf16.msra.mxu0 %v2912
    %3248 = vmatpush.bf16.msra.mxu0 %v2908
    %3249 = vmatpush.bf16.msra.mxu0 %v2904
    %3250 = vmatpush.bf16.msra.mxu0 %v2900
    %3251 = vmatpush.bf16.msra.mxu0 %v2896
    %3252 = vmatpush.bf16.msra.mxu0 %v2892
    %3253 = vmatpush.bf16.msra.mxu0 %v2888
    %3254 = vmatmul.bf16.gmra.mxu0 %v2358
    %v3255 = vpop.f32.mrf.mxu0
    %v3256 = vadd.f32 %v2496, %v3255
    %v3257 = vpop.f32.mrf.mxu0
    %3258 = vdwg.mxu0
    %3259 = vmatpush.bf16.msra.mxu0 %v2948
    %3260 = vmatpush.bf16.msra.mxu0 %v2944
    %3261 = vmatpush.bf16.msra.mxu0 %v2940
    %3262 = vmatpush.bf16.msra.mxu0 %v2936
    %3263 = vmatpush.bf16.msra.mxu0 %v2932
    %3264 = vmatpush.bf16.msra.mxu0 %v2928
    %3265 = vmatpush.bf16.msra.mxu0 %v2924
    %3266 = vmatpush.bf16.msra.mxu0 %v2920
    %3267 = vmatmul.bf16.gmra.mxu0 %v2359
    %v3268 = vpop.f32.mrf.mxu0
    %v3269 = vadd.f32 %v3256, %v3268
    %v3270 = vpop.f32.mrf.mxu0
    %3271 = vdwg.mxu0
    %3272 = vmatpush.bf16.msra.mxu0 %v2980
    %3273 = vmatpush.bf16.msra.mxu0 %v2976
    %3274 = vmatpush.bf16.msra.mxu0 %v2972
    %3275 = vmatpush.bf16.msra.mxu0 %v2968
    %3276 = vmatpush.bf16.msra.mxu0 %v2964
    %3277 = vmatpush.bf16.msra.mxu0 %v2960
    %3278 = vmatpush.bf16.msra.mxu0 %v2956
    %3279 = vmatpush.bf16.msra.mxu0 %v2952
    %3280 = vmatmul.bf16.gmra.mxu0 %v2360
    %v3281 = vpop.f32.mrf.mxu0
    %v3282 = vadd.f32 %v3269, %v3281
    %v3283 = vpop.f32.mrf.mxu0
    %3284 = vdwg.mxu0
    %3285 = vmatpush.bf16.msra.mxu0 %v3012
    %3286 = vmatpush.bf16.msra.mxu0 %v3008
    %3287 = vmatpush.bf16.msra.mxu0 %v3004
    %3288 = vmatpush.bf16.msra.mxu0 %v3000
    %3289 = vmatpush.bf16.msra.mxu0 %v2996
    %3290 = vmatpush.bf16.msra.mxu0 %v2992
    %3291 = vmatpush.bf16.msra.mxu0 %v2988
    %3292 = vmatpush.bf16.msra.mxu0 %v2984
    %3293 = vmatmul.bf16.gmra.mxu0 %v2361
    %v3294 = vpop.f32.mrf.mxu0
    %v3295 = vadd.f32 %v3282, %v3294
    %v3296 = vpop.f32.mrf.mxu0
    %3297 = vdwg.mxu0
    %3298 = vmatpush.bf16.msra.mxu0 %v2917
    %3299 = vmatpush.bf16.msra.mxu0 %v2913
    %3300 = vmatpush.bf16.msra.mxu0 %v2909
    %3301 = vmatpush.bf16.msra.mxu0 %v2905
    %3302 = vmatpush.bf16.msra.mxu0 %v2901
    %3303 = vmatpush.bf16.msra.mxu0 %v2897
    %3304 = vmatpush.bf16.msra.mxu0 %v2893
    %3305 = vmatpush.bf16.msra.mxu0 %v2889
    %3306 = vmatmul.bf16.gmra.mxu0 %v2358
    %v3307 = vpop.f32.mrf.mxu0
    %v3308 = vadd.f32 %v2497, %v3307
    %v3309 = vpop.f32.mrf.mxu0
    %3310 = vdwg.mxu0
    %3311 = vmatpush.bf16.msra.mxu0 %v2949
    %3312 = vmatpush.bf16.msra.mxu0 %v2945
    %3313 = vmatpush.bf16.msra.mxu0 %v2941
    %3314 = vmatpush.bf16.msra.mxu0 %v2937
    %3315 = vmatpush.bf16.msra.mxu0 %v2933
    %3316 = vmatpush.bf16.msra.mxu0 %v2929
    %3317 = vmatpush.bf16.msra.mxu0 %v2925
    %3318 = vmatpush.bf16.msra.mxu0 %v2921
    %3319 = vmatmul.bf16.gmra.mxu0 %v2359
    %v3320 = vpop.f32.mrf.mxu0
    %v3321 = vadd.f32 %v3308, %v3320
    %v3322 = vpop.f32.mrf.mxu0
    %3323 = vdwg.mxu0
    %3324 = vmatpush.bf16.msra.mxu0 %v2981
    %3325 = vmatpush.bf16.msra.mxu0 %v2977
    %3326 = vmatpush.bf16.msra.mxu0 %v2973
    %3327 = vmatpush.bf16.msra.mxu0 %v2969
    %3328 = vmatpush.bf16.msra.mxu0 %v2965
    %3329 = vmatpush.bf16.msra.mxu0 %v2961
    %3330 = vmatpush.bf16.msra.mxu0 %v2957
    %3331 = vmatpush.bf16.msra.mxu0 %v2953
    %3332 = vmatmul.bf16.gmra.mxu0 %v2360
    %v3333 = vpop.f32.mrf.mxu0
    %v3334 = vadd.f32 %v3321, %v3333
    %v3335 = vpop.f32.mrf.mxu0
    %3336 = vdwg.mxu0
    %3337 = vmatpush.bf16.msra.mxu0 %v3013
    %3338 = vmatpush.bf16.msra.mxu0 %v3009
    %3339 = vmatpush.bf16.msra.mxu0 %v3005
    %3340 = vmatpush.bf16.msra.mxu0 %v3001
    %3341 = vmatpush.bf16.msra.mxu0 %v2997
    %3342 = vmatpush.bf16.msra.mxu0 %v2993
    %3343 = vmatpush.bf16.msra.mxu0 %v2989
    %3344 = vmatpush.bf16.msra.mxu0 %v2985
    %3345 = vmatmul.bf16.gmra.mxu0 %v2361
    %v3346 = vpop.f32.mrf.mxu0
    %v3347 = vadd.f32 %v3334, %v3346
    %v3348 = vpop.f32.mrf.mxu0
    %3349 = vdwg.mxu0
    %v3350 = vmax.f32 %v3191, 0.0
    %v3351 = vmax.f32 %v3243, 0.0
    %v3352 = vmax.f32 %v3295, 0.0
    %v3353 = vmax.f32 %v3347, 0.0
    %v3354 = vpack.c.bf16 %v3350, %v3350
    %v3355 = vpack.c.bf16 %v3351, %v3351
    %v3356 = vpack.c.bf16 %v3352, %v3352
    %v3357 = vpack.c.bf16 %v3353, %v3353
    %s3358 = scalar_lea.vmem [#allocation13], 2048
    %v3359 = vld [vmem:[%s3358] sm:$0xff]
    %v3360 = vld [vmem:[%s3358 + $0x8] sm:$0xff]
    %v3361 = vld [vmem:[%s3358 + $0x10] sm:$0xff]
    %v3362 = vld [vmem:[%s3358 + $0x18] sm:$0xff]
    %v3363 = vld [vmem:[%s3358 + $0x20] sm:$0xff]
    %v3364 = vld [vmem:[%s3358 + $0x28] sm:$0xff]
    %v3365 = vld [vmem:[%s3358 + $0x30] sm:$0xff]
    %v3366 = vld [vmem:[%s3358 + $0x38] sm:$0xff]
    %v3367 = vld [vmem:[%s3358 + $0x40] sm:$0xff]
    %v3368 = vld [vmem:[%s3358 + $0x48] sm:$0xff]
    %v3369 = vld [vmem:[%s3358 + $0x50] sm:$0xff]
    %v3370 = vld [vmem:[%s3358 + $0x58] sm:$0xff]
    %v3371 = vld [vmem:[%s3358 + $0x60] sm:$0xff]
    %v3372 = vld [vmem:[%s3358 + $0x68] sm:$0xff]
    %v3373 = vld [vmem:[%s3358 + $0x70] sm:$0xff]
    %v3374 = vld [vmem:[%s3358 + $0x78] sm:$0xff]
    %v3375 = vld [vmem:[%s3358 + $0x80] sm:$0xff]
    %v3376 = vld [vmem:[%s3358 + $0x88] sm:$0xff]
    %v3377 = vld [vmem:[%s3358 + $0x90] sm:$0xff]
    %v3378 = vld [vmem:[%s3358 + $0x98] sm:$0xff]
    %v3379 = vld [vmem:[%s3358 + $0xa0] sm:$0xff]
    %v3380 = vld [vmem:[%s3358 + $0xa8] sm:$0xff]
    %v3381 = vld [vmem:[%s3358 + $0xb0] sm:$0xff]
    %v3382 = vld [vmem:[%s3358 + $0xb8] sm:$0xff]
    %v3383 = vld [vmem:[%s3358 + $0xc0] sm:$0xff]
    %v3384 = vld [vmem:[%s3358 + $0xc8] sm:$0xff]
    %v3385 = vld [vmem:[%s3358 + $0xd0] sm:$0xff]
    %v3386 = vld [vmem:[%s3358 + $0xd8] sm:$0xff]
    %v3387 = vld [vmem:[%s3358 + $0xe0] sm:$0xff]
    %v3388 = vld [vmem:[%s3358 + $0xe8] sm:$0xff]
    %v3389 = vld [vmem:[%s3358 + $0xf0] sm:$0xff]
    %v3390 = vld [vmem:[%s3358 + $0xf8] sm:$0xff]
    %v3391 = vld [vmem:[%s3358 + $0x100] sm:$0xff]
    %v3392 = vld [vmem:[%s3358 + $0x108] sm:$0xff]
    %v3393 = vld [vmem:[%s3358 + $0x110] sm:$0xff]
    %v3394 = vld [vmem:[%s3358 + $0x118] sm:$0xff]
    %v3395 = vld [vmem:[%s3358 + $0x120] sm:$0xff]
    %v3396 = vld [vmem:[%s3358 + $0x128] sm:$0xff]
    %v3397 = vld [vmem:[%s3358 + $0x130] sm:$0xff]
    %v3398 = vld [vmem:[%s3358 + $0x138] sm:$0xff]
    %v3399 = vld [vmem:[%s3358 + $0x140] sm:$0xff]
    %v3400 = vld [vmem:[%s3358 + $0x148] sm:$0xff]
    %v3401 = vld [vmem:[%s3358 + $0x150] sm:$0xff]
    %v3402 = vld [vmem:[%s3358 + $0x158] sm:$0xff]
    %v3403 = vld [vmem:[%s3358 + $0x160] sm:$0xff]
    %v3404 = vld [vmem:[%s3358 + $0x168] sm:$0xff]
    %v3405 = vld [vmem:[%s3358 + $0x170] sm:$0xff]
    %v3406 = vld [vmem:[%s3358 + $0x178] sm:$0xff]
    %v3407 = vld [vmem:[%s3358 + $0x180] sm:$0xff]
    %v3408 = vld [vmem:[%s3358 + $0x188] sm:$0xff]
    %v3409 = vld [vmem:[%s3358 + $0x190] sm:$0xff]
    %v3410 = vld [vmem:[%s3358 + $0x198] sm:$0xff]
    %v3411 = vld [vmem:[%s3358 + $0x1a0] sm:$0xff]
    %v3412 = vld [vmem:[%s3358 + $0x1a8] sm:$0xff]
    %v3413 = vld [vmem:[%s3358 + $0x1b0] sm:$0xff]
    %v3414 = vld [vmem:[%s3358 + $0x1b8] sm:$0xff]
    %v3415 = vld [vmem:[%s3358 + $0x1c0] sm:$0xff]
    %v3416 = vld [vmem:[%s3358 + $0x1c8] sm:$0xff]
    %v3417 = vld [vmem:[%s3358 + $0x1d0] sm:$0xff]
    %v3418 = vld [vmem:[%s3358 + $0x1d8] sm:$0xff]
    %v3419 = vld [vmem:[%s3358 + $0x1e0] sm:$0xff]
    %v3420 = vld [vmem:[%s3358 + $0x1e8] sm:$0xff]
    %v3421 = vld [vmem:[%s3358 + $0x1f0] sm:$0xff]
    %v3422 = vld [vmem:[%s3358 + $0x1f8] sm:$0xff]
    %v3423 = vld [vmem:[%s3358 + $0x200] sm:$0xff]
    %v3424 = vld [vmem:[%s3358 + $0x208] sm:$0xff]
    %v3425 = vld [vmem:[%s3358 + $0x210] sm:$0xff]
    %v3426 = vld [vmem:[%s3358 + $0x218] sm:$0xff]
    %v3427 = vld [vmem:[%s3358 + $0x220] sm:$0xff]
    %v3428 = vld [vmem:[%s3358 + $0x228] sm:$0xff]
    %v3429 = vld [vmem:[%s3358 + $0x230] sm:$0xff]
    %v3430 = vld [vmem:[%s3358 + $0x238] sm:$0xff]
    %v3431 = vld [vmem:[%s3358 + $0x240] sm:$0xff]
    %v3432 = vld [vmem:[%s3358 + $0x248] sm:$0xff]
    %v3433 = vld [vmem:[%s3358 + $0x250] sm:$0xff]
    %v3434 = vld [vmem:[%s3358 + $0x258] sm:$0xff]
    %v3435 = vld [vmem:[%s3358 + $0x260] sm:$0xff]
    %v3436 = vld [vmem:[%s3358 + $0x268] sm:$0xff]
    %v3437 = vld [vmem:[%s3358 + $0x270] sm:$0xff]
    %v3438 = vld [vmem:[%s3358 + $0x278] sm:$0xff]
    %v3439 = vld [vmem:[%s3358 + $0x280] sm:$0xff]
    %v3440 = vld [vmem:[%s3358 + $0x288] sm:$0xff]
    %v3441 = vld [vmem:[%s3358 + $0x290] sm:$0xff]
    %v3442 = vld [vmem:[%s3358 + $0x298] sm:$0xff]
    %v3443 = vld [vmem:[%s3358 + $0x2a0] sm:$0xff]
    %v3444 = vld [vmem:[%s3358 + $0x2a8] sm:$0xff]
    %v3445 = vld [vmem:[%s3358 + $0x2b0] sm:$0xff]
    %v3446 = vld [vmem:[%s3358 + $0x2b8] sm:$0xff]
    %v3447 = vld [vmem:[%s3358 + $0x2c0] sm:$0xff]
    %v3448 = vld [vmem:[%s3358 + $0x2c8] sm:$0xff]
    %v3449 = vld [vmem:[%s3358 + $0x2d0] sm:$0xff]
    %v3450 = vld [vmem:[%s3358 + $0x2d8] sm:$0xff]
    %v3451 = vld [vmem:[%s3358 + $0x2e0] sm:$0xff]
    %v3452 = vld [vmem:[%s3358 + $0x2e8] sm:$0xff]
    %v3453 = vld [vmem:[%s3358 + $0x2f0] sm:$0xff]
    %v3454 = vld [vmem:[%s3358 + $0x2f8] sm:$0xff]
    %v3455 = vld [vmem:[%s3358 + $0x300] sm:$0xff]
    %v3456 = vld [vmem:[%s3358 + $0x308] sm:$0xff]
    %v3457 = vld [vmem:[%s3358 + $0x310] sm:$0xff]
    %v3458 = vld [vmem:[%s3358 + $0x318] sm:$0xff]
    %v3459 = vld [vmem:[%s3358 + $0x320] sm:$0xff]
    %v3460 = vld [vmem:[%s3358 + $0x328] sm:$0xff]
    %v3461 = vld [vmem:[%s3358 + $0x330] sm:$0xff]
    %v3462 = vld [vmem:[%s3358 + $0x338] sm:$0xff]
    %v3463 = vld [vmem:[%s3358 + $0x340] sm:$0xff]
    %v3464 = vld [vmem:[%s3358 + $0x348] sm:$0xff]
    %v3465 = vld [vmem:[%s3358 + $0x350] sm:$0xff]
    %v3466 = vld [vmem:[%s3358 + $0x358] sm:$0xff]
    %v3467 = vld [vmem:[%s3358 + $0x360] sm:$0xff]
    %v3468 = vld [vmem:[%s3358 + $0x368] sm:$0xff]
    %v3469 = vld [vmem:[%s3358 + $0x370] sm:$0xff]
    %v3470 = vld [vmem:[%s3358 + $0x378] sm:$0xff]
    %v3471 = vld [vmem:[%s3358 + $0x380] sm:$0xff]
    %v3472 = vld [vmem:[%s3358 + $0x388] sm:$0xff]
    %v3473 = vld [vmem:[%s3358 + $0x390] sm:$0xff]
    %v3474 = vld [vmem:[%s3358 + $0x398] sm:$0xff]
    %v3475 = vld [vmem:[%s3358 + $0x3a0] sm:$0xff]
    %v3476 = vld [vmem:[%s3358 + $0x3a8] sm:$0xff]
    %v3477 = vld [vmem:[%s3358 + $0x3b0] sm:$0xff]
    %v3478 = vld [vmem:[%s3358 + $0x3b8] sm:$0xff]
    %v3479 = vld [vmem:[%s3358 + $0x3c0] sm:$0xff]
    %v3480 = vld [vmem:[%s3358 + $0x3c8] sm:$0xff]
    %v3481 = vld [vmem:[%s3358 + $0x3d0] sm:$0xff]
    %v3482 = vld [vmem:[%s3358 + $0x3d8] sm:$0xff]
    %v3483 = vld [vmem:[%s3358 + $0x3e0] sm:$0xff]
    %v3484 = vld [vmem:[%s3358 + $0x3e8] sm:$0xff]
    %v3485 = vld [vmem:[%s3358 + $0x3f0] sm:$0xff]
    %v3486 = vld [vmem:[%s3358 + $0x3f8] sm:$0xff]
    %s3487 = scalar_lea.vmem [#allocation14], 8
    %v3488 = vld [vmem:[%s3487] sm:$0xf]
    %v3490 = vperm.slane %v3488, 0
    %v3491 = vperm.slane %v3488, 1
    %v3492 = vperm.slane %v3488, 2
    %v3493 = vperm.slane %v3488, 3
    %v3626 = vunpack.c.l.b16 %v3359
    %v3627 = vunpack.c.h.b16 %v3359
    %v3628 = vunpack.c.l.b16 %v3360
    %v3629 = vunpack.c.h.b16 %v3360
    %v3630 = vunpack.c.l.b16 %v3361
    %v3631 = vunpack.c.h.b16 %v3361
    %v3632 = vunpack.c.l.b16 %v3362
    %v3633 = vunpack.c.h.b16 %v3362
    %v3634 = vunpack.c.l.b16 %v3363
    %v3635 = vunpack.c.h.b16 %v3363
    %v3636 = vunpack.c.l.b16 %v3364
    %v3637 = vunpack.c.h.b16 %v3364
    %v3638 = vunpack.c.l.b16 %v3365
    %v3639 = vunpack.c.h.b16 %v3365
    %v3640 = vunpack.c.l.b16 %v3366
    %v3641 = vunpack.c.h.b16 %v3366
    %v3642 = vunpack.c.l.b16 %v3367
    %v3643 = vunpack.c.h.b16 %v3367
    %v3644 = vunpack.c.l.b16 %v3368
    %v3645 = vunpack.c.h.b16 %v3368
    %v3646 = vunpack.c.l.b16 %v3369
    %v3647 = vunpack.c.h.b16 %v3369
    %v3648 = vunpack.c.l.b16 %v3370
    %v3649 = vunpack.c.h.b16 %v3370
    %v3650 = vunpack.c.l.b16 %v3371
    %v3651 = vunpack.c.h.b16 %v3371
    %v3652 = vunpack.c.l.b16 %v3372
    %v3653 = vunpack.c.h.b16 %v3372
    %v3654 = vunpack.c.l.b16 %v3373
    %v3655 = vunpack.c.h.b16 %v3373
    %v3656 = vunpack.c.l.b16 %v3374
    %v3657 = vunpack.c.h.b16 %v3374
    %v3658 = vunpack.c.l.b16 %v3375
    %v3659 = vunpack.c.h.b16 %v3375
    %v3660 = vunpack.c.l.b16 %v3376
    %v3661 = vunpack.c.h.b16 %v3376
    %v3662 = vunpack.c.l.b16 %v3377
    %v3663 = vunpack.c.h.b16 %v3377
    %v3664 = vunpack.c.l.b16 %v3378
    %v3665 = vunpack.c.h.b16 %v3378
    %v3666 = vunpack.c.l.b16 %v3379
    %v3667 = vunpack.c.h.b16 %v3379
    %v3668 = vunpack.c.l.b16 %v3380
    %v3669 = vunpack.c.h.b16 %v3380
    %v3670 = vunpack.c.l.b16 %v3381
    %v3671 = vunpack.c.h.b16 %v3381
    %v3672 = vunpack.c.l.b16 %v3382
    %v3673 = vunpack.c.h.b16 %v3382
    %v3674 = vunpack.c.l.b16 %v3383
    %v3675 = vunpack.c.h.b16 %v3383
    %v3676 = vunpack.c.l.b16 %v3384
    %v3677 = vunpack.c.h.b16 %v3384
    %v3678 = vunpack.c.l.b16 %v3385
    %v3679 = vunpack.c.h.b16 %v3385
    %v3680 = vunpack.c.l.b16 %v3386
    %v3681 = vunpack.c.h.b16 %v3386
    %v3682 = vunpack.c.l.b16 %v3387
    %v3683 = vunpack.c.h.b16 %v3387
    %v3684 = vunpack.c.l.b16 %v3388
    %v3685 = vunpack.c.h.b16 %v3388
    %v3686 = vunpack.c.l.b16 %v3389
    %v3687 = vunpack.c.h.b16 %v3389
    %v3688 = vunpack.c.l.b16 %v3390
    %v3689 = vunpack.c.h.b16 %v3390
    %v3690 = vunpack.c.l.b16 %v3391
    %v3691 = vunpack.c.h.b16 %v3391
    %v3692 = vunpack.c.l.b16 %v3392
    %v3693 = vunpack.c.h.b16 %v3392
    %v3694 = vunpack.c.l.b16 %v3393
    %v3695 = vunpack.c.h.b16 %v3393
    %v3696 = vunpack.c.l.b16 %v3394
    %v3697 = vunpack.c.h.b16 %v3394
    %v3698 = vunpack.c.l.b16 %v3395
    %v3699 = vunpack.c.h.b16 %v3395
    %v3700 = vunpack.c.l.b16 %v3396
    %v3701 = vunpack.c.h.b16 %v3396
    %v3702 = vunpack.c.l.b16 %v3397
    %v3703 = vunpack.c.h.b16 %v3397
    %v3704 = vunpack.c.l.b16 %v3398
    %v3705 = vunpack.c.h.b16 %v3398
    %v3706 = vunpack.c.l.b16 %v3399
    %v3707 = vunpack.c.h.b16 %v3399
    %v3708 = vunpack.c.l.b16 %v3400
    %v3709 = vunpack.c.h.b16 %v3400
    %v3710 = vunpack.c.l.b16 %v3401
    %v3711 = vunpack.c.h.b16 %v3401
    %v3712 = vunpack.c.l.b16 %v3402
    %v3713 = vunpack.c.h.b16 %v3402
    %v3714 = vunpack.c.l.b16 %v3403
    %v3715 = vunpack.c.h.b16 %v3403
    %v3716 = vunpack.c.l.b16 %v3404
    %v3717 = vunpack.c.h.b16 %v3404
    %v3718 = vunpack.c.l.b16 %v3405
    %v3719 = vunpack.c.h.b16 %v3405
    %v3720 = vunpack.c.l.b16 %v3406
    %v3721 = vunpack.c.h.b16 %v3406
    %v3722 = vunpack.c.l.b16 %v3407
    %v3723 = vunpack.c.h.b16 %v3407
    %v3724 = vunpack.c.l.b16 %v3408
    %v3725 = vunpack.c.h.b16 %v3408
    %v3726 = vunpack.c.l.b16 %v3409
    %v3727 = vunpack.c.h.b16 %v3409
    %v3728 = vunpack.c.l.b16 %v3410
    %v3729 = vunpack.c.h.b16 %v3410
    %v3730 = vunpack.c.l.b16 %v3411
    %v3731 = vunpack.c.h.b16 %v3411
    %v3732 = vunpack.c.l.b16 %v3412
    %v3733 = vunpack.c.h.b16 %v3412
    %v3734 = vunpack.c.l.b16 %v3413
    %v3735 = vunpack.c.h.b16 %v3413
    %v3736 = vunpack.c.l.b16 %v3414
    %v3737 = vunpack.c.h.b16 %v3414
    %v3738 = vunpack.c.l.b16 %v3415
    %v3739 = vunpack.c.h.b16 %v3415
    %v3740 = vunpack.c.l.b16 %v3416
    %v3741 = vunpack.c.h.b16 %v3416
    %v3742 = vunpack.c.l.b16 %v3417
    %v3743 = vunpack.c.h.b16 %v3417
    %v3744 = vunpack.c.l.b16 %v3418
    %v3745 = vunpack.c.h.b16 %v3418
    %v3746 = vunpack.c.l.b16 %v3419
    %v3747 = vunpack.c.h.b16 %v3419
    %v3748 = vunpack.c.l.b16 %v3420
    %v3749 = vunpack.c.h.b16 %v3420
    %v3750 = vunpack.c.l.b16 %v3421
    %v3751 = vunpack.c.h.b16 %v3421
    %v3752 = vunpack.c.l.b16 %v3422
    %v3753 = vunpack.c.h.b16 %v3422
    %v3754 = vunpack.c.l.b16 %v3423
    %v3755 = vunpack.c.h.b16 %v3423
    %v3756 = vunpack.c.l.b16 %v3424
    %v3757 = vunpack.c.h.b16 %v3424
    %v3758 = vunpack.c.l.b16 %v3425
    %v3759 = vunpack.c.h.b16 %v3425
    %v3760 = vunpack.c.l.b16 %v3426
    %v3761 = vunpack.c.h.b16 %v3426
    %v3762 = vunpack.c.l.b16 %v3427
    %v3763 = vunpack.c.h.b16 %v3427
    %v3764 = vunpack.c.l.b16 %v3428
    %v3765 = vunpack.c.h.b16 %v3428
    %v3766 = vunpack.c.l.b16 %v3429
    %v3767 = vunpack.c.h.b16 %v3429
    %v3768 = vunpack.c.l.b16 %v3430
    %v3769 = vunpack.c.h.b16 %v3430
    %v3770 = vunpack.c.l.b16 %v3431
    %v3771 = vunpack.c.h.b16 %v3431
    %v3772 = vunpack.c.l.b16 %v3432
    %v3773 = vunpack.c.h.b16 %v3432
    %v3774 = vunpack.c.l.b16 %v3433
    %v3775 = vunpack.c.h.b16 %v3433
    %v3776 = vunpack.c.l.b16 %v3434
    %v3777 = vunpack.c.h.b16 %v3434
    %v3778 = vunpack.c.l.b16 %v3435
    %v3779 = vunpack.c.h.b16 %v3435
    %v3780 = vunpack.c.l.b16 %v3436
    %v3781 = vunpack.c.h.b16 %v3436
    %v3782 = vunpack.c.l.b16 %v3437
    %v3783 = vunpack.c.h.b16 %v3437
    %v3784 = vunpack.c.l.b16 %v3438
    %v3785 = vunpack.c.h.b16 %v3438
    %v3786 = vunpack.c.l.b16 %v3439
    %v3787 = vunpack.c.h.b16 %v3439
    %v3788 = vunpack.c.l.b16 %v3440
    %v3789 = vunpack.c.h.b16 %v3440
    %v3790 = vunpack.c.l.b16 %v3441
    %v3791 = vunpack.c.h.b16 %v3441
    %v3792 = vunpack.c.l.b16 %v3442
    %v3793 = vunpack.c.h.b16 %v3442
    %v3794 = vunpack.c.l.b16 %v3443
    %v3795 = vunpack.c.h.b16 %v3443
    %v3796 = vunpack.c.l.b16 %v3444
    %v3797 = vunpack.c.h.b16 %v3444
    %v3798 = vunpack.c.l.b16 %v3445
    %v3799 = vunpack.c.h.b16 %v3445
    %v3800 = vunpack.c.l.b16 %v3446
    %v3801 = vunpack.c.h.b16 %v3446
    %v3802 = vunpack.c.l.b16 %v3447
    %v3803 = vunpack.c.h.b16 %v3447
    %v3804 = vunpack.c.l.b16 %v3448
    %v3805 = vunpack.c.h.b16 %v3448
    %v3806 = vunpack.c.l.b16 %v3449
    %v3807 = vunpack.c.h.b16 %v3449
    %v3808 = vunpack.c.l.b16 %v3450
    %v3809 = vunpack.c.h.b16 %v3450
    %v3810 = vunpack.c.l.b16 %v3451
    %v3811 = vunpack.c.h.b16 %v3451
    %v3812 = vunpack.c.l.b16 %v3452
    %v3813 = vunpack.c.h.b16 %v3452
    %v3814 = vunpack.c.l.b16 %v3453
    %v3815 = vunpack.c.h.b16 %v3453
    %v3816 = vunpack.c.l.b16 %v3454
    %v3817 = vunpack.c.h.b16 %v3454
    %v3818 = vunpack.c.l.b16 %v3455
    %v3819 = vunpack.c.h.b16 %v3455
    %v3820 = vunpack.c.l.b16 %v3456
    %v3821 = vunpack.c.h.b16 %v3456
    %v3822 = vunpack.c.l.b16 %v3457
    %v3823 = vunpack.c.h.b16 %v3457
    %v3824 = vunpack.c.l.b16 %v3458
    %v3825 = vunpack.c.h.b16 %v3458
    %v3826 = vunpack.c.l.b16 %v3459
    %v3827 = vunpack.c.h.b16 %v3459
    %v3828 = vunpack.c.l.b16 %v3460
    %v3829 = vunpack.c.h.b16 %v3460
    %v3830 = vunpack.c.l.b16 %v3461
    %v3831 = vunpack.c.h.b16 %v3461
    %v3832 = vunpack.c.l.b16 %v3462
    %v3833 = vunpack.c.h.b16 %v3462
    %v3834 = vunpack.c.l.b16 %v3463
    %v3835 = vunpack.c.h.b16 %v3463
    %v3836 = vunpack.c.l.b16 %v3464
    %v3837 = vunpack.c.h.b16 %v3464
    %v3838 = vunpack.c.l.b16 %v3465
    %v3839 = vunpack.c.h.b16 %v3465
    %v3840 = vunpack.c.l.b16 %v3466
    %v3841 = vunpack.c.h.b16 %v3466
    %v3842 = vunpack.c.l.b16 %v3467
    %v3843 = vunpack.c.h.b16 %v3467
    %v3844 = vunpack.c.l.b16 %v3468
    %v3845 = vunpack.c.h.b16 %v3468
    %v3846 = vunpack.c.l.b16 %v3469
    %v3847 = vunpack.c.h.b16 %v3469
    %v3848 = vunpack.c.l.b16 %v3470
    %v3849 = vunpack.c.h.b16 %v3470
    %v3850 = vunpack.c.l.b16 %v3471
    %v3851 = vunpack.c.h.b16 %v3471
    %v3852 = vunpack.c.l.b16 %v3472
    %v3853 = vunpack.c.h.b16 %v3472
    %v3854 = vunpack.c.l.b16 %v3473
    %v3855 = vunpack.c.h.b16 %v3473
    %v3856 = vunpack.c.l.b16 %v3474
    %v3857 = vunpack.c.h.b16 %v3474
    %v3858 = vunpack.c.l.b16 %v3475
    %v3859 = vunpack.c.h.b16 %v3475
    %v3860 = vunpack.c.l.b16 %v3476
    %v3861 = vunpack.c.h.b16 %v3476
    %v3862 = vunpack.c.l.b16 %v3477
    %v3863 = vunpack.c.h.b16 %v3477
    %v3864 = vunpack.c.l.b16 %v3478
    %v3865 = vunpack.c.h.b16 %v3478
    %v3866 = vunpack.c.l.b16 %v3479
    %v3867 = vunpack.c.h.b16 %v3479
    %v3868 = vunpack.c.l.b16 %v3480
    %v3869 = vunpack.c.h.b16 %v3480
    %v3870 = vunpack.c.l.b16 %v3481
    %v3871 = vunpack.c.h.b16 %v3481
    %v3872 = vunpack.c.l.b16 %v3482
    %v3873 = vunpack.c.h.b16 %v3482
    %v3874 = vunpack.c.l.b16 %v3483
    %v3875 = vunpack.c.h.b16 %v3483
    %v3876 = vunpack.c.l.b16 %v3484
    %v3877 = vunpack.c.h.b16 %v3484
    %v3878 = vunpack.c.l.b16 %v3485
    %v3879 = vunpack.c.h.b16 %v3485
    %v3880 = vunpack.c.l.b16 %v3486
    %v3881 = vunpack.c.h.b16 %v3486
    %v3882 = vpack.c.b16 %v3630, %v3626
    %v3883 = vpack.c.b16 %v3631, %v3627
    %v3884 = vpack.c.b16 %v3632, %v3628
    %v3885 = vpack.c.b16 %v3633, %v3629
    %v3886 = vpack.c.b16 %v3638, %v3634
    %v3887 = vpack.c.b16 %v3639, %v3635
    %v3888 = vpack.c.b16 %v3640, %v3636
    %v3889 = vpack.c.b16 %v3641, %v3637
    %v3890 = vpack.c.b16 %v3646, %v3642
    %v3891 = vpack.c.b16 %v3647, %v3643
    %v3892 = vpack.c.b16 %v3648, %v3644
    %v3893 = vpack.c.b16 %v3649, %v3645
    %v3894 = vpack.c.b16 %v3654, %v3650
    %v3895 = vpack.c.b16 %v3655, %v3651
    %v3896 = vpack.c.b16 %v3656, %v3652
    %v3897 = vpack.c.b16 %v3657, %v3653
    %v3898 = vpack.c.b16 %v3662, %v3658
    %v3899 = vpack.c.b16 %v3663, %v3659
    %v3900 = vpack.c.b16 %v3664, %v3660
    %v3901 = vpack.c.b16 %v3665, %v3661
    %v3902 = vpack.c.b16 %v3670, %v3666
    %v3903 = vpack.c.b16 %v3671, %v3667
    %v3904 = vpack.c.b16 %v3672, %v3668
    %v3905 = vpack.c.b16 %v3673, %v3669
    %v3906 = vpack.c.b16 %v3678, %v3674
    %v3907 = vpack.c.b16 %v3679, %v3675
    %v3908 = vpack.c.b16 %v3680, %v3676
    %v3909 = vpack.c.b16 %v3681, %v3677
    %v3910 = vpack.c.b16 %v3686, %v3682
    %v3911 = vpack.c.b16 %v3687, %v3683
    %v3912 = vpack.c.b16 %v3688, %v3684
    %v3913 = vpack.c.b16 %v3689, %v3685
    %v3914 = vpack.c.b16 %v3694, %v3690
    %v3915 = vpack.c.b16 %v3695, %v3691
    %v3916 = vpack.c.b16 %v3696, %v3692
    %v3917 = vpack.c.b16 %v3697, %v3693
    %v3918 = vpack.c.b16 %v3702, %v3698
    %v3919 = vpack.c.b16 %v3703, %v3699
    %v3920 = vpack.c.b16 %v3704, %v3700
    %v3921 = vpack.c.b16 %v3705, %v3701
    %v3922 = vpack.c.b16 %v3710, %v3706
    %v3923 = vpack.c.b16 %v3711, %v3707
    %v3924 = vpack.c.b16 %v3712, %v3708
    %v3925 = vpack.c.b16 %v3713, %v3709
    %v3926 = vpack.c.b16 %v3718, %v3714
    %v3927 = vpack.c.b16 %v3719, %v3715
    %v3928 = vpack.c.b16 %v3720, %v3716
    %v3929 = vpack.c.b16 %v3721, %v3717
    %v3930 = vpack.c.b16 %v3726, %v3722
    %v3931 = vpack.c.b16 %v3727, %v3723
    %v3932 = vpack.c.b16 %v3728, %v3724
    %v3933 = vpack.c.b16 %v3729, %v3725
    %v3934 = vpack.c.b16 %v3734, %v3730
    %v3935 = vpack.c.b16 %v3735, %v3731
    %v3936 = vpack.c.b16 %v3736, %v3732
    %v3937 = vpack.c.b16 %v3737, %v3733
    %v3938 = vpack.c.b16 %v3742, %v3738
    %v3939 = vpack.c.b16 %v3743, %v3739
    %v3940 = vpack.c.b16 %v3744, %v3740
    %v3941 = vpack.c.b16 %v3745, %v3741
    %v3942 = vpack.c.b16 %v3750, %v3746
    %v3943 = vpack.c.b16 %v3751, %v3747
    %v3944 = vpack.c.b16 %v3752, %v3748
    %v3945 = vpack.c.b16 %v3753, %v3749
    %v3946 = vpack.c.b16 %v3758, %v3754
    %v3947 = vpack.c.b16 %v3759, %v3755
    %v3948 = vpack.c.b16 %v3760, %v3756
    %v3949 = vpack.c.b16 %v3761, %v3757
    %v3950 = vpack.c.b16 %v3766, %v3762
    %v3951 = vpack.c.b16 %v3767, %v3763
    %v3952 = vpack.c.b16 %v3768, %v3764
    %v3953 = vpack.c.b16 %v3769, %v3765
    %v3954 = vpack.c.b16 %v3774, %v3770
    %v3955 = vpack.c.b16 %v3775, %v3771
    %v3956 = vpack.c.b16 %v3776, %v3772
    %v3957 = vpack.c.b16 %v3777, %v3773
    %v3958 = vpack.c.b16 %v3782, %v3778
    %v3959 = vpack.c.b16 %v3783, %v3779
    %v3960 = vpack.c.b16 %v3784, %v3780
    %v3961 = vpack.c.b16 %v3785, %v3781
    %v3962 = vpack.c.b16 %v3790, %v3786
    %v3963 = vpack.c.b16 %v3791, %v3787
    %v3964 = vpack.c.b16 %v3792, %v3788
    %v3965 = vpack.c.b16 %v3793, %v3789
    %v3966 = vpack.c.b16 %v3798, %v3794
    %v3967 = vpack.c.b16 %v3799, %v3795
    %v3968 = vpack.c.b16 %v3800, %v3796
    %v3969 = vpack.c.b16 %v3801, %v3797
    %v3970 = vpack.c.b16 %v3806, %v3802
    %v3971 = vpack.c.b16 %v3807, %v3803
    %v3972 = vpack.c.b16 %v3808, %v3804
    %v3973 = vpack.c.b16 %v3809, %v3805
    %v3974 = vpack.c.b16 %v3814, %v3810
    %v3975 = vpack.c.b16 %v3815, %v3811
    %v3976 = vpack.c.b16 %v3816, %v3812
    %v3977 = vpack.c.b16 %v3817, %v3813
    %v3978 = vpack.c.b16 %v3822, %v3818
    %v3979 = vpack.c.b16 %v3823, %v3819
    %v3980 = vpack.c.b16 %v3824, %v3820
    %v3981 = vpack.c.b16 %v3825, %v3821
    %v3982 = vpack.c.b16 %v3830, %v3826
    %v3983 = vpack.c.b16 %v3831, %v3827
    %v3984 = vpack.c.b16 %v3832, %v3828
    %v3985 = vpack.c.b16 %v3833, %v3829
    %v3986 = vpack.c.b16 %v3838, %v3834
    %v3987 = vpack.c.b16 %v3839, %v3835
    %v3988 = vpack.c.b16 %v3840, %v3836
    %v3989 = vpack.c.b16 %v3841, %v3837
    %v3990 = vpack.c.b16 %v3846, %v3842
    %v3991 = vpack.c.b16 %v3847, %v3843
    %v3992 = vpack.c.b16 %v3848, %v3844
    %v3993 = vpack.c.b16 %v3849, %v3845
    %v3994 = vpack.c.b16 %v3854, %v3850
    %v3995 = vpack.c.b16 %v3855, %v3851
    %v3996 = vpack.c.b16 %v3856, %v3852
    %v3997 = vpack.c.b16 %v3857, %v3853
    %v3998 = vpack.c.b16 %v3862, %v3858
    %v3999 = vpack.c.b16 %v3863, %v3859
    %v4000 = vpack.c.b16 %v3864, %v3860
    %v4001 = vpack.c.b16 %v3865, %v3861
    %v4002 = vpack.c.b16 %v3870, %v3866
    %v4003 = vpack.c.b16 %v3871, %v3867
    %v4004 = vpack.c.b16 %v3872, %v3868
    %v4005 = vpack.c.b16 %v3873, %v3869
    %v4006 = vpack.c.b16 %v3878, %v3874
    %v4007 = vpack.c.b16 %v3879, %v3875
    %v4008 = vpack.c.b16 %v3880, %v3876
    %v4009 = vpack.c.b16 %v3881, %v3877
    %4138 = vmatpush.bf16.msra.mxu0 %v3910
    %4139 = vmatpush.bf16.msra.mxu0 %v3906
    %4140 = vmatpush.bf16.msra.mxu0 %v3902
    %4141 = vmatpush.bf16.msra.mxu0 %v3898
    %4142 = vmatpush.bf16.msra.mxu0 %v3894
    %4143 = vmatpush.bf16.msra.mxu0 %v3890
    %4144 = vmatpush.bf16.msra.mxu0 %v3886
    %4145 = vmatpush.bf16.msra.mxu0 %v3882
    %4146 = vmatmul.bf16.gmra.mxu0 %v3354
    %v4147 = vpop.f32.mrf.mxu0
    %v4148 = vadd.f32 %v3490, %v4147
    %v4149 = vpop.f32.mrf.mxu0
    %4150 = vdwg.mxu0
    %4151 = vmatpush.bf16.msra.mxu0 %v3942
    %4152 = vmatpush.bf16.msra.mxu0 %v3938
    %4153 = vmatpush.bf16.msra.mxu0 %v3934
    %4154 = vmatpush.bf16.msra.mxu0 %v3930
    %4155 = vmatpush.bf16.msra.mxu0 %v3926
    %4156 = vmatpush.bf16.msra.mxu0 %v3922
    %4157 = vmatpush.bf16.msra.mxu0 %v3918
    %4158 = vmatpush.bf16.msra.mxu0 %v3914
    %4159 = vmatmul.bf16.gmra.mxu0 %v3355
    %v4160 = vpop.f32.mrf.mxu0
    %v4161 = vadd.f32 %v4148, %v4160
    %v4162 = vpop.f32.mrf.mxu0
    %4163 = vdwg.mxu0
    %4164 = vmatpush.bf16.msra.mxu0 %v3974
    %4165 = vmatpush.bf16.msra.mxu0 %v3970
    %4166 = vmatpush.bf16.msra.mxu0 %v3966
    %4167 = vmatpush.bf16.msra.mxu0 %v3962
    %4168 = vmatpush.bf16.msra.mxu0 %v3958
    %4169 = vmatpush.bf16.msra.mxu0 %v3954
    %4170 = vmatpush.bf16.msra.mxu0 %v3950
    %4171 = vmatpush.bf16.msra.mxu0 %v3946
    %4172 = vmatmul.bf16.gmra.mxu0 %v3356
    %v4173 = vpop.f32.mrf.mxu0
    %v4174 = vadd.f32 %v4161, %v4173
    %v4175 = vpop.f32.mrf.mxu0
    %4176 = vdwg.mxu0
    %4177 = vmatpush.bf16.msra.mxu0 %v4006
    %4178 = vmatpush.bf16.msra.mxu0 %v4002
    %4179 = vmatpush.bf16.msra.mxu0 %v3998
    %4180 = vmatpush.bf16.msra.mxu0 %v3994
    %4181 = vmatpush.bf16.msra.mxu0 %v3990
    %4182 = vmatpush.bf16.msra.mxu0 %v3986
    %4183 = vmatpush.bf16.msra.mxu0 %v3982
    %4184 = vmatpush.bf16.msra.mxu0 %v3978
    %4185 = vmatmul.bf16.gmra.mxu0 %v3357
    %v4186 = vpop.f32.mrf.mxu0
    %v4187 = vadd.f32 %v4174, %v4186
    %v4188 = vpop.f32.mrf.mxu0
    %4189 = vdwg.mxu0
    %4190 = vmatpush.bf16.msra.mxu0 %v3911
    %4191 = vmatpush.bf16.msra.mxu0 %v3907
    %4192 = vmatpush.bf16.msra.mxu0 %v3903
    %4193 = vmatpush.bf16.msra.mxu0 %v3899
    %4194 = vmatpush.bf16.msra.mxu0 %v3895
    %4195 = vmatpush.bf16.msra.mxu0 %v3891
    %4196 = vmatpush.bf16.msra.mxu0 %v3887
    %4197 = vmatpush.bf16.msra.mxu0 %v3883
    %4198 = vmatmul.bf16.gmra.mxu0 %v3354
    %v4199 = vpop.f32.mrf.mxu0
    %v4200 = vadd.f32 %v3491, %v4199
    %v4201 = vpop.f32.mrf.mxu0
    %4202 = vdwg.mxu0
    %4203 = vmatpush.bf16.msra.mxu0 %v3943
    %4204 = vmatpush.bf16.msra.mxu0 %v3939
    %4205 = vmatpush.bf16.msra.mxu0 %v3935
    %4206 = vmatpush.bf16.msra.mxu0 %v3931
    %4207 = vmatpush.bf16.msra.mxu0 %v3927
    %4208 = vmatpush.bf16.msra.mxu0 %v3923
    %4209 = vmatpush.bf16.msra.mxu0 %v3919
    %4210 = vmatpush.bf16.msra.mxu0 %v3915
    %4211 = vmatmul.bf16.gmra.mxu0 %v3355
    %v4212 = vpop.f32.mrf.mxu0
    %v4213 = vadd.f32 %v4200, %v4212
    %v4214 = vpop.f32.mrf.mxu0
    %4215 = vdwg.mxu0
    %4216 = vmatpush.bf16.msra.mxu0 %v3975
    %4217 = vmatpush.bf16.msra.mxu0 %v3971
    %4218 = vmatpush.bf16.msra.mxu0 %v3967
    %4219 = vmatpush.bf16.msra.mxu0 %v3963
    %4220 = vmatpush.bf16.msra.mxu0 %v3959
    %4221 = vmatpush.bf16.msra.mxu0 %v3955
    %4222 = vmatpush.bf16.msra.mxu0 %v3951
    %4223 = vmatpush.bf16.msra.mxu0 %v3947
    %4224 = vmatmul.bf16.gmra.mxu0 %v3356
    %v4225 = vpop.f32.mrf.mxu0
    %v4226 = vadd.f32 %v4213, %v4225
    %v4227 = vpop.f32.mrf.mxu0
    %4228 = vdwg.mxu0
    %4229 = vmatpush.bf16.msra.mxu0 %v4007
    %4230 = vmatpush.bf16.msra.mxu0 %v4003
    %4231 = vmatpush.bf16.msra.mxu0 %v3999
    %4232 = vmatpush.bf16.msra.mxu0 %v3995
    %4233 = vmatpush.bf16.msra.mxu0 %v3991
    %4234 = vmatpush.bf16.msra.mxu0 %v3987
    %4235 = vmatpush.bf16.msra.mxu0 %v3983
    %4236 = vmatpush.bf16.msra.mxu0 %v3979
    %4237 = vmatmul.bf16.gmra.mxu0 %v3357
    %v4238 = vpop.f32.mrf.mxu0
    %v4239 = vadd.f32 %v4226, %v4238
    %v4240 = vpop.f32.mrf.mxu0
    %4241 = vdwg.mxu0
    %4242 = vmatpush.bf16.msra.mxu0 %v3912
    %4243 = vmatpush.bf16.msra.mxu0 %v3908
    %4244 = vmatpush.bf16.msra.mxu0 %v3904
    %4245 = vmatpush.bf16.msra.mxu0 %v3900
    %4246 = vmatpush.bf16.msra.mxu0 %v3896
    %4247 = vmatpush.bf16.msra.mxu0 %v3892
    %4248 = vmatpush.bf16.msra.mxu0 %v3888
    %4249 = vmatpush.bf16.msra.mxu0 %v3884
    %4250 = vmatmul.bf16.gmra.mxu0 %v3354
    %v4251 = vpop.f32.mrf.mxu0
    %v4252 = vadd.f32 %v3492, %v4251
    %v4253 = vpop.f32.mrf.mxu0
    %4254 = vdwg.mxu0
    %4255 = vmatpush.bf16.msra.mxu0 %v3944
    %4256 = vmatpush.bf16.msra.mxu0 %v3940
    %4257 = vmatpush.bf16.msra.mxu0 %v3936
    %4258 = vmatpush.bf16.msra.mxu0 %v3932
    %4259 = vmatpush.bf16.msra.mxu0 %v3928
    %4260 = vmatpush.bf16.msra.mxu0 %v3924
    %4261 = vmatpush.bf16.msra.mxu0 %v3920
    %4262 = vmatpush.bf16.msra.mxu0 %v3916
    %4263 = vmatmul.bf16.gmra.mxu0 %v3355
    %v4264 = vpop.f32.mrf.mxu0
    %v4265 = vadd.f32 %v4252, %v4264
    %v4266 = vpop.f32.mrf.mxu0
    %4267 = vdwg.mxu0
    %4268 = vmatpush.bf16.msra.mxu0 %v3976
    %4269 = vmatpush.bf16.msra.mxu0 %v3972
    %4270 = vmatpush.bf16.msra.mxu0 %v3968
    %4271 = vmatpush.bf16.msra.mxu0 %v3964
    %4272 = vmatpush.bf16.msra.mxu0 %v3960
    %4273 = vmatpush.bf16.msra.mxu0 %v3956
    %4274 = vmatpush.bf16.msra.mxu0 %v3952
    %4275 = vmatpush.bf16.msra.mxu0 %v3948
    %4276 = vmatmul.bf16.gmra.mxu0 %v3356
    %v4277 = vpop.f32.mrf.mxu0
    %v4278 = vadd.f32 %v4265, %v4277
    %v4279 = vpop.f32.mrf.mxu0
    %4280 = vdwg.mxu0
    %4281 = vmatpush.bf16.msra.mxu0 %v4008
    %4282 = vmatpush.bf16.msra.mxu0 %v4004
    %4283 = vmatpush.bf16.msra.mxu0 %v4000
    %4284 = vmatpush.bf16.msra.mxu0 %v3996
    %4285 = vmatpush.bf16.msra.mxu0 %v3992
    %4286 = vmatpush.bf16.msra.mxu0 %v3988
    %4287 = vmatpush.bf16.msra.mxu0 %v3984
    %4288 = vmatpush.bf16.msra.mxu0 %v3980
    %4289 = vmatmul.bf16.gmra.mxu0 %v3357
    %v4290 = vpop.f32.mrf.mxu0
    %v4291 = vadd.f32 %v4278, %v4290
    %v4292 = vpop.f32.mrf.mxu0
    %4293 = vdwg.mxu0
    %4294 = vmatpush.bf16.msra.mxu0 %v3913
    %4295 = vmatpush.bf16.msra.mxu0 %v3909
    %4296 = vmatpush.bf16.msra.mxu0 %v3905
    %4297 = vmatpush.bf16.msra.mxu0 %v3901
    %4298 = vmatpush.bf16.msra.mxu0 %v3897
    %4299 = vmatpush.bf16.msra.mxu0 %v3893
    %4300 = vmatpush.bf16.msra.mxu0 %v3889
    %4301 = vmatpush.bf16.msra.mxu0 %v3885
    %4302 = vmatmul.bf16.gmra.mxu0 %v3354
    %v4303 = vpop.f32.mrf.mxu0
    %v4304 = vadd.f32 %v3493, %v4303
    %v4305 = vpop.f32.mrf.mxu0
    %4306 = vdwg.mxu0
    %4307 = vmatpush.bf16.msra.mxu0 %v3945
    %4308 = vmatpush.bf16.msra.mxu0 %v3941
    %4309 = vmatpush.bf16.msra.mxu0 %v3937
    %4310 = vmatpush.bf16.msra.mxu0 %v3933
    %4311 = vmatpush.bf16.msra.mxu0 %v3929
    %4312 = vmatpush.bf16.msra.mxu0 %v3925
    %4313 = vmatpush.bf16.msra.mxu0 %v3921
    %4314 = vmatpush.bf16.msra.mxu0 %v3917
    %4315 = vmatmul.bf16.gmra.mxu0 %v3355
    %v4316 = vpop.f32.mrf.mxu0
    %v4317 = vadd.f32 %v4304, %v4316
    %v4318 = vpop.f32.mrf.mxu0
    %4319 = vdwg.mxu0
    %4320 = vmatpush.bf16.msra.mxu0 %v3977
    %4321 = vmatpush.bf16.msra.mxu0 %v3973
    %4322 = vmatpush.bf16.msra.mxu0 %v3969
    %4323 = vmatpush.bf16.msra.mxu0 %v3965
    %4324 = vmatpush.bf16.msra.mxu0 %v3961
    %4325 = vmatpush.bf16.msra.mxu0 %v3957
    %4326 = vmatpush.bf16.msra.mxu0 %v3953
    %4327 = vmatpush.bf16.msra.mxu0 %v3949
    %4328 = vmatmul.bf16.gmra.mxu0 %v3356
    %v4329 = vpop.f32.mrf.mxu0
    %v4330 = vadd.f32 %v4317, %v4329
    %v4331 = vpop.f32.mrf.mxu0
    %4332 = vdwg.mxu0
    %4333 = vmatpush.bf16.msra.mxu0 %v4009
    %4334 = vmatpush.bf16.msra.mxu0 %v4005
    %4335 = vmatpush.bf16.msra.mxu0 %v4001
    %4336 = vmatpush.bf16.msra.mxu0 %v3997
    %4337 = vmatpush.bf16.msra.mxu0 %v3993
    %4338 = vmatpush.bf16.msra.mxu0 %v3989
    %4339 = vmatpush.bf16.msra.mxu0 %v3985
    %4340 = vmatpush.bf16.msra.mxu0 %v3981
    %4341 = vmatmul.bf16.gmra.mxu0 %v3357
    %v4342 = vpop.f32.mrf.mxu0
    %v4343 = vadd.f32 %v4330, %v4342
    %v4344 = vpop.f32.mrf.mxu0
    %4345 = vdwg.mxu0
    %v4346 = vmax.f32 %v4187, 0.0
    %v4347 = vmax.f32 %v4239, 0.0
    %v4348 = vmax.f32 %v4291, 0.0
    %v4349 = vmax.f32 %v4343, 0.0
    %v4350 = vpack.c.bf16 %v4346, %v4346
    %v4351 = vpack.c.bf16 %v4347, %v4347
    %v4352 = vpack.c.bf16 %v4348, %v4348
    %v4353 = vpack.c.bf16 %v4349, %v4349
    %s4354 = scalar_lea.vmem [#allocation13], 3072
    %v4355 = vld [vmem:[%s4354] sm:$0xff]
    %v4356 = vld [vmem:[%s4354 + $0x8] sm:$0xff]
    %v4357 = vld [vmem:[%s4354 + $0x10] sm:$0xff]
    %v4358 = vld [vmem:[%s4354 + $0x18] sm:$0xff]
    %v4359 = vld [vmem:[%s4354 + $0x20] sm:$0xff]
    %v4360 = vld [vmem:[%s4354 + $0x28] sm:$0xff]
    %v4361 = vld [vmem:[%s4354 + $0x30] sm:$0xff]
    %v4362 = vld [vmem:[%s4354 + $0x38] sm:$0xff]
    %v4363 = vld [vmem:[%s4354 + $0x40] sm:$0xff]
    %v4364 = vld [vmem:[%s4354 + $0x48] sm:$0xff]
    %v4365 = vld [vmem:[%s4354 + $0x50] sm:$0xff]
    %v4366 = vld [vmem:[%s4354 + $0x58] sm:$0xff]
    %v4367 = vld [vmem:[%s4354 + $0x60] sm:$0xff]
    %v4368 = vld [vmem:[%s4354 + $0x68] sm:$0xff]
    %v4369 = vld [vmem:[%s4354 + $0x70] sm:$0xff]
    %v4370 = vld [vmem:[%s4354 + $0x78] sm:$0xff]
    %v4371 = vld [vmem:[%s4354 + $0x80] sm:$0xff]
    %v4372 = vld [vmem:[%s4354 + $0x88] sm:$0xff]
    %v4373 = vld [vmem:[%s4354 + $0x90] sm:$0xff]
    %v4374 = vld [vmem:[%s4354 + $0x98] sm:$0xff]
    %v4375 = vld [vmem:[%s4354 + $0xa0] sm:$0xff]
    %v4376 = vld [vmem:[%s4354 + $0xa8] sm:$0xff]
    %v4377 = vld [vmem:[%s4354 + $0xb0] sm:$0xff]
    %v4378 = vld [vmem:[%s4354 + $0xb8] sm:$0xff]
    %v4379 = vld [vmem:[%s4354 + $0xc0] sm:$0xff]
    %v4380 = vld [vmem:[%s4354 + $0xc8] sm:$0xff]
    %v4381 = vld [vmem:[%s4354 + $0xd0] sm:$0xff]
    %v4382 = vld [vmem:[%s4354 + $0xd8] sm:$0xff]
    %v4383 = vld [vmem:[%s4354 + $0xe0] sm:$0xff]
    %v4384 = vld [vmem:[%s4354 + $0xe8] sm:$0xff]
    %v4385 = vld [vmem:[%s4354 + $0xf0] sm:$0xff]
    %v4386 = vld [vmem:[%s4354 + $0xf8] sm:$0xff]
    %v4387 = vld [vmem:[%s4354 + $0x100] sm:$0xff]
    %v4388 = vld [vmem:[%s4354 + $0x108] sm:$0xff]
    %v4389 = vld [vmem:[%s4354 + $0x110] sm:$0xff]
    %v4390 = vld [vmem:[%s4354 + $0x118] sm:$0xff]
    %v4391 = vld [vmem:[%s4354 + $0x120] sm:$0xff]
    %v4392 = vld [vmem:[%s4354 + $0x128] sm:$0xff]
    %v4393 = vld [vmem:[%s4354 + $0x130] sm:$0xff]
    %v4394 = vld [vmem:[%s4354 + $0x138] sm:$0xff]
    %v4395 = vld [vmem:[%s4354 + $0x140] sm:$0xff]
    %v4396 = vld [vmem:[%s4354 + $0x148] sm:$0xff]
    %v4397 = vld [vmem:[%s4354 + $0x150] sm:$0xff]
    %v4398 = vld [vmem:[%s4354 + $0x158] sm:$0xff]
    %v4399 = vld [vmem:[%s4354 + $0x160] sm:$0xff]
    %v4400 = vld [vmem:[%s4354 + $0x168] sm:$0xff]
    %v4401 = vld [vmem:[%s4354 + $0x170] sm:$0xff]
    %v4402 = vld [vmem:[%s4354 + $0x178] sm:$0xff]
    %v4403 = vld [vmem:[%s4354 + $0x180] sm:$0xff]
    %v4404 = vld [vmem:[%s4354 + $0x188] sm:$0xff]
    %v4405 = vld [vmem:[%s4354 + $0x190] sm:$0xff]
    %v4406 = vld [vmem:[%s4354 + $0x198] sm:$0xff]
    %v4407 = vld [vmem:[%s4354 + $0x1a0] sm:$0xff]
    %v4408 = vld [vmem:[%s4354 + $0x1a8] sm:$0xff]
    %v4409 = vld [vmem:[%s4354 + $0x1b0] sm:$0xff]
    %v4410 = vld [vmem:[%s4354 + $0x1b8] sm:$0xff]
    %v4411 = vld [vmem:[%s4354 + $0x1c0] sm:$0xff]
    %v4412 = vld [vmem:[%s4354 + $0x1c8] sm:$0xff]
    %v4413 = vld [vmem:[%s4354 + $0x1d0] sm:$0xff]
    %v4414 = vld [vmem:[%s4354 + $0x1d8] sm:$0xff]
    %v4415 = vld [vmem:[%s4354 + $0x1e0] sm:$0xff]
    %v4416 = vld [vmem:[%s4354 + $0x1e8] sm:$0xff]
    %v4417 = vld [vmem:[%s4354 + $0x1f0] sm:$0xff]
    %v4418 = vld [vmem:[%s4354 + $0x1f8] sm:$0xff]
    %v4419 = vld [vmem:[%s4354 + $0x200] sm:$0xff]
    %v4420 = vld [vmem:[%s4354 + $0x208] sm:$0xff]
    %v4421 = vld [vmem:[%s4354 + $0x210] sm:$0xff]
    %v4422 = vld [vmem:[%s4354 + $0x218] sm:$0xff]
    %v4423 = vld [vmem:[%s4354 + $0x220] sm:$0xff]
    %v4424 = vld [vmem:[%s4354 + $0x228] sm:$0xff]
    %v4425 = vld [vmem:[%s4354 + $0x230] sm:$0xff]
    %v4426 = vld [vmem:[%s4354 + $0x238] sm:$0xff]
    %v4427 = vld [vmem:[%s4354 + $0x240] sm:$0xff]
    %v4428 = vld [vmem:[%s4354 + $0x248] sm:$0xff]
    %v4429 = vld [vmem:[%s4354 + $0x250] sm:$0xff]
    %v4430 = vld [vmem:[%s4354 + $0x258] sm:$0xff]
    %v4431 = vld [vmem:[%s4354 + $0x260] sm:$0xff]
    %v4432 = vld [vmem:[%s4354 + $0x268] sm:$0xff]
    %v4433 = vld [vmem:[%s4354 + $0x270] sm:$0xff]
    %v4434 = vld [vmem:[%s4354 + $0x278] sm:$0xff]
    %v4435 = vld [vmem:[%s4354 + $0x280] sm:$0xff]
    %v4436 = vld [vmem:[%s4354 + $0x288] sm:$0xff]
    %v4437 = vld [vmem:[%s4354 + $0x290] sm:$0xff]
    %v4438 = vld [vmem:[%s4354 + $0x298] sm:$0xff]
    %v4439 = vld [vmem:[%s4354 + $0x2a0] sm:$0xff]
    %v4440 = vld [vmem:[%s4354 + $0x2a8] sm:$0xff]
    %v4441 = vld [vmem:[%s4354 + $0x2b0] sm:$0xff]
    %v4442 = vld [vmem:[%s4354 + $0x2b8] sm:$0xff]
    %v4443 = vld [vmem:[%s4354 + $0x2c0] sm:$0xff]
    %v4444 = vld [vmem:[%s4354 + $0x2c8] sm:$0xff]
    %v4445 = vld [vmem:[%s4354 + $0x2d0] sm:$0xff]
    %v4446 = vld [vmem:[%s4354 + $0x2d8] sm:$0xff]
    %v4447 = vld [vmem:[%s4354 + $0x2e0] sm:$0xff]
    %v4448 = vld [vmem:[%s4354 + $0x2e8] sm:$0xff]
    %v4449 = vld [vmem:[%s4354 + $0x2f0] sm:$0xff]
    %v4450 = vld [vmem:[%s4354 + $0x2f8] sm:$0xff]
    %v4451 = vld [vmem:[%s4354 + $0x300] sm:$0xff]
    %v4452 = vld [vmem:[%s4354 + $0x308] sm:$0xff]
    %v4453 = vld [vmem:[%s4354 + $0x310] sm:$0xff]
    %v4454 = vld [vmem:[%s4354 + $0x318] sm:$0xff]
    %v4455 = vld [vmem:[%s4354 + $0x320] sm:$0xff]
    %v4456 = vld [vmem:[%s4354 + $0x328] sm:$0xff]
    %v4457 = vld [vmem:[%s4354 + $0x330] sm:$0xff]
    %v4458 = vld [vmem:[%s4354 + $0x338] sm:$0xff]
    %v4459 = vld [vmem:[%s4354 + $0x340] sm:$0xff]
    %v4460 = vld [vmem:[%s4354 + $0x348] sm:$0xff]
    %v4461 = vld [vmem:[%s4354 + $0x350] sm:$0xff]
    %v4462 = vld [vmem:[%s4354 + $0x358] sm:$0xff]
    %v4463 = vld [vmem:[%s4354 + $0x360] sm:$0xff]
    %v4464 = vld [vmem:[%s4354 + $0x368] sm:$0xff]
    %v4465 = vld [vmem:[%s4354 + $0x370] sm:$0xff]
    %v4466 = vld [vmem:[%s4354 + $0x378] sm:$0xff]
    %v4467 = vld [vmem:[%s4354 + $0x380] sm:$0xff]
    %v4468 = vld [vmem:[%s4354 + $0x388] sm:$0xff]
    %v4469 = vld [vmem:[%s4354 + $0x390] sm:$0xff]
    %v4470 = vld [vmem:[%s4354 + $0x398] sm:$0xff]
    %v4471 = vld [vmem:[%s4354 + $0x3a0] sm:$0xff]
    %v4472 = vld [vmem:[%s4354 + $0x3a8] sm:$0xff]
    %v4473 = vld [vmem:[%s4354 + $0x3b0] sm:$0xff]
    %v4474 = vld [vmem:[%s4354 + $0x3b8] sm:$0xff]
    %v4475 = vld [vmem:[%s4354 + $0x3c0] sm:$0xff]
    %v4476 = vld [vmem:[%s4354 + $0x3c8] sm:$0xff]
    %v4477 = vld [vmem:[%s4354 + $0x3d0] sm:$0xff]
    %v4478 = vld [vmem:[%s4354 + $0x3d8] sm:$0xff]
    %v4479 = vld [vmem:[%s4354 + $0x3e0] sm:$0xff]
    %v4480 = vld [vmem:[%s4354 + $0x3e8] sm:$0xff]
    %v4481 = vld [vmem:[%s4354 + $0x3f0] sm:$0xff]
    %v4482 = vld [vmem:[%s4354 + $0x3f8] sm:$0xff]
    %s4483 = scalar_lea.vmem [#allocation14], 12
    %v4484 = vld [vmem:[%s4483] sm:$0xf]
    %v4486 = vperm.slane %v4484, 0
    %v4487 = vperm.slane %v4484, 1
    %v4488 = vperm.slane %v4484, 2
    %v4489 = vperm.slane %v4484, 3
    %v4622 = vunpack.c.l.b16 %v4355
    %v4623 = vunpack.c.h.b16 %v4355
    %v4624 = vunpack.c.l.b16 %v4356
    %v4625 = vunpack.c.h.b16 %v4356
    %v4626 = vunpack.c.l.b16 %v4357
    %v4627 = vunpack.c.h.b16 %v4357
    %v4628 = vunpack.c.l.b16 %v4358
    %v4629 = vunpack.c.h.b16 %v4358
    %v4630 = vunpack.c.l.b16 %v4359
    %v4631 = vunpack.c.h.b16 %v4359
    %v4632 = vunpack.c.l.b16 %v4360
    %v4633 = vunpack.c.h.b16 %v4360
    %v4634 = vunpack.c.l.b16 %v4361
    %v4635 = vunpack.c.h.b16 %v4361
    %v4636 = vunpack.c.l.b16 %v4362
    %v4637 = vunpack.c.h.b16 %v4362
    %v4638 = vunpack.c.l.b16 %v4363
    %v4639 = vunpack.c.h.b16 %v4363
    %v4640 = vunpack.c.l.b16 %v4364
    %v4641 = vunpack.c.h.b16 %v4364
    %v4642 = vunpack.c.l.b16 %v4365
    %v4643 = vunpack.c.h.b16 %v4365
    %v4644 = vunpack.c.l.b16 %v4366
    %v4645 = vunpack.c.h.b16 %v4366
    %v4646 = vunpack.c.l.b16 %v4367
    %v4647 = vunpack.c.h.b16 %v4367
    %v4648 = vunpack.c.l.b16 %v4368
    %v4649 = vunpack.c.h.b16 %v4368
    %v4650 = vunpack.c.l.b16 %v4369
    %v4651 = vunpack.c.h.b16 %v4369
    %v4652 = vunpack.c.l.b16 %v4370
    %v4653 = vunpack.c.h.b16 %v4370
    %v4654 = vunpack.c.l.b16 %v4371
    %v4655 = vunpack.c.h.b16 %v4371
    %v4656 = vunpack.c.l.b16 %v4372
    %v4657 = vunpack.c.h.b16 %v4372
    %v4658 = vunpack.c.l.b16 %v4373
    %v4659 = vunpack.c.h.b16 %v4373
    %v4660 = vunpack.c.l.b16 %v4374
    %v4661 = vunpack.c.h.b16 %v4374
    %v4662 = vunpack.c.l.b16 %v4375
    %v4663 = vunpack.c.h.b16 %v4375
    %v4664 = vunpack.c.l.b16 %v4376
    %v4665 = vunpack.c.h.b16 %v4376
    %v4666 = vunpack.c.l.b16 %v4377
    %v4667 = vunpack.c.h.b16 %v4377
    %v4668 = vunpack.c.l.b16 %v4378
    %v4669 = vunpack.c.h.b16 %v4378
    %v4670 = vunpack.c.l.b16 %v4379
    %v4671 = vunpack.c.h.b16 %v4379
    %v4672 = vunpack.c.l.b16 %v4380
    %v4673 = vunpack.c.h.b16 %v4380
    %v4674 = vunpack.c.l.b16 %v4381
    %v4675 = vunpack.c.h.b16 %v4381
    %v4676 = vunpack.c.l.b16 %v4382
    %v4677 = vunpack.c.h.b16 %v4382
    %v4678 = vunpack.c.l.b16 %v4383
    %v4679 = vunpack.c.h.b16 %v4383
    %v4680 = vunpack.c.l.b16 %v4384
    %v4681 = vunpack.c.h.b16 %v4384
    %v4682 = vunpack.c.l.b16 %v4385
    %v4683 = vunpack.c.h.b16 %v4385
    %v4684 = vunpack.c.l.b16 %v4386
    %v4685 = vunpack.c.h.b16 %v4386
    %v4686 = vunpack.c.l.b16 %v4387
    %v4687 = vunpack.c.h.b16 %v4387
    %v4688 = vunpack.c.l.b16 %v4388
    %v4689 = vunpack.c.h.b16 %v4388
    %v4690 = vunpack.c.l.b16 %v4389
    %v4691 = vunpack.c.h.b16 %v4389
    %v4692 = vunpack.c.l.b16 %v4390
    %v4693 = vunpack.c.h.b16 %v4390
    %v4694 = vunpack.c.l.b16 %v4391
    %v4695 = vunpack.c.h.b16 %v4391
    %v4696 = vunpack.c.l.b16 %v4392
    %v4697 = vunpack.c.h.b16 %v4392
    %v4698 = vunpack.c.l.b16 %v4393
    %v4699 = vunpack.c.h.b16 %v4393
    %v4700 = vunpack.c.l.b16 %v4394
    %v4701 = vunpack.c.h.b16 %v4394
    %v4702 = vunpack.c.l.b16 %v4395
    %v4703 = vunpack.c.h.b16 %v4395
    %v4704 = vunpack.c.l.b16 %v4396
    %v4705 = vunpack.c.h.b16 %v4396
    %v4706 = vunpack.c.l.b16 %v4397
    %v4707 = vunpack.c.h.b16 %v4397
    %v4708 = vunpack.c.l.b16 %v4398
    %v4709 = vunpack.c.h.b16 %v4398
    %v4710 = vunpack.c.l.b16 %v4399
    %v4711 = vunpack.c.h.b16 %v4399
    %v4712 = vunpack.c.l.b16 %v4400
    %v4713 = vunpack.c.h.b16 %v4400
    %v4714 = vunpack.c.l.b16 %v4401
    %v4715 = vunpack.c.h.b16 %v4401
    %v4716 = vunpack.c.l.b16 %v4402
    %v4717 = vunpack.c.h.b16 %v4402
    %v4718 = vunpack.c.l.b16 %v4403
    %v4719 = vunpack.c.h.b16 %v4403
    %v4720 = vunpack.c.l.b16 %v4404
    %v4721 = vunpack.c.h.b16 %v4404
    %v4722 = vunpack.c.l.b16 %v4405
    %v4723 = vunpack.c.h.b16 %v4405
    %v4724 = vunpack.c.l.b16 %v4406
    %v4725 = vunpack.c.h.b16 %v4406
    %v4726 = vunpack.c.l.b16 %v4407
    %v4727 = vunpack.c.h.b16 %v4407
    %v4728 = vunpack.c.l.b16 %v4408
    %v4729 = vunpack.c.h.b16 %v4408
    %v4730 = vunpack.c.l.b16 %v4409
    %v4731 = vunpack.c.h.b16 %v4409
    %v4732 = vunpack.c.l.b16 %v4410
    %v4733 = vunpack.c.h.b16 %v4410
    %v4734 = vunpack.c.l.b16 %v4411
    %v4735 = vunpack.c.h.b16 %v4411
    %v4736 = vunpack.c.l.b16 %v4412
    %v4737 = vunpack.c.h.b16 %v4412
    %v4738 = vunpack.c.l.b16 %v4413
    %v4739 = vunpack.c.h.b16 %v4413
    %v4740 = vunpack.c.l.b16 %v4414
    %v4741 = vunpack.c.h.b16 %v4414
    %v4742 = vunpack.c.l.b16 %v4415
    %v4743 = vunpack.c.h.b16 %v4415
    %v4744 = vunpack.c.l.b16 %v4416
    %v4745 = vunpack.c.h.b16 %v4416
    %v4746 = vunpack.c.l.b16 %v4417
    %v4747 = vunpack.c.h.b16 %v4417
    %v4748 = vunpack.c.l.b16 %v4418
    %v4749 = vunpack.c.h.b16 %v4418
    %v4750 = vunpack.c.l.b16 %v4419
    %v4751 = vunpack.c.h.b16 %v4419
    %v4752 = vunpack.c.l.b16 %v4420
    %v4753 = vunpack.c.h.b16 %v4420
    %v4754 = vunpack.c.l.b16 %v4421
    %v4755 = vunpack.c.h.b16 %v4421
    %v4756 = vunpack.c.l.b16 %v4422
    %v4757 = vunpack.c.h.b16 %v4422
    %v4758 = vunpack.c.l.b16 %v4423
    %v4759 = vunpack.c.h.b16 %v4423
    %v4760 = vunpack.c.l.b16 %v4424
    %v4761 = vunpack.c.h.b16 %v4424
    %v4762 = vunpack.c.l.b16 %v4425
    %v4763 = vunpack.c.h.b16 %v4425
    %v4764 = vunpack.c.l.b16 %v4426
    %v4765 = vunpack.c.h.b16 %v4426
    %v4766 = vunpack.c.l.b16 %v4427
    %v4767 = vunpack.c.h.b16 %v4427
    %v4768 = vunpack.c.l.b16 %v4428
    %v4769 = vunpack.c.h.b16 %v4428
    %v4770 = vunpack.c.l.b16 %v4429
    %v4771 = vunpack.c.h.b16 %v4429
    %v4772 = vunpack.c.l.b16 %v4430
    %v4773 = vunpack.c.h.b16 %v4430
    %v4774 = vunpack.c.l.b16 %v4431
    %v4775 = vunpack.c.h.b16 %v4431
    %v4776 = vunpack.c.l.b16 %v4432
    %v4777 = vunpack.c.h.b16 %v4432
    %v4778 = vunpack.c.l.b16 %v4433
    %v4779 = vunpack.c.h.b16 %v4433
    %v4780 = vunpack.c.l.b16 %v4434
    %v4781 = vunpack.c.h.b16 %v4434
    %v4782 = vunpack.c.l.b16 %v4435
    %v4783 = vunpack.c.h.b16 %v4435
    %v4784 = vunpack.c.l.b16 %v4436
    %v4785 = vunpack.c.h.b16 %v4436
    %v4786 = vunpack.c.l.b16 %v4437
    %v4787 = vunpack.c.h.b16 %v4437
    %v4788 = vunpack.c.l.b16 %v4438
    %v4789 = vunpack.c.h.b16 %v4438
    %v4790 = vunpack.c.l.b16 %v4439
    %v4791 = vunpack.c.h.b16 %v4439
    %v4792 = vunpack.c.l.b16 %v4440
    %v4793 = vunpack.c.h.b16 %v4440
    %v4794 = vunpack.c.l.b16 %v4441
    %v4795 = vunpack.c.h.b16 %v4441
    %v4796 = vunpack.c.l.b16 %v4442
    %v4797 = vunpack.c.h.b16 %v4442
    %v4798 = vunpack.c.l.b16 %v4443
    %v4799 = vunpack.c.h.b16 %v4443
    %v4800 = vunpack.c.l.b16 %v4444
    %v4801 = vunpack.c.h.b16 %v4444
    %v4802 = vunpack.c.l.b16 %v4445
    %v4803 = vunpack.c.h.b16 %v4445
    %v4804 = vunpack.c.l.b16 %v4446
    %v4805 = vunpack.c.h.b16 %v4446
    %v4806 = vunpack.c.l.b16 %v4447
    %v4807 = vunpack.c.h.b16 %v4447
    %v4808 = vunpack.c.l.b16 %v4448
    %v4809 = vunpack.c.h.b16 %v4448
    %v4810 = vunpack.c.l.b16 %v4449
    %v4811 = vunpack.c.h.b16 %v4449
    %v4812 = vunpack.c.l.b16 %v4450
    %v4813 = vunpack.c.h.b16 %v4450
    %v4814 = vunpack.c.l.b16 %v4451
    %v4815 = vunpack.c.h.b16 %v4451
    %v4816 = vunpack.c.l.b16 %v4452
    %v4817 = vunpack.c.h.b16 %v4452
    %v4818 = vunpack.c.l.b16 %v4453
    %v4819 = vunpack.c.h.b16 %v4453
    %v4820 = vunpack.c.l.b16 %v4454
    %v4821 = vunpack.c.h.b16 %v4454
    %v4822 = vunpack.c.l.b16 %v4455
    %v4823 = vunpack.c.h.b16 %v4455
    %v4824 = vunpack.c.l.b16 %v4456
    %v4825 = vunpack.c.h.b16 %v4456
    %v4826 = vunpack.c.l.b16 %v4457
    %v4827 = vunpack.c.h.b16 %v4457
    %v4828 = vunpack.c.l.b16 %v4458
    %v4829 = vunpack.c.h.b16 %v4458
    %v4830 = vunpack.c.l.b16 %v4459
    %v4831 = vunpack.c.h.b16 %v4459
    %v4832 = vunpack.c.l.b16 %v4460
    %v4833 = vunpack.c.h.b16 %v4460
    %v4834 = vunpack.c.l.b16 %v4461
    %v4835 = vunpack.c.h.b16 %v4461
    %v4836 = vunpack.c.l.b16 %v4462
    %v4837 = vunpack.c.h.b16 %v4462
    %v4838 = vunpack.c.l.b16 %v4463
    %v4839 = vunpack.c.h.b16 %v4463
    %v4840 = vunpack.c.l.b16 %v4464
    %v4841 = vunpack.c.h.b16 %v4464
    %v4842 = vunpack.c.l.b16 %v4465
    %v4843 = vunpack.c.h.b16 %v4465
    %v4844 = vunpack.c.l.b16 %v4466
    %v4845 = vunpack.c.h.b16 %v4466
    %v4846 = vunpack.c.l.b16 %v4467
    %v4847 = vunpack.c.h.b16 %v4467
    %v4848 = vunpack.c.l.b16 %v4468
    %v4849 = vunpack.c.h.b16 %v4468
    %v4850 = vunpack.c.l.b16 %v4469
    %v4851 = vunpack.c.h.b16 %v4469
    %v4852 = vunpack.c.l.b16 %v4470
    %v4853 = vunpack.c.h.b16 %v4470
    %v4854 = vunpack.c.l.b16 %v4471
    %v4855 = vunpack.c.h.b16 %v4471
    %v4856 = vunpack.c.l.b16 %v4472
    %v4857 = vunpack.c.h.b16 %v4472
    %v4858 = vunpack.c.l.b16 %v4473
    %v4859 = vunpack.c.h.b16 %v4473
    %v4860 = vunpack.c.l.b16 %v4474
    %v4861 = vunpack.c.h.b16 %v4474
    %v4862 = vunpack.c.l.b16 %v4475
    %v4863 = vunpack.c.h.b16 %v4475
    %v4864 = vunpack.c.l.b16 %v4476
    %v4865 = vunpack.c.h.b16 %v4476
    %v4866 = vunpack.c.l.b16 %v4477
    %v4867 = vunpack.c.h.b16 %v4477
    %v4868 = vunpack.c.l.b16 %v4478
    %v4869 = vunpack.c.h.b16 %v4478
    %v4870 = vunpack.c.l.b16 %v4479
    %v4871 = vunpack.c.h.b16 %v4479
    %v4872 = vunpack.c.l.b16 %v4480
    %v4873 = vunpack.c.h.b16 %v4480
    %v4874 = vunpack.c.l.b16 %v4481
    %v4875 = vunpack.c.h.b16 %v4481
    %v4876 = vunpack.c.l.b16 %v4482
    %v4877 = vunpack.c.h.b16 %v4482
    %v4878 = vpack.c.b16 %v4626, %v4622
    %v4879 = vpack.c.b16 %v4627, %v4623
    %v4880 = vpack.c.b16 %v4628, %v4624
    %v4881 = vpack.c.b16 %v4629, %v4625
    %v4882 = vpack.c.b16 %v4634, %v4630
    %v4883 = vpack.c.b16 %v4635, %v4631
    %v4884 = vpack.c.b16 %v4636, %v4632
    %v4885 = vpack.c.b16 %v4637, %v4633
    %v4886 = vpack.c.b16 %v4642, %v4638
    %v4887 = vpack.c.b16 %v4643, %v4639
    %v4888 = vpack.c.b16 %v4644, %v4640
    %v4889 = vpack.c.b16 %v4645, %v4641
    %v4890 = vpack.c.b16 %v4650, %v4646
    %v4891 = vpack.c.b16 %v4651, %v4647
    %v4892 = vpack.c.b16 %v4652, %v4648
    %v4893 = vpack.c.b16 %v4653, %v4649
    %v4894 = vpack.c.b16 %v4658, %v4654
    %v4895 = vpack.c.b16 %v4659, %v4655
    %v4896 = vpack.c.b16 %v4660, %v4656
    %v4897 = vpack.c.b16 %v4661, %v4657
    %v4898 = vpack.c.b16 %v4666, %v4662
    %v4899 = vpack.c.b16 %v4667, %v4663
    %v4900 = vpack.c.b16 %v4668, %v4664
    %v4901 = vpack.c.b16 %v4669, %v4665
    %v4902 = vpack.c.b16 %v4674, %v4670
    %v4903 = vpack.c.b16 %v4675, %v4671
    %v4904 = vpack.c.b16 %v4676, %v4672
    %v4905 = vpack.c.b16 %v4677, %v4673
    %v4906 = vpack.c.b16 %v4682, %v4678
    %v4907 = vpack.c.b16 %v4683, %v4679
    %v4908 = vpack.c.b16 %v4684, %v4680
    %v4909 = vpack.c.b16 %v4685, %v4681
    %v4910 = vpack.c.b16 %v4690, %v4686
    %v4911 = vpack.c.b16 %v4691, %v4687
    %v4912 = vpack.c.b16 %v4692, %v4688
    %v4913 = vpack.c.b16 %v4693, %v4689
    %v4914 = vpack.c.b16 %v4698, %v4694
    %v4915 = vpack.c.b16 %v4699, %v4695
    %v4916 = vpack.c.b16 %v4700, %v4696
    %v4917 = vpack.c.b16 %v4701, %v4697
    %v4918 = vpack.c.b16 %v4706, %v4702
    %v4919 = vpack.c.b16 %v4707, %v4703
    %v4920 = vpack.c.b16 %v4708, %v4704
    %v4921 = vpack.c.b16 %v4709, %v4705
    %v4922 = vpack.c.b16 %v4714, %v4710
    %v4923 = vpack.c.b16 %v4715, %v4711
    %v4924 = vpack.c.b16 %v4716, %v4712
    %v4925 = vpack.c.b16 %v4717, %v4713
    %v4926 = vpack.c.b16 %v4722, %v4718
    %v4927 = vpack.c.b16 %v4723, %v4719
    %v4928 = vpack.c.b16 %v4724, %v4720
    %v4929 = vpack.c.b16 %v4725, %v4721
    %v4930 = vpack.c.b16 %v4730, %v4726
    %v4931 = vpack.c.b16 %v4731, %v4727
    %v4932 = vpack.c.b16 %v4732, %v4728
    %v4933 = vpack.c.b16 %v4733, %v4729
    %v4934 = vpack.c.b16 %v4738, %v4734
    %v4935 = vpack.c.b16 %v4739, %v4735
    %v4936 = vpack.c.b16 %v4740, %v4736
    %v4937 = vpack.c.b16 %v4741, %v4737
    %v4938 = vpack.c.b16 %v4746, %v4742
    %v4939 = vpack.c.b16 %v4747, %v4743
    %v4940 = vpack.c.b16 %v4748, %v4744
    %v4941 = vpack.c.b16 %v4749, %v4745
    %v4942 = vpack.c.b16 %v4754, %v4750
    %v4943 = vpack.c.b16 %v4755, %v4751
    %v4944 = vpack.c.b16 %v4756, %v4752
    %v4945 = vpack.c.b16 %v4757, %v4753
    %v4946 = vpack.c.b16 %v4762, %v4758
    %v4947 = vpack.c.b16 %v4763, %v4759
    %v4948 = vpack.c.b16 %v4764, %v4760
    %v4949 = vpack.c.b16 %v4765, %v4761
    %v4950 = vpack.c.b16 %v4770, %v4766
    %v4951 = vpack.c.b16 %v4771, %v4767
    %v4952 = vpack.c.b16 %v4772, %v4768
    %v4953 = vpack.c.b16 %v4773, %v4769
    %v4954 = vpack.c.b16 %v4778, %v4774
    %v4955 = vpack.c.b16 %v4779, %v4775
    %v4956 = vpack.c.b16 %v4780, %v4776
    %v4957 = vpack.c.b16 %v4781, %v4777
    %v4958 = vpack.c.b16 %v4786, %v4782
    %v4959 = vpack.c.b16 %v4787, %v4783
    %v4960 = vpack.c.b16 %v4788, %v4784
    %v4961 = vpack.c.b16 %v4789, %v4785
    %v4962 = vpack.c.b16 %v4794, %v4790
    %v4963 = vpack.c.b16 %v4795, %v4791
    %v4964 = vpack.c.b16 %v4796, %v4792
    %v4965 = vpack.c.b16 %v4797, %v4793
    %v4966 = vpack.c.b16 %v4802, %v4798
    %v4967 = vpack.c.b16 %v4803, %v4799
    %v4968 = vpack.c.b16 %v4804, %v4800
    %v4969 = vpack.c.b16 %v4805, %v4801
    %v4970 = vpack.c.b16 %v4810, %v4806
    %v4971 = vpack.c.b16 %v4811, %v4807
    %v4972 = vpack.c.b16 %v4812, %v4808
    %v4973 = vpack.c.b16 %v4813, %v4809
    %v4974 = vpack.c.b16 %v4818, %v4814
    %v4975 = vpack.c.b16 %v4819, %v4815
    %v4976 = vpack.c.b16 %v4820, %v4816
    %v4977 = vpack.c.b16 %v4821, %v4817
    %v4978 = vpack.c.b16 %v4826, %v4822
    %v4979 = vpack.c.b16 %v4827, %v4823
    %v4980 = vpack.c.b16 %v4828, %v4824
    %v4981 = vpack.c.b16 %v4829, %v4825
    %v4982 = vpack.c.b16 %v4834, %v4830
    %v4983 = vpack.c.b16 %v4835, %v4831
    %v4984 = vpack.c.b16 %v4836, %v4832
    %v4985 = vpack.c.b16 %v4837, %v4833
    %v4986 = vpack.c.b16 %v4842, %v4838
    %v4987 = vpack.c.b16 %v4843, %v4839
    %v4988 = vpack.c.b16 %v4844, %v4840
    %v4989 = vpack.c.b16 %v4845, %v4841
    %v4990 = vpack.c.b16 %v4850, %v4846
    %v4991 = vpack.c.b16 %v4851, %v4847
    %v4992 = vpack.c.b16 %v4852, %v4848
    %v4993 = vpack.c.b16 %v4853, %v4849
    %v4994 = vpack.c.b16 %v4858, %v4854
    %v4995 = vpack.c.b16 %v4859, %v4855
    %v4996 = vpack.c.b16 %v4860, %v4856
    %v4997 = vpack.c.b16 %v4861, %v4857
    %v4998 = vpack.c.b16 %v4866, %v4862
    %v4999 = vpack.c.b16 %v4867, %v4863
    %v5000 = vpack.c.b16 %v4868, %v4864
    %v5001 = vpack.c.b16 %v4869, %v4865
    %v5002 = vpack.c.b16 %v4874, %v4870
    %v5003 = vpack.c.b16 %v4875, %v4871
    %v5004 = vpack.c.b16 %v4876, %v4872
    %v5005 = vpack.c.b16 %v4877, %v4873
    %5134 = vmatpush.bf16.msra.mxu0 %v4906
    %5135 = vmatpush.bf16.msra.mxu0 %v4902
    %5136 = vmatpush.bf16.msra.mxu0 %v4898
    %5137 = vmatpush.bf16.msra.mxu0 %v4894
    %5138 = vmatpush.bf16.msra.mxu0 %v4890
    %5139 = vmatpush.bf16.msra.mxu0 %v4886
    %5140 = vmatpush.bf16.msra.mxu0 %v4882
    %5141 = vmatpush.bf16.msra.mxu0 %v4878
    %5142 = vmatmul.bf16.gmra.mxu0 %v4350
    %v5143 = vpop.f32.mrf.mxu0
    %v5144 = vadd.f32 %v4486, %v5143
    %v5145 = vpop.f32.mrf.mxu0
    %5146 = vdwg.mxu0
    %5147 = vmatpush.bf16.msra.mxu0 %v4938
    %5148 = vmatpush.bf16.msra.mxu0 %v4934
    %5149 = vmatpush.bf16.msra.mxu0 %v4930
    %5150 = vmatpush.bf16.msra.mxu0 %v4926
    %5151 = vmatpush.bf16.msra.mxu0 %v4922
    %5152 = vmatpush.bf16.msra.mxu0 %v4918
    %5153 = vmatpush.bf16.msra.mxu0 %v4914
    %5154 = vmatpush.bf16.msra.mxu0 %v4910
    %5155 = vmatmul.bf16.gmra.mxu0 %v4351
    %v5156 = vpop.f32.mrf.mxu0
    %v5157 = vadd.f32 %v5144, %v5156
    %v5158 = vpop.f32.mrf.mxu0
    %5159 = vdwg.mxu0
    %5160 = vmatpush.bf16.msra.mxu0 %v4970
    %5161 = vmatpush.bf16.msra.mxu0 %v4966
    %5162 = vmatpush.bf16.msra.mxu0 %v4962
    %5163 = vmatpush.bf16.msra.mxu0 %v4958
    %5164 = vmatpush.bf16.msra.mxu0 %v4954
    %5165 = vmatpush.bf16.msra.mxu0 %v4950
    %5166 = vmatpush.bf16.msra.mxu0 %v4946
    %5167 = vmatpush.bf16.msra.mxu0 %v4942
    %5168 = vmatmul.bf16.gmra.mxu0 %v4352
    %v5169 = vpop.f32.mrf.mxu0
    %v5170 = vadd.f32 %v5157, %v5169
    %v5171 = vpop.f32.mrf.mxu0
    %5172 = vdwg.mxu0
    %5173 = vmatpush.bf16.msra.mxu0 %v5002
    %5174 = vmatpush.bf16.msra.mxu0 %v4998
    %5175 = vmatpush.bf16.msra.mxu0 %v4994
    %5176 = vmatpush.bf16.msra.mxu0 %v4990
    %5177 = vmatpush.bf16.msra.mxu0 %v4986
    %5178 = vmatpush.bf16.msra.mxu0 %v4982
    %5179 = vmatpush.bf16.msra.mxu0 %v4978
    %5180 = vmatpush.bf16.msra.mxu0 %v4974
    %5181 = vmatmul.bf16.gmra.mxu0 %v4353
    %v5182 = vpop.f32.mrf.mxu0
    %v5183 = vadd.f32 %v5170, %v5182
    %v5184 = vpop.f32.mrf.mxu0
    %5185 = vdwg.mxu0
    %5186 = vmatpush.bf16.msra.mxu0 %v4907
    %5187 = vmatpush.bf16.msra.mxu0 %v4903
    %5188 = vmatpush.bf16.msra.mxu0 %v4899
    %5189 = vmatpush.bf16.msra.mxu0 %v4895
    %5190 = vmatpush.bf16.msra.mxu0 %v4891
    %5191 = vmatpush.bf16.msra.mxu0 %v4887
    %5192 = vmatpush.bf16.msra.mxu0 %v4883
    %5193 = vmatpush.bf16.msra.mxu0 %v4879
    %5194 = vmatmul.bf16.gmra.mxu0 %v4350
    %v5195 = vpop.f32.mrf.mxu0
    %v5196 = vadd.f32 %v4487, %v5195
    %v5197 = vpop.f32.mrf.mxu0
    %5198 = vdwg.mxu0
    %5199 = vmatpush.bf16.msra.mxu0 %v4939
    %5200 = vmatpush.bf16.msra.mxu0 %v4935
    %5201 = vmatpush.bf16.msra.mxu0 %v4931
    %5202 = vmatpush.bf16.msra.mxu0 %v4927
    %5203 = vmatpush.bf16.msra.mxu0 %v4923
    %5204 = vmatpush.bf16.msra.mxu0 %v4919
    %5205 = vmatpush.bf16.msra.mxu0 %v4915
    %5206 = vmatpush.bf16.msra.mxu0 %v4911
    %5207 = vmatmul.bf16.gmra.mxu0 %v4351
    %v5208 = vpop.f32.mrf.mxu0
    %v5209 = vadd.f32 %v5196, %v5208
    %v5210 = vpop.f32.mrf.mxu0
    %5211 = vdwg.mxu0
    %5212 = vmatpush.bf16.msra.mxu0 %v4971
    %5213 = vmatpush.bf16.msra.mxu0 %v4967
    %5214 = vmatpush.bf16.msra.mxu0 %v4963
    %5215 = vmatpush.bf16.msra.mxu0 %v4959
    %5216 = vmatpush.bf16.msra.mxu0 %v4955
    %5217 = vmatpush.bf16.msra.mxu0 %v4951
    %5218 = vmatpush.bf16.msra.mxu0 %v4947
    %5219 = vmatpush.bf16.msra.mxu0 %v4943
    %5220 = vmatmul.bf16.gmra.mxu0 %v4352
    %v5221 = vpop.f32.mrf.mxu0
    %v5222 = vadd.f32 %v5209, %v5221
    %v5223 = vpop.f32.mrf.mxu0
    %5224 = vdwg.mxu0
    %5225 = vmatpush.bf16.msra.mxu0 %v5003
    %5226 = vmatpush.bf16.msra.mxu0 %v4999
    %5227 = vmatpush.bf16.msra.mxu0 %v4995
    %5228 = vmatpush.bf16.msra.mxu0 %v4991
    %5229 = vmatpush.bf16.msra.mxu0 %v4987
    %5230 = vmatpush.bf16.msra.mxu0 %v4983
    %5231 = vmatpush.bf16.msra.mxu0 %v4979
    %5232 = vmatpush.bf16.msra.mxu0 %v4975
    %5233 = vmatmul.bf16.gmra.mxu0 %v4353
    %v5234 = vpop.f32.mrf.mxu0
    %v5235 = vadd.f32 %v5222, %v5234
    %v5236 = vpop.f32.mrf.mxu0
    %5237 = vdwg.mxu0
    %5238 = vmatpush.bf16.msra.mxu0 %v4908
    %5239 = vmatpush.bf16.msra.mxu0 %v4904
    %5240 = vmatpush.bf16.msra.mxu0 %v4900
    %5241 = vmatpush.bf16.msra.mxu0 %v4896
    %5242 = vmatpush.bf16.msra.mxu0 %v4892
    %5243 = vmatpush.bf16.msra.mxu0 %v4888
    %5244 = vmatpush.bf16.msra.mxu0 %v4884
    %5245 = vmatpush.bf16.msra.mxu0 %v4880
    %5246 = vmatmul.bf16.gmra.mxu0 %v4350
    %v5247 = vpop.f32.mrf.mxu0
    %v5248 = vadd.f32 %v4488, %v5247
    %v5249 = vpop.f32.mrf.mxu0
    %5250 = vdwg.mxu0
    %5251 = vmatpush.bf16.msra.mxu0 %v4940
    %5252 = vmatpush.bf16.msra.mxu0 %v4936
    %5253 = vmatpush.bf16.msra.mxu0 %v4932
    %5254 = vmatpush.bf16.msra.mxu0 %v4928
    %5255 = vmatpush.bf16.msra.mxu0 %v4924
    %5256 = vmatpush.bf16.msra.mxu0 %v4920
    %5257 = vmatpush.bf16.msra.mxu0 %v4916
    %5258 = vmatpush.bf16.msra.mxu0 %v4912
    %5259 = vmatmul.bf16.gmra.mxu0 %v4351
    %v5260 = vpop.f32.mrf.mxu0
    %v5261 = vadd.f32 %v5248, %v5260
    %v5262 = vpop.f32.mrf.mxu0
    %5263 = vdwg.mxu0
    %5264 = vmatpush.bf16.msra.mxu0 %v4972
    %5265 = vmatpush.bf16.msra.mxu0 %v4968
    %5266 = vmatpush.bf16.msra.mxu0 %v4964
    %5267 = vmatpush.bf16.msra.mxu0 %v4960
    %5268 = vmatpush.bf16.msra.mxu0 %v4956
    %5269 = vmatpush.bf16.msra.mxu0 %v4952
    %5270 = vmatpush.bf16.msra.mxu0 %v4948
    %5271 = vmatpush.bf16.msra.mxu0 %v4944
    %5272 = vmatmul.bf16.gmra.mxu0 %v4352
    %v5273 = vpop.f32.mrf.mxu0
    %v5274 = vadd.f32 %v5261, %v5273
    %v5275 = vpop.f32.mrf.mxu0
    %5276 = vdwg.mxu0
    %5277 = vmatpush.bf16.msra.mxu0 %v5004
    %5278 = vmatpush.bf16.msra.mxu0 %v5000
    %5279 = vmatpush.bf16.msra.mxu0 %v4996
    %5280 = vmatpush.bf16.msra.mxu0 %v4992
    %5281 = vmatpush.bf16.msra.mxu0 %v4988
    %5282 = vmatpush.bf16.msra.mxu0 %v4984
    %5283 = vmatpush.bf16.msra.mxu0 %v4980
    %5284 = vmatpush.bf16.msra.mxu0 %v4976
    %5285 = vmatmul.bf16.gmra.mxu0 %v4353
    %v5286 = vpop.f32.mrf.mxu0
    %v5287 = vadd.f32 %v5274, %v5286
    %v5288 = vpop.f32.mrf.mxu0
    %5289 = vdwg.mxu0
    %5290 = vmatpush.bf16.msra.mxu0 %v4909
    %5291 = vmatpush.bf16.msra.mxu0 %v4905
    %5292 = vmatpush.bf16.msra.mxu0 %v4901
    %5293 = vmatpush.bf16.msra.mxu0 %v4897
    %5294 = vmatpush.bf16.msra.mxu0 %v4893
    %5295 = vmatpush.bf16.msra.mxu0 %v4889
    %5296 = vmatpush.bf16.msra.mxu0 %v4885
    %5297 = vmatpush.bf16.msra.mxu0 %v4881
    %5298 = vmatmul.bf16.gmra.mxu0 %v4350
    %v5299 = vpop.f32.mrf.mxu0
    %v5300 = vadd.f32 %v4489, %v5299
    %v5301 = vpop.f32.mrf.mxu0
    %5302 = vdwg.mxu0
    %5303 = vmatpush.bf16.msra.mxu0 %v4941
    %5304 = vmatpush.bf16.msra.mxu0 %v4937
    %5305 = vmatpush.bf16.msra.mxu0 %v4933
    %5306 = vmatpush.bf16.msra.mxu0 %v4929
    %5307 = vmatpush.bf16.msra.mxu0 %v4925
    %5308 = vmatpush.bf16.msra.mxu0 %v4921
    %5309 = vmatpush.bf16.msra.mxu0 %v4917
    %5310 = vmatpush.bf16.msra.mxu0 %v4913
    %5311 = vmatmul.bf16.gmra.mxu0 %v4351
    %v5312 = vpop.f32.mrf.mxu0
    %v5313 = vadd.f32 %v5300, %v5312
    %v5314 = vpop.f32.mrf.mxu0
    %5315 = vdwg.mxu0
    %5316 = vmatpush.bf16.msra.mxu0 %v4973
    %5317 = vmatpush.bf16.msra.mxu0 %v4969
    %5318 = vmatpush.bf16.msra.mxu0 %v4965
    %5319 = vmatpush.bf16.msra.mxu0 %v4961
    %5320 = vmatpush.bf16.msra.mxu0 %v4957
    %5321 = vmatpush.bf16.msra.mxu0 %v4953
    %5322 = vmatpush.bf16.msra.mxu0 %v4949
    %5323 = vmatpush.bf16.msra.mxu0 %v4945
    %5324 = vmatmul.bf16.gmra.mxu0 %v4352
    %v5325 = vpop.f32.mrf.mxu0
    %v5326 = vadd.f32 %v5313, %v5325
    %v5327 = vpop.f32.mrf.mxu0
    %5328 = vdwg.mxu0
    %5329 = vmatpush.bf16.msra.mxu0 %v5005
    %5330 = vmatpush.bf16.msra.mxu0 %v5001
    %5331 = vmatpush.bf16.msra.mxu0 %v4997
    %5332 = vmatpush.bf16.msra.mxu0 %v4993
    %5333 = vmatpush.bf16.msra.mxu0 %v4989
    %5334 = vmatpush.bf16.msra.mxu0 %v4985
    %5335 = vmatpush.bf16.msra.mxu0 %v4981
    %5336 = vmatpush.bf16.msra.mxu0 %v4977
    %5337 = vmatmul.bf16.gmra.mxu0 %v4353
    %v5338 = vpop.f32.mrf.mxu0
    %v5339 = vadd.f32 %v5326, %v5338
    %v5340 = vpop.f32.mrf.mxu0
    %5341 = vdwg.mxu0
    %v5342 = vmax.f32 %v5183, 0.0
    %v5343 = vmax.f32 %v5235, 0.0
    %v5344 = vmax.f32 %v5287, 0.0
    %v5345 = vmax.f32 %v5339, 0.0
    %v5346 = vpack.c.bf16 %v5343, %v5342
    %v5347 = vpack.c.bf16 %v5345, %v5344
    %v5348 = vunpack.c.l.bf16 %v5346
    %v5349 = vunpack.c.h.bf16 %v5346
    %v5350 = vunpack.c.l.bf16 %v5347
    %v5351 = vunpack.c.h.bf16 %v5347
    %v5352 = vld [vmem:[#allocation16] sm:$0xf]
    %v5354 = vperm.slane %v5352, 0
    %v5355 = vperm.slane %v5352, 1
    %v5356 = vperm.slane %v5352, 2
    %v5357 = vperm.slane %v5352, 3
    %v5362 = vmul.f32 %v5348, %v5354
    %v5363 = vmul.f32 %v5349, %v5355
    %v5364 = vmul.f32 %v5350, %v5356
    %v5365 = vmul.f32 %v5351, %v5357
    %v5366 = vadd.f32 %v5362, %v5363
    %v5367 = vadd.f32 %v5366, %v5364
    %v5368 = vadd.f32 %v5367, %v5365
    %5369 = vadd.xlane.f32.xlu0 %v5368
    %v5370 = vpop.xlane.xlu0 %5369
    %v5371 = vld [vmem:[#allocation2] sm:$0x1]
    %v5373 = vperm.slane %v5371, 0
    %v5375 = vadd.f32 %v5370, %v5373
    %vm5376 = vcmask 7168
    %5377 = vst.msk [vmem:[%s11] sm:$0xff] %vm5376, %v5375
    // Predicated region
    $region82: #{critic_forward.1} parent=1 // pred_check
      _
    $region83: #{critic_forward.1} parent=1 // pred_check_branch
      %5379 = sbr.rel (0) target = $region85
    $region84: #{critic_forward.1} parent=1 // pred_region
      _
    $region85: #{critic_forward.1} parent=1 // pred_fallthru
      _
    // Predicated region
    $region86: #{critic_forward.1} parent=1 // pred_check
      _
    $region87: #{critic_forward.1} parent=1 // pred_check_branch
      %5381 = sbr.rel (0) target = $region89
    $region88: #{critic_forward.1} parent=1 // pred_region
      _
    $region89: #{critic_forward.1} parent=1 // pred_fallthru
      _
    %5382 = vsyncpa [#allocation4], 1
    %5383 = vsyncpa [#allocation6], 1
    %5384 = vsyncpa [#allocation9], 1
    %5385 = vsyncpa [#allocation12], 1
    %5386 = vsyncpa [#allocation15], 1

</llo_original>
